<compile_context>
chip_gen: v7x
topology: tpu7x:2x2x1
jax: 0.10.0
libtpu: 0.0.40
codegen_flags: <defaults>
</compile_context>

<pallas_src>
import functools

import jax
import jax.numpy as jnp
from jax import lax
from jax.experimental import pallas as pl
from jax.experimental.pallas import tpu as pltpu

# ---------------- config (small synthetic shapes) ----------------
BATCH = 2
IMG = 28            # 2x2 grid of 14x14 patches
PATCH = 14
CHANS = 3
NUM_PATCHES = (IMG // PATCH) ** 2     # 4
TOKENS = NUM_PATCHES + 1              # +CLS -> 5
EMBED = 32
HEADS = 2
HEAD_DIM = EMBED // HEADS             # 16
DEPTH = 2
MLP_HIDDEN = 4 * EMBED                # 128
NUM_GAITS = 4
NUM_COMMANDS = 4                      # regression output = NUM_COMMANDS - 1
REG_DIM = NUM_COMMANDS - 1
CMD_HIDDEN = 128
LN_EPS = 1e-6

NUM_IMAGES = 2 * BATCH                        # both cameras in one backbone pass
CLS_START = NUM_IMAGES * NUM_PATCHES          # CLS tokens occupy the LAST rows
ROWS = CLS_START + NUM_IMAGES                 # 20 token rows
PATCH_DIM = CHANS * PATCH * PATCH             # 588
PATCH_DIM_PAD = ((PATCH_DIM + 127) // 128) * 128   # 640: lane-aligned contraction
FEAT_DIM = 2 * EMBED                          # concat of forward+downward CLS
OUT_DIM = NUM_GAITS + REG_DIM                 # 7 useful output lanes
OUT_PAD = 128                                 # lane-dense packed output width

_SQRT1_2 = 0.7071067811865476


# ---------------- in-kernel math helpers ----------------
def _erf_f32(x):
    # Abramowitz & Stegun 7.1.26 rational approximation, |err| <= 1.5e-7:
    # matches exact erf at f32 precision using only exp/mul/add/div/where.
    p = 0.3275911
    a1, a2, a3, a4, a5 = (0.254829592, -0.284496736, 1.421413741,
                          -1.453152027, 1.061405429)
    ax = jnp.abs(x)
    t = 1.0 / (1.0 + p * ax)
    poly = ((((a5 * t + a4) * t + a3) * t + a2) * t + a1) * t
    y = 1.0 - poly * jnp.exp(-ax * ax)
    return jnp.where(x < 0.0, -y, y)


def _gelu_exact(x):
    # PyTorch nn.GELU() default is the exact erf GELU (not the tanh approx).
    return 0.5 * x * (1.0 + _erf_f32(x * _SQRT1_2))


def _layernorm(x, g, b):
    mean = jnp.mean(x, axis=-1, keepdims=True)
    xc = x - mean
    var = jnp.mean(xc * xc, axis=-1, keepdims=True)
    return xc * lax.rsqrt(var + LN_EPS) * g + b


def _dot_t(a, b_t):
    # a @ b_t.T (weights stored pre-transposed, 32-lane rows) with f32 accum.
    return lax.dot_general(a, b_t, (((1,), (1,)), ((), ())),
                           preferred_element_type=jnp.float32)


# ---------------- fused Pallas kernel ----------------
def _vision_kernel(patches_ref, wslab_ref, fslab_ref, out_ref, *,
                   woff, foff, ffn_identity):
    f32, bf16 = jnp.float32, jnp.bfloat16

    def wb(name, n):                       # (n, EMBED) bf16 weight rows
        o = woff[name]
        return wslab_ref[o:o + n, :]

    def fp(name, n=1, lanes=EMBED, lane0=0):   # (n, lanes) f32 rows
        o = foff[name]
        return fslab_ref[o:o + n, lane0:lane0 + lanes]

    # --- patch embedding (CLS rows are zero-padded patches) + token base ---
    # token_base holds conv bias + pos[1:] for patch rows, cls + pos[0] for the
    # trailing CLS rows, so no scratch assembly / single-row stores are needed.
    x = jnp.dot(patches_ref[...], wb('patch_w', PATCH_DIM_PAD),
                preferred_element_type=f32)
    x = x + fp('token_base', ROWS)                       # (ROWS, EMBED) f32

    # --- block-diagonal attention mask (images independent), built in-kernel ---
    r = lax.broadcasted_iota(jnp.int32, (ROWS, ROWS), 0)
    c = lax.broadcasted_iota(jnp.int32, (ROWS, ROWS), 1)
    same_img = None
    for n in range(NUM_IMAGES):
        lo, hi, cls_row = n * NUM_PATCHES, (n + 1) * NUM_PATCHES, CLS_START + n

        def in_img(t, lo=lo, hi=hi, cls_row=cls_row):
            return ((t >= lo) & (t < hi)) | (t == cls_row)

        both = in_img(r) & in_img(c)
        same_img = both if same_img is None else (same_img | both)

    scale = HEAD_DIM ** -0.5
    for d in range(DEPTH):
        # ---- pre-LN multi-head self-attention ----
        h = _layernorm(x, fp(f'ln1_g_{d}'), fp(f'ln1_b_{d}'))
        hb = h.astype(bf16)
        attn = None
        for hh in range(HEADS):
            q = _dot_t(hb, wb(f'wq_{d}_{hh}', HEAD_DIM)) + fp(
                f'qb_{d}', lanes=HEAD_DIM, lane0=hh * HEAD_DIM)
            k = _dot_t(hb, wb(f'wk_{d}_{hh}', HEAD_DIM)) + fp(
                f'kb_{d}', lanes=HEAD_DIM, lane0=hh * HEAD_DIM)
            v = _dot_t(hb, wb(f'wv_{d}_{hh}', HEAD_DIM)) + fp(
                f'vb_{d}', lanes=HEAD_DIM, lane0=hh * HEAD_DIM)
            s = _dot_t(q.astype(bf16), k.astype(bf16)) * scale   # (ROWS, ROWS)
            s = jnp.where(same_img, s, -1e30)
            s = s - jnp.max(s, axis=-1, keepdims=True)
            p = jnp.exp(s)
            p = p / jnp.sum(p, axis=-1, keepdims=True)           # exact softmax
            o = jnp.dot(p.astype(bf16), v.astype(bf16),
                        preferred_element_type=f32)              # (ROWS, hd)
            # concat-of-heads @ proj  ==  sum_h  o_h @ proj[h*hd:(h+1)*hd]
            po = woff[f'proj_w_{d}'] + hh * HEAD_DIM
            contrib = jnp.dot(o.astype(bf16), wslab_ref[po:po + HEAD_DIM, :],
                              preferred_element_type=f32)
            attn = contrib if attn is None else attn + contrib
        x = x + attn + fp(f'proj_b_{d}')

        # ---- FFN (identity when inference_type == 'offline') ----
        h2 = _layernorm(x, fp(f'ln2_g_{d}'), fp(f'ln2_b_{d}'))
        if ffn_identity:
            x = x + h2
        else:
            m = _dot_t(h2.astype(bf16), wb(f'fc1_wT_{d}', MLP_HIDDEN)) + fp(
                f'fc1_b_{d}', lanes=MLP_HIDDEN)
            m = _gelu_exact(m)
            x = x + jnp.dot(m.astype(bf16), wb(f'fc2_w_{d}', MLP_HIDDEN),
                            preferred_element_type=f32) + fp(f'fc2_b_{d}')

    # ---- final LN; CLS tokens are the last NUM_IMAGES contiguous rows ----
    x = _layernorm(x, fp('ln_g'), fp('ln_b'))
    cls = x[CLS_START:ROWS, :]                       # (NUM_IMAGES, EMBED)
    fwd = cls[0:BATCH, :].astype(bf16)               # forward-camera CLS feats
    dwn = cls[BATCH:NUM_IMAGES, :].astype(bf16)      # downward-camera CLS feats

    # ---- heads on concat([fwd, dwn], axis=1), expressed as split matmuls ----
    logits = (_dot_t(fwd, wb('gait_wf', NUM_GAITS))
              + _dot_t(dwn, wb('gait_wd', NUM_GAITS))
              + fp('gait_b', lanes=NUM_GAITS))                    # (B, 4)
    hid = (_dot_t(fwd, wb('cmd_w1f', CMD_HIDDEN))
           + _dot_t(dwn, wb('cmd_w1d', CMD_HIDDEN))
           + fp('cmd_b1', lanes=CMD_HIDDEN))                      # (B, 128)
    hid = jnp.maximum(hid, 0.0)                                   # ReLU
    reg = _dot_t(hid, fp('cmd_w2T', REG_DIM, lanes=CMD_HIDDEN)) + fp(
        'cmd_b2', lanes=REG_DIM)                                  # (B, 3)

    # lane-dense packed output: [gait logits | command regression | zero pad]
    out_ref[...] = jnp.concatenate(
        [logits, reg, jnp.zeros((BATCH, OUT_PAD - OUT_DIM), f32)], axis=-1)


# ---------------- host-side parameter packing (2 slabs -> 2 DMAs) ----------------
def pack_params(p, ffn_identity):
    wrows, frows = [], []
    woff, foff = {}, {}
    wcnt, fcnt = 0, 0

    def addw(name, arr):
        nonlocal wcnt
        arr = jnp.asarray(arr, jnp.float32)
        assert arr.ndim == 2 and arr.shape[1] == EMBED
        woff[name] = wcnt
        wcnt += arr.shape[0]
        wrows.append(arr)

    def addf(name, arr):
        nonlocal fcnt
        arr = jnp.asarray(arr, jnp.float32)
        assert arr.ndim == 2 and arr.shape[1] <= 128
        foff[name] = fcnt
        fcnt += arr.shape[0]
        frows.append(jnp.pad(arr, ((0, 0), (0, 128 - arr.shape[1]))))

    # patch-embed weight, contraction dim zero-padded 588 -> 640
    addw('patch_w', jnp.pad(p['patch_w'],
                            ((0, PATCH_DIM_PAD - PATCH_DIM), (0, 0))))
    # token base: patch rows = conv bias + pos[1:], CLS rows = cls + pos[0]
    patch_base = jnp.tile(p['pos'][1:TOKENS], (NUM_IMAGES, 1)) + p['patch_b']
    cls_base = jnp.tile(p['cls'] + p['pos'][0:1], (NUM_IMAGES, 1))
    addf('token_base', jnp.concatenate([patch_base, cls_base], axis=0))

    for d in range(DEPTH):
        addf(f'ln1_g_{d}', p['blk_ln1_g'][d])
        addf(f'ln1_b_{d}', p['blk_ln1_b'][d])
        qkvw, qkvb = p['blk_qkv_w'][d], p['blk_qkv_b'][d]
        for hh in range(HEADS):
            lo = hh * HEAD_DIM
            addw(f'wq_{d}_{hh}', qkvw[:, lo:lo + HEAD_DIM].T)
            addw(f'wk_{d}_{hh}', qkvw[:, EMBED + lo:EMBED + lo + HEAD_DIM].T)
            addw(f'wv_{d}_{hh}', qkvw[:, 2 * EMBED + lo:2 * EMBED + lo + HEAD_DIM].T)
        addf(f'qb_{d}', qkvb[:, 0:EMBED])
        addf(f'kb_{d}', qkvb[:, EMBED:2 * EMBED])
        addf(f'vb_{d}', qkvb[:, 2 * EMBED:3 * EMBED])
        addw(f'proj_w_{d}', p['blk_proj_w'][d])
        addf(f'proj_b_{d}', p['blk_proj_b'][d])
        addf(f'ln2_g_{d}', p['blk_ln2_g'][d])
        addf(f'ln2_b_{d}', p['blk_ln2_b'][d])
        if not ffn_identity:
            addw(f'fc1_wT_{d}', p['blk_fc1_w'][d].T)     # (128, 32)
            addf(f'fc1_b_{d}', p['blk_fc1_b'][d])        # (1, 128)
            addw(f'fc2_w_{d}', p['blk_fc2_w'][d])        # (128, 32)
            addf(f'fc2_b_{d}', p['blk_fc2_b'][d])

    addf('ln_g', p['ln_g'])
    addf('ln_b', p['ln_b'])
    addw('gait_wf', p['gait_w'][:EMBED].T)               # (4, 32)
    addw('gait_wd', p['gait_w'][EMBED:].T)
    addf('gait_b', p['gait_b'])                          # (1, 4)
    addw('cmd_w1f', p['cmd_w1'][:EMBED].T)               # (128, 32)
    addw('cmd_w1d', p['cmd_w1'][EMBED:].T)
    addf('cmd_b1', p['cmd_b1'])                          # (1, 128)
    addf('cmd_w2T', p['cmd_w2'].T)                       # (3, 128)
    addf('cmd_b2', p['cmd_b2'])                          # (1, 3)

    wslab = jnp.concatenate(wrows, axis=0).astype(jnp.bfloat16)
    fslab = jnp.concatenate(frows, axis=0)
    return wslab, fslab, woff, foff


# ---------------- parameter construction (deterministic) ----------------
def _init(key, shape, scale=0.02):
    return scale * jax.random.normal(key, shape, dtype=jnp.float32)


def init_params(key):
    ks = iter(jax.random.split(key, 16))
    return {
        "patch_w": _init(next(ks), (PATCH_DIM, EMBED)),
        "patch_b": jnp.zeros((1, EMBED), jnp.float32),
        "cls": _init(next(ks), (1, EMBED)),
        "pos": _init(next(ks), (TOKENS, EMBED)),
        "ln_g": jnp.ones((1, EMBED), jnp.float32),
        "ln_b": jnp.zeros((1, EMBED), jnp.float32),
        "blk_ln1_g": jnp.ones((DEPTH, 1, EMBED), jnp.float32),
        "blk_ln1_b": jnp.zeros((DEPTH, 1, EMBED), jnp.float32),
        "blk_qkv_w": _init(next(ks), (DEPTH, EMBED, 3 * EMBED)),
        "blk_qkv_b": jnp.zeros((DEPTH, 1, 3 * EMBED), jnp.float32),
        "blk_proj_w": _init(next(ks), (DEPTH, EMBED, EMBED)),
        "blk_proj_b": jnp.zeros((DEPTH, 1, EMBED), jnp.float32),
        "blk_ln2_g": jnp.ones((DEPTH, 1, EMBED), jnp.float32),
        "blk_ln2_b": jnp.zeros((DEPTH, 1, EMBED), jnp.float32),
        "blk_fc1_w": _init(next(ks), (DEPTH, EMBED, MLP_HIDDEN)),
        "blk_fc1_b": jnp.zeros((DEPTH, 1, MLP_HIDDEN), jnp.float32),
        "blk_fc2_w": _init(next(ks), (DEPTH, MLP_HIDDEN, EMBED)),
        "blk_fc2_b": jnp.zeros((DEPTH, 1, EMBED), jnp.float32),
        # heads sized to the 2-camera concatenated feature dim (see module note)
        "gait_w": _init(next(ks), (FEAT_DIM, NUM_GAITS)),
        "gait_b": jnp.zeros((1, NUM_GAITS), jnp.float32),
        "cmd_w1": _init(next(ks), (FEAT_DIM, CMD_HIDDEN)),
        "cmd_b1": jnp.zeros((1, CMD_HIDDEN), jnp.float32),
        "cmd_w2": _init(next(ks), (CMD_HIDDEN, REG_DIM)),
        "cmd_b2": jnp.zeros((1, REG_DIM), jnp.float32),
    }


# ---------------- model ----------------
def _patchify(img):
    """NCHW images -> (num_images*num_patches, C*P*P), flattened in (c, ph, pw)
    order to match PyTorch Conv2d patch-embedding weight layout."""
    b, ch, hgt, wid = img.shape
    nh, nw = hgt // PATCH, wid // PATCH
    x = img.reshape(b, ch, nh, PATCH, nw, PATCH)
    x = x.transpose(0, 2, 4, 1, 3, 5)
    return x.reshape(b * nh * nw, ch * PATCH * PATCH)


class VisionModelPallas:
    def __init__(self, inference_type, num_cameras, classifier_type,
                 regressor_type, params):
        assert inference_type in ("online", "offline")
        # TODO(synk): sklearn SVC/SVR head branches have no Pallas equivalent.
        assert classifier_type == "mlp" and regressor_type == "mlp"
        self.inference_type = inference_type
        self.num_cameras = num_cameras
        # offline -> dinov2 loaded with ffn_layer='identity'
        self.ffn_identity = (inference_type == "offline")

        self.wslab, self.fslab, woff, foff = pack_params(params, self.ffn_identity)

        kernel = functools.partial(_vision_kernel, woff=woff, foff=foff,
                                   ffn_identity=self.ffn_identity)
        vmem = pl.BlockSpec(memory_space=pltpu.MemorySpace.VMEM)
        fused = pl.pallas_call(
            kernel,
            out_shape=jax.ShapeDtypeStruct((BATCH, OUT_PAD), jnp.float32),
            in_specs=[vmem, vmem, vmem],
            out_specs=vmem,
        )
        # TODO(synk): at larger batch/camera counts, add a leading 'parallel'
        # grid axis over images so v7x's second TensorCore is used; at this
        # size one gridless call is the right shape.

        def fwd(wslab, fslab, forward_img, downward_img):
            # torch.no_grad() in the reference: pure inference, nothing to stop-grad.
            imgs = jnp.concatenate([forward_img, downward_img], axis=0)  # (2B,C,H,W)
            patches = _patchify(imgs)                                    # (2B*NP, 588)
            # pad K to 640 lanes and append NUM_IMAGES zero rows (CLS slots);
            # bf16 operands halve DMA bytes and hit native MXU rate.
            patches = jnp.pad(
                patches, ((0, NUM_IMAGES), (0, PATCH_DIM_PAD - PATCH_DIM)),
            ).astype(jnp.bfloat16)                                       # (ROWS, 640)
            packed = fused(patches, wslab, fslab)                        # (B, 128)
            return packed[:, :NUM_GAITS], packed[:, NUM_GAITS:OUT_DIM]

        self._fwd = jax.jit(fwd)

    def __call__(self, images):
        return self._fwd(self.wslab, self.fslab,
                         images["forward"], images["downward"])


# ---------------- main ----------------
if __name__ == "__main__":
    key = jax.random.PRNGKey(0)
    k_param, k_fwd, k_dwn = jax.random.split(key, 3)
    params = init_params(k_param)
    model = VisionModelPallas(inference_type="online", num_cameras=2,
                              classifier_type="mlp", regressor_type="mlp",
                              params=params)
    images = {
        "forward": jax.random.normal(k_fwd, (BATCH, CHANS, IMG, IMG), jnp.float32),
        "downward": jax.random.normal(k_dwn, (BATCH, CHANS, IMG, IMG), jnp.float32),
    }
    class_logits, regression_outputs = model(images)
    jax.block_until_ready((class_logits, regression_outputs))
    assert class_logits.shape == (BATCH, NUM_GAITS)
    assert regression_outputs.shape == (BATCH, REG_DIM)
    print("KERNEL_OK")
</pallas_src>

<mosaic_0001>
module attributes {stable_mosaic.version = 11 : i64} {
  func.func @_vision_kernel(%arg0: memref<20x640xbf16, #tpu.memory_space<vmem>>, %arg1: memref<1672x32xbf16, #tpu.memory_space<vmem>>, %arg2: memref<48x128xf32, #tpu.memory_space<vmem>>, %arg3: memref<2x128xf32, #tpu.memory_space<vmem>>) attributes {dimension_semantics = [], scalar_prefetch = 0 : i64, scratch_operands = 0 : i64, tpu.core_type = #tpu.core_type<tc>} {
    %c0 = arith.constant 0 : index
    %c0_0 = arith.constant 0 : index
    %0 = vector.load %arg0[%c0, %c0_0] : memref<20x640xbf16, #tpu.memory_space<vmem>>, vector<20x640xbf16>
    %c0_1 = arith.constant 0 : index
    %c0_2 = arith.constant 0 : index
    %1 = vector.load %arg1[%c0_1, %c0_2] : memref<1672x32xbf16, #tpu.memory_space<vmem>>, vector<640x32xbf16>
    %cst = arith.constant dense<0.000000e+00> : vector<20x32xf32>
    %2 = tpu.matmul %0, %1, %cst {dimension_numbers = #tpu.dot_dimension_numbers<[1], [0], [0], [1], [0, 0, 1, 1], [], []>} : vector<20x640xbf16>, vector<640x32xbf16>, vector<20x32xf32> -> vector<20x32xf32>
    %c0_3 = arith.constant 0 : index
    %c0_4 = arith.constant 0 : index
    %3 = vector.load %arg2[%c0_3, %c0_4] : memref<48x128xf32, #tpu.memory_space<vmem>>, vector<20x32xf32>
    %4 = arith.addf %2, %3 : vector<20x32xf32>
    %5 = tpu.iota {dimensions = array<i32: 0>} : vector<20x20xi32>
    %6 = tpu.iota {dimensions = array<i32: 1>} : vector<20x20xi32>
    %c0_i32 = arith.constant 0 : i32
    %7 = vector.broadcast %c0_i32 : i32 to vector<20x20xi32>
    %8 = arith.cmpi sge, %5, %7 : vector<20x20xi32>
    %c4_i32 = arith.constant 4 : i32
    %9 = vector.broadcast %c4_i32 : i32 to vector<20x20xi32>
    %10 = arith.cmpi slt, %5, %9 : vector<20x20xi32>
    %11 = arith.andi %8, %10 : vector<20x20xi1>
    %c16_i32 = arith.constant 16 : i32
    %12 = vector.broadcast %c16_i32 : i32 to vector<20x20xi32>
    %13 = arith.cmpi eq, %5, %12 : vector<20x20xi32>
    %14 = arith.ori %11, %13 : vector<20x20xi1>
    %c0_i32_5 = arith.constant 0 : i32
    %15 = vector.broadcast %c0_i32_5 : i32 to vector<20x20xi32>
    %16 = arith.cmpi sge, %6, %15 : vector<20x20xi32>
    %c4_i32_6 = arith.constant 4 : i32
    %17 = vector.broadcast %c4_i32_6 : i32 to vector<20x20xi32>
    %18 = arith.cmpi slt, %6, %17 : vector<20x20xi32>
    %19 = arith.andi %16, %18 : vector<20x20xi1>
    %c16_i32_7 = arith.constant 16 : i32
    %20 = vector.broadcast %c16_i32_7 : i32 to vector<20x20xi32>
    %21 = arith.cmpi eq, %6, %20 : vector<20x20xi32>
    %22 = arith.ori %19, %21 : vector<20x20xi1>
    %23 = arith.andi %14, %22 : vector<20x20xi1>
    %c4_i32_8 = arith.constant 4 : i32
    %24 = vector.broadcast %c4_i32_8 : i32 to vector<20x20xi32>
    %25 = arith.cmpi sge, %5, %24 : vector<20x20xi32>
    %c8_i32 = arith.constant 8 : i32
    %26 = vector.broadcast %c8_i32 : i32 to vector<20x20xi32>
    %27 = arith.cmpi slt, %5, %26 : vector<20x20xi32>
    %28 = arith.andi %25, %27 : vector<20x20xi1>
    %c17_i32 = arith.constant 17 : i32
    %29 = vector.broadcast %c17_i32 : i32 to vector<20x20xi32>
    %30 = arith.cmpi eq, %5, %29 : vector<20x20xi32>
    %31 = arith.ori %28, %30 : vector<20x20xi1>
    %c4_i32_9 = arith.constant 4 : i32
    %32 = vector.broadcast %c4_i32_9 : i32 to vector<20x20xi32>
    %33 = arith.cmpi sge, %6, %32 : vector<20x20xi32>
    %c8_i32_10 = arith.constant 8 : i32
    %34 = vector.broadcast %c8_i32_10 : i32 to vector<20x20xi32>
    %35 = arith.cmpi slt, %6, %34 : vector<20x20xi32>
    %36 = arith.andi %33, %35 : vector<20x20xi1>
    %c17_i32_11 = arith.constant 17 : i32
    %37 = vector.broadcast %c17_i32_11 : i32 to vector<20x20xi32>
    %38 = arith.cmpi eq, %6, %37 : vector<20x20xi32>
    %39 = arith.ori %36, %38 : vector<20x20xi1>
    %40 = arith.andi %31, %39 : vector<20x20xi1>
    %41 = arith.ori %23, %40 : vector<20x20xi1>
    %c8_i32_12 = arith.constant 8 : i32
    %42 = vector.broadcast %c8_i32_12 : i32 to vector<20x20xi32>
    %43 = arith.cmpi sge, %5, %42 : vector<20x20xi32>
    %c12_i32 = arith.constant 12 : i32
    %44 = vector.broadcast %c12_i32 : i32 to vector<20x20xi32>
    %45 = arith.cmpi slt, %5, %44 : vector<20x20xi32>
    %46 = arith.andi %43, %45 : vector<20x20xi1>
    %c18_i32 = arith.constant 18 : i32
    %47 = vector.broadcast %c18_i32 : i32 to vector<20x20xi32>
    %48 = arith.cmpi eq, %5, %47 : vector<20x20xi32>
    %49 = arith.ori %46, %48 : vector<20x20xi1>
    %c8_i32_13 = arith.constant 8 : i32
    %50 = vector.broadcast %c8_i32_13 : i32 to vector<20x20xi32>
    %51 = arith.cmpi sge, %6, %50 : vector<20x20xi32>
    %c12_i32_14 = arith.constant 12 : i32
    %52 = vector.broadcast %c12_i32_14 : i32 to vector<20x20xi32>
    %53 = arith.cmpi slt, %6, %52 : vector<20x20xi32>
    %54 = arith.andi %51, %53 : vector<20x20xi1>
    %c18_i32_15 = arith.constant 18 : i32
    %55 = vector.broadcast %c18_i32_15 : i32 to vector<20x20xi32>
    %56 = arith.cmpi eq, %6, %55 : vector<20x20xi32>
    %57 = arith.ori %54, %56 : vector<20x20xi1>
    %58 = arith.andi %49, %57 : vector<20x20xi1>
    %59 = arith.ori %41, %58 : vector<20x20xi1>
    %c12_i32_16 = arith.constant 12 : i32
    %60 = vector.broadcast %c12_i32_16 : i32 to vector<20x20xi32>
    %61 = arith.cmpi sge, %5, %60 : vector<20x20xi32>
    %c16_i32_17 = arith.constant 16 : i32
    %62 = vector.broadcast %c16_i32_17 : i32 to vector<20x20xi32>
    %63 = arith.cmpi slt, %5, %62 : vector<20x20xi32>
    %64 = arith.andi %61, %63 : vector<20x20xi1>
    %c19_i32 = arith.constant 19 : i32
    %65 = vector.broadcast %c19_i32 : i32 to vector<20x20xi32>
    %66 = arith.cmpi eq, %5, %65 : vector<20x20xi32>
    %67 = arith.ori %64, %66 : vector<20x20xi1>
    %c12_i32_18 = arith.constant 12 : i32
    %68 = vector.broadcast %c12_i32_18 : i32 to vector<20x20xi32>
    %69 = arith.cmpi sge, %6, %68 : vector<20x20xi32>
    %c16_i32_19 = arith.constant 16 : i32
    %70 = vector.broadcast %c16_i32_19 : i32 to vector<20x20xi32>
    %71 = arith.cmpi slt, %6, %70 : vector<20x20xi32>
    %72 = arith.andi %69, %71 : vector<20x20xi1>
    %c19_i32_20 = arith.constant 19 : i32
    %73 = vector.broadcast %c19_i32_20 : i32 to vector<20x20xi32>
    %74 = arith.cmpi eq, %6, %73 : vector<20x20xi32>
    %75 = arith.ori %72, %74 : vector<20x20xi1>
    %76 = arith.andi %67, %75 : vector<20x20xi1>
    %77 = arith.ori %59, %76 : vector<20x20xi1>
    %c20 = arith.constant 20 : index
    %c0_21 = arith.constant 0 : index
    %78 = vector.load %arg2[%c20, %c0_21] : memref<48x128xf32, #tpu.memory_space<vmem>>, vector<1x32xf32>
    %c21 = arith.constant 21 : index
    %c0_22 = arith.constant 0 : index
    %79 = vector.load %arg2[%c21, %c0_22] : memref<48x128xf32, #tpu.memory_space<vmem>>, vector<1x32xf32>
    %cst_23 = arith.constant dense<0.000000e+00> : vector<20xf32>
    %80 = vector.multi_reduction <add>, %4, %cst_23 [1] : vector<20x32xf32> to vector<20xf32>
    %81 = vector.shape_cast %80 : vector<20xf32> to vector<20x1xf32>
    %cst_24 = arith.constant 3.200000e+01 : f32
    %82 = vector.broadcast %cst_24 : f32 to vector<20x1xf32>
    %83 = arith.divf %81, %82 : vector<20x1xf32>
    %84 = vector.broadcast %83 : vector<20x1xf32> to vector<20x32xf32>
    %85 = arith.subf %4, %84 : vector<20x32xf32>
    %86 = arith.mulf %85, %85 : vector<20x32xf32>
    %cst_25 = arith.constant dense<0.000000e+00> : vector<20xf32>
    %87 = vector.multi_reduction <add>, %86, %cst_25 [1] : vector<20x32xf32> to vector<20xf32>
    %88 = vector.shape_cast %87 : vector<20xf32> to vector<20x1xf32>
    %cst_26 = arith.constant 3.200000e+01 : f32
    %89 = vector.broadcast %cst_26 : f32 to vector<20x1xf32>
    %90 = arith.divf %88, %89 : vector<20x1xf32>
    %cst_27 = arith.constant 9.99999997E-7 : f32
    %91 = vector.broadcast %cst_27 : f32 to vector<20x1xf32>
    %92 = arith.addf %90, %91 : vector<20x1xf32>
    %93 = math.rsqrt %92 : vector<20x1xf32>
    %94 = vector.broadcast %93 : vector<20x1xf32> to vector<20x32xf32>
    %95 = arith.mulf %85, %94 : vector<20x32xf32>
    %96 = vector.broadcast %78 : vector<1x32xf32> to vector<20x32xf32>
    %97 = arith.mulf %95, %96 : vector<20x32xf32>
    %98 = vector.broadcast %79 : vector<1x32xf32> to vector<20x32xf32>
    %99 = arith.addf %97, %98 : vector<20x32xf32>
    %100 = arith.truncf %99 : vector<20x32xf32> to vector<20x32xbf16>
    %c640 = arith.constant 640 : index
    %c0_28 = arith.constant 0 : index
    %101 = vector.load %arg1[%c640, %c0_28] : memref<1672x32xbf16, #tpu.memory_space<vmem>>, vector<16x32xbf16>
    %cst_29 = arith.constant dense<0.000000e+00> : vector<20x16xf32>
    %102 = tpu.matmul %100, %101, %cst_29 {dimension_numbers = #tpu.dot_dimension_numbers<[1], [1], [0], [0], [0, 0, 1, 0], [], []>} : vector<20x32xbf16>, vector<16x32xbf16>, vector<20x16xf32> -> vector<20x16xf32>
    %c22 = arith.constant 22 : index
    %c0_30 = arith.constant 0 : index
    %103 = vector.load %arg2[%c22, %c0_30] : memref<48x128xf32, #tpu.memory_space<vmem>>, vector<1x16xf32>
    %104 = vector.broadcast %103 : vector<1x16xf32> to vector<20x16xf32>
    %105 = arith.addf %102, %104 : vector<20x16xf32>
    %c656 = arith.constant 656 : index
    %c0_31 = arith.constant 0 : index
    %106 = vector.load %arg1[%c656, %c0_31] : memref<1672x32xbf16, #tpu.memory_space<vmem>>, vector<16x32xbf16>
    %cst_32 = arith.constant dense<0.000000e+00> : vector<20x16xf32>
    %107 = tpu.matmul %100, %106, %cst_32 {dimension_numbers = #tpu.dot_dimension_numbers<[1], [1], [0], [0], [0, 0, 1, 0], [], []>} : vector<20x32xbf16>, vector<16x32xbf16>, vector<20x16xf32> -> vector<20x16xf32>
    %c23 = arith.constant 23 : index
    %c0_33 = arith.constant 0 : index
    %108 = vector.load %arg2[%c23, %c0_33] : memref<48x128xf32, #tpu.memory_space<vmem>>, vector<1x16xf32>
    %109 = vector.broadcast %108 : vector<1x16xf32> to vector<20x16xf32>
    %110 = arith.addf %107, %109 : vector<20x16xf32>
    %c672 = arith.constant 672 : index
    %c0_34 = arith.constant 0 : index
    %111 = vector.load %arg1[%c672, %c0_34] : memref<1672x32xbf16, #tpu.memory_space<vmem>>, vector<16x32xbf16>
    %cst_35 = arith.constant dense<0.000000e+00> : vector<20x16xf32>
    %112 = tpu.matmul %100, %111, %cst_35 {dimension_numbers = #tpu.dot_dimension_numbers<[1], [1], [0], [0], [0, 0, 1, 0], [], []>} : vector<20x32xbf16>, vector<16x32xbf16>, vector<20x16xf32> -> vector<20x16xf32>
    %c24 = arith.constant 24 : index
    %c0_36 = arith.constant 0 : index
    %113 = vector.load %arg2[%c24, %c0_36] : memref<48x128xf32, #tpu.memory_space<vmem>>, vector<1x16xf32>
    %114 = vector.broadcast %113 : vector<1x16xf32> to vector<20x16xf32>
    %115 = arith.addf %112, %114 : vector<20x16xf32>
    %116 = arith.truncf %105 : vector<20x16xf32> to vector<20x16xbf16>
    %117 = arith.truncf %110 : vector<20x16xf32> to vector<20x16xbf16>
    %cst_37 = arith.constant dense<0.000000e+00> : vector<20x20xf32>
    %118 = tpu.matmul %116, %117, %cst_37 {dimension_numbers = #tpu.dot_dimension_numbers<[1], [1], [0], [0], [0, 0, 1, 0], [], []>} : vector<20x16xbf16>, vector<20x16xbf16>, vector<20x20xf32> -> vector<20x20xf32>
    %cst_38 = arith.constant 2.500000e-01 : f32
    %119 = vector.broadcast %cst_38 : f32 to vector<20x20xf32>
    %120 = arith.mulf %118, %119 : vector<20x20xf32>
    %cst_39 = arith.constant -1.000000e+30 : f32
    %121 = vector.broadcast %cst_39 : f32 to vector<20x20xf32>
    %122 = arith.select %77, %120, %121 : vector<20x20xi1>, vector<20x20xf32>
    %cst_40 = arith.constant dense<0xFF800000> : vector<20xf32>
    %123 = vector.multi_reduction <maximumf>, %122, %cst_40 [1] : vector<20x20xf32> to vector<20xf32>
    %124 = vector.shape_cast %123 : vector<20xf32> to vector<20x1xf32>
    %125 = vector.broadcast %124 : vector<20x1xf32> to vector<20x20xf32>
    %126 = arith.subf %122, %125 : vector<20x20xf32>
    %127 = math.exp %126 : vector<20x20xf32>
    %cst_41 = arith.constant dense<0.000000e+00> : vector<20xf32>
    %128 = vector.multi_reduction <add>, %127, %cst_41 [1] : vector<20x20xf32> to vector<20xf32>
    %129 = vector.shape_cast %128 : vector<20xf32> to vector<20x1xf32>
    %130 = vector.broadcast %129 : vector<20x1xf32> to vector<20x20xf32>
    %131 = arith.divf %127, %130 : vector<20x20xf32>
    %132 = arith.truncf %131 : vector<20x20xf32> to vector<20x20xbf16>
    %133 = arith.truncf %115 : vector<20x16xf32> to vector<20x16xbf16>
    %cst_42 = arith.constant dense<0.000000e+00> : vector<20x16xf32>
    %134 = tpu.matmul %132, %133, %cst_42 {dimension_numbers = #tpu.dot_dimension_numbers<[1], [0], [0], [1], [0, 0, 1, 1], [], []>} : vector<20x20xbf16>, vector<20x16xbf16>, vector<20x16xf32> -> vector<20x16xf32>
    %135 = arith.truncf %134 : vector<20x16xf32> to vector<20x16xbf16>
    %c736 = arith.constant 736 : index
    %c0_43 = arith.constant 0 : index
    %136 = vector.load %arg1[%c736, %c0_43] : memref<1672x32xbf16, #tpu.memory_space<vmem>>, vector<16x32xbf16>
    %cst_44 = arith.constant dense<0.000000e+00> : vector<20x32xf32>
    %137 = tpu.matmul %135, %136, %cst_44 {dimension_numbers = #tpu.dot_dimension_numbers<[1], [0], [0], [1], [0, 0, 1, 1], [], []>} : vector<20x16xbf16>, vector<16x32xbf16>, vector<20x32xf32> -> vector<20x32xf32>
    %c688 = arith.constant 688 : index
    %c0_45 = arith.constant 0 : index
    %138 = vector.load %arg1[%c688, %c0_45] : memref<1672x32xbf16, #tpu.memory_space<vmem>>, vector<16x32xbf16>
    %cst_46 = arith.constant dense<0.000000e+00> : vector<20x16xf32>
    %139 = tpu.matmul %100, %138, %cst_46 {dimension_numbers = #tpu.dot_dimension_numbers<[1], [1], [0], [0], [0, 0, 1, 0], [], []>} : vector<20x32xbf16>, vector<16x32xbf16>, vector<20x16xf32> -> vector<20x16xf32>
    %c22_47 = arith.constant 22 : index
    %c16 = arith.constant 16 : index
    %140 = vector.load %arg2[%c22_47, %c16] : memref<48x128xf32, #tpu.memory_space<vmem>>, vector<1x16xf32>
    %141 = vector.broadcast %140 : vector<1x16xf32> to vector<20x16xf32>
    %142 = arith.addf %139, %141 : vector<20x16xf32>
    %c704 = arith.constant 704 : index
    %c0_48 = arith.constant 0 : index
    %143 = vector.load %arg1[%c704, %c0_48] : memref<1672x32xbf16, #tpu.memory_space<vmem>>, vector<16x32xbf16>
    %cst_49 = arith.constant dense<0.000000e+00> : vector<20x16xf32>
    %144 = tpu.matmul %100, %143, %cst_49 {dimension_numbers = #tpu.dot_dimension_numbers<[1], [1], [0], [0], [0, 0, 1, 0], [], []>} : vector<20x32xbf16>, vector<16x32xbf16>, vector<20x16xf32> -> vector<20x16xf32>
    %c23_50 = arith.constant 23 : index
    %c16_51 = arith.constant 16 : index
    %145 = vector.load %arg2[%c23_50, %c16_51] : memref<48x128xf32, #tpu.memory_space<vmem>>, vector<1x16xf32>
    %146 = vector.broadcast %145 : vector<1x16xf32> to vector<20x16xf32>
    %147 = arith.addf %144, %146 : vector<20x16xf32>
    %c720 = arith.constant 720 : index
    %c0_52 = arith.constant 0 : index
    %148 = vector.load %arg1[%c720, %c0_52] : memref<1672x32xbf16, #tpu.memory_space<vmem>>, vector<16x32xbf16>
    %cst_53 = arith.constant dense<0.000000e+00> : vector<20x16xf32>
    %149 = tpu.matmul %100, %148, %cst_53 {dimension_numbers = #tpu.dot_dimension_numbers<[1], [1], [0], [0], [0, 0, 1, 0], [], []>} : vector<20x32xbf16>, vector<16x32xbf16>, vector<20x16xf32> -> vector<20x16xf32>
    %c24_54 = arith.constant 24 : index
    %c16_55 = arith.constant 16 : index
    %150 = vector.load %arg2[%c24_54, %c16_55] : memref<48x128xf32, #tpu.memory_space<vmem>>, vector<1x16xf32>
    %151 = vector.broadcast %150 : vector<1x16xf32> to vector<20x16xf32>
    %152 = arith.addf %149, %151 : vector<20x16xf32>
    %153 = arith.truncf %142 : vector<20x16xf32> to vector<20x16xbf16>
    %154 = arith.truncf %147 : vector<20x16xf32> to vector<20x16xbf16>
    %cst_56 = arith.constant dense<0.000000e+00> : vector<20x20xf32>
    %155 = tpu.matmul %153, %154, %cst_56 {dimension_numbers = #tpu.dot_dimension_numbers<[1], [1], [0], [0], [0, 0, 1, 0], [], []>} : vector<20x16xbf16>, vector<20x16xbf16>, vector<20x20xf32> -> vector<20x20xf32>
    %cst_57 = arith.constant 2.500000e-01 : f32
    %156 = vector.broadcast %cst_57 : f32 to vector<20x20xf32>
    %157 = arith.mulf %155, %156 : vector<20x20xf32>
    %cst_58 = arith.constant -1.000000e+30 : f32
    %158 = vector.broadcast %cst_58 : f32 to vector<20x20xf32>
    %159 = arith.select %77, %157, %158 : vector<20x20xi1>, vector<20x20xf32>
    %cst_59 = arith.constant dense<0xFF800000> : vector<20xf32>
    %160 = vector.multi_reduction <maximumf>, %159, %cst_59 [1] : vector<20x20xf32> to vector<20xf32>
    %161 = vector.shape_cast %160 : vector<20xf32> to vector<20x1xf32>
    %162 = vector.broadcast %161 : vector<20x1xf32> to vector<20x20xf32>
    %163 = arith.subf %159, %162 : vector<20x20xf32>
    %164 = math.exp %163 : vector<20x20xf32>
    %cst_60 = arith.constant dense<0.000000e+00> : vector<20xf32>
    %165 = vector.multi_reduction <add>, %164, %cst_60 [1] : vector<20x20xf32> to vector<20xf32>
    %166 = vector.shape_cast %165 : vector<20xf32> to vector<20x1xf32>
    %167 = vector.broadcast %166 : vector<20x1xf32> to vector<20x20xf32>
    %168 = arith.divf %164, %167 : vector<20x20xf32>
    %169 = arith.truncf %168 : vector<20x20xf32> to vector<20x20xbf16>
    %170 = arith.truncf %152 : vector<20x16xf32> to vector<20x16xbf16>
    %cst_61 = arith.constant dense<0.000000e+00> : vector<20x16xf32>
    %171 = tpu.matmul %169, %170, %cst_61 {dimension_numbers = #tpu.dot_dimension_numbers<[1], [0], [0], [1], [0, 0, 1, 1], [], []>} : vector<20x20xbf16>, vector<20x16xbf16>, vector<20x16xf32> -> vector<20x16xf32>
    %172 = arith.truncf %171 : vector<20x16xf32> to vector<20x16xbf16>
    %c752 = arith.constant 752 : index
    %c0_62 = arith.constant 0 : index
    %173 = vector.load %arg1[%c752, %c0_62] : memref<1672x32xbf16, #tpu.memory_space<vmem>>, vector<16x32xbf16>
    %cst_63 = arith.constant dense<0.000000e+00> : vector<20x32xf32>
    %174 = tpu.matmul %172, %173, %cst_63 {dimension_numbers = #tpu.dot_dimension_numbers<[1], [0], [0], [1], [0, 0, 1, 1], [], []>} : vector<20x16xbf16>, vector<16x32xbf16>, vector<20x32xf32> -> vector<20x32xf32>
    %175 = arith.addf %137, %174 : vector<20x32xf32>
    %176 = arith.addf %4, %175 : vector<20x32xf32>
    %c25 = arith.constant 25 : index
    %c0_64 = arith.constant 0 : index
    %177 = vector.load %arg2[%c25, %c0_64] : memref<48x128xf32, #tpu.memory_space<vmem>>, vector<1x32xf32>
    %178 = vector.broadcast %177 : vector<1x32xf32> to vector<20x32xf32>
    %179 = arith.addf %176, %178 : vector<20x32xf32>
    %c26 = arith.constant 26 : index
    %c0_65 = arith.constant 0 : index
    %180 = vector.load %arg2[%c26, %c0_65] : memref<48x128xf32, #tpu.memory_space<vmem>>, vector<1x32xf32>
    %c27 = arith.constant 27 : index
    %c0_66 = arith.constant 0 : index
    %181 = vector.load %arg2[%c27, %c0_66] : memref<48x128xf32, #tpu.memory_space<vmem>>, vector<1x32xf32>
    %cst_67 = arith.constant dense<0.000000e+00> : vector<20xf32>
    %182 = vector.multi_reduction <add>, %179, %cst_67 [1] : vector<20x32xf32> to vector<20xf32>
    %183 = vector.shape_cast %182 : vector<20xf32> to vector<20x1xf32>
    %cst_68 = arith.constant 3.200000e+01 : f32
    %184 = vector.broadcast %cst_68 : f32 to vector<20x1xf32>
    %185 = arith.divf %183, %184 : vector<20x1xf32>
    %186 = vector.broadcast %185 : vector<20x1xf32> to vector<20x32xf32>
    %187 = arith.subf %179, %186 : vector<20x32xf32>
    %188 = arith.mulf %187, %187 : vector<20x32xf32>
    %cst_69 = arith.constant dense<0.000000e+00> : vector<20xf32>
    %189 = vector.multi_reduction <add>, %188, %cst_69 [1] : vector<20x32xf32> to vector<20xf32>
    %190 = vector.shape_cast %189 : vector<20xf32> to vector<20x1xf32>
    %cst_70 = arith.constant 3.200000e+01 : f32
    %191 = vector.broadcast %cst_70 : f32 to vector<20x1xf32>
    %192 = arith.divf %190, %191 : vector<20x1xf32>
    %cst_71 = arith.constant 9.99999997E-7 : f32
    %193 = vector.broadcast %cst_71 : f32 to vector<20x1xf32>
    %194 = arith.addf %192, %193 : vector<20x1xf32>
    %195 = math.rsqrt %194 : vector<20x1xf32>
    %196 = vector.broadcast %195 : vector<20x1xf32> to vector<20x32xf32>
    %197 = arith.mulf %187, %196 : vector<20x32xf32>
    %198 = vector.broadcast %180 : vector<1x32xf32> to vector<20x32xf32>
    %199 = arith.mulf %197, %198 : vector<20x32xf32>
    %200 = vector.broadcast %181 : vector<1x32xf32> to vector<20x32xf32>
    %201 = arith.addf %199, %200 : vector<20x32xf32>
    %202 = arith.truncf %201 : vector<20x32xf32> to vector<20x32xbf16>
    %c768 = arith.constant 768 : index
    %c0_72 = arith.constant 0 : index
    %203 = vector.load %arg1[%c768, %c0_72] : memref<1672x32xbf16, #tpu.memory_space<vmem>>, vector<128x32xbf16>
    %cst_73 = arith.constant dense<0.000000e+00> : vector<20x128xf32>
    %204 = tpu.matmul %202, %203, %cst_73 {dimension_numbers = #tpu.dot_dimension_numbers<[1], [1], [0], [0], [0, 0, 1, 0], [], []>} : vector<20x32xbf16>, vector<128x32xbf16>, vector<20x128xf32> -> vector<20x128xf32>
    %c28 = arith.constant 28 : index
    %c0_74 = arith.constant 0 : index
    %205 = vector.load %arg2[%c28, %c0_74] : memref<48x128xf32, #tpu.memory_space<vmem>>, vector<1x128xf32>
    %206 = vector.broadcast %205 : vector<1x128xf32> to vector<20x128xf32>
    %207 = arith.addf %204, %206 : vector<20x128xf32>
    %cst_75 = arith.constant 5.000000e-01 : f32
    %208 = vector.broadcast %cst_75 : f32 to vector<20x128xf32>
    %209 = arith.mulf %208, %207 : vector<20x128xf32>
    %cst_76 = arith.constant 0.707106769 : f32
    %210 = vector.broadcast %cst_76 : f32 to vector<20x128xf32>
    %211 = arith.mulf %207, %210 : vector<20x128xf32>
    %212 = math.absf %211 : vector<20x128xf32>
    %cst_77 = arith.constant 0.327591091 : f32
    %213 = vector.broadcast %cst_77 : f32 to vector<20x128xf32>
    %214 = arith.mulf %213, %212 : vector<20x128xf32>
    %cst_78 = arith.constant 1.000000e+00 : f32
    %215 = vector.broadcast %cst_78 : f32 to vector<20x128xf32>
    %216 = arith.addf %215, %214 : vector<20x128xf32>
    %cst_79 = arith.constant 1.000000e+00 : f32
    %217 = vector.broadcast %cst_79 : f32 to vector<20x128xf32>
    %218 = arith.divf %217, %216 : vector<20x128xf32>
    %cst_80 = arith.constant 1.06140542 : f32
    %219 = vector.broadcast %cst_80 : f32 to vector<20x128xf32>
    %220 = arith.mulf %219, %218 : vector<20x128xf32>
    %cst_81 = arith.constant -1.45315206 : f32
    %221 = vector.broadcast %cst_81 : f32 to vector<20x128xf32>
    %222 = arith.addf %220, %221 : vector<20x128xf32>
    %223 = arith.mulf %222, %218 : vector<20x128xf32>
    %cst_82 = arith.constant 1.42141378 : f32
    %224 = vector.broadcast %cst_82 : f32 to vector<20x128xf32>
    %225 = arith.addf %223, %224 : vector<20x128xf32>
    %226 = arith.mulf %225, %218 : vector<20x128xf32>
    %cst_83 = arith.constant -0.284496725 : f32
    %227 = vector.broadcast %cst_83 : f32 to vector<20x128xf32>
    %228 = arith.addf %226, %227 : vector<20x128xf32>
    %229 = arith.mulf %228, %218 : vector<20x128xf32>
    %cst_84 = arith.constant 0.254829586 : f32
    %230 = vector.broadcast %cst_84 : f32 to vector<20x128xf32>
    %231 = arith.addf %229, %230 : vector<20x128xf32>
    %232 = arith.mulf %231, %218 : vector<20x128xf32>
    %cst_85 = arith.constant 0.000000e+00 : f32
    %233 = vector.broadcast %cst_85 : f32 to vector<20x128xf32>
    %234 = arith.subf %233, %212 : vector<20x128xf32>
    %235 = arith.mulf %234, %212 : vector<20x128xf32>
    %236 = math.exp %235 : vector<20x128xf32>
    %237 = arith.mulf %232, %236 : vector<20x128xf32>
    %cst_86 = arith.constant 1.000000e+00 : f32
    %238 = vector.broadcast %cst_86 : f32 to vector<20x128xf32>
    %239 = arith.subf %238, %237 : vector<20x128xf32>
    %cst_87 = arith.constant 0.000000e+00 : f32
    %240 = vector.broadcast %cst_87 : f32 to vector<20x128xf32>
    %241 = arith.cmpf olt, %211, %240 : vector<20x128xf32>
    %cst_88 = arith.constant 0.000000e+00 : f32
    %242 = vector.broadcast %cst_88 : f32 to vector<20x128xf32>
    %243 = arith.subf %242, %239 : vector<20x128xf32>
    %244 = arith.select %241, %243, %239 : vector<20x128xi1>, vector<20x128xf32>
    %cst_89 = arith.constant 1.000000e+00 : f32
    %245 = vector.broadcast %cst_89 : f32 to vector<20x128xf32>
    %246 = arith.addf %245, %244 : vector<20x128xf32>
    %247 = arith.mulf %209, %246 : vector<20x128xf32>
    %248 = arith.truncf %247 : vector<20x128xf32> to vector<20x128xbf16>
    %c896 = arith.constant 896 : index
    %c0_90 = arith.constant 0 : index
    %249 = vector.load %arg1[%c896, %c0_90] : memref<1672x32xbf16, #tpu.memory_space<vmem>>, vector<128x32xbf16>
    %cst_91 = arith.constant dense<0.000000e+00> : vector<20x32xf32>
    %250 = tpu.matmul %248, %249, %cst_91 {dimension_numbers = #tpu.dot_dimension_numbers<[1], [0], [0], [1], [0, 0, 1, 1], [], []>} : vector<20x128xbf16>, vector<128x32xbf16>, vector<20x32xf32> -> vector<20x32xf32>
    %251 = arith.addf %179, %250 : vector<20x32xf32>
    %c29 = arith.constant 29 : index
    %c0_92 = arith.constant 0 : index
    %252 = vector.load %arg2[%c29, %c0_92] : memref<48x128xf32, #tpu.memory_space<vmem>>, vector<1x32xf32>
    %253 = vector.broadcast %252 : vector<1x32xf32> to vector<20x32xf32>
    %254 = arith.addf %251, %253 : vector<20x32xf32>
    %c30 = arith.constant 30 : index
    %c0_93 = arith.constant 0 : index
    %255 = vector.load %arg2[%c30, %c0_93] : memref<48x128xf32, #tpu.memory_space<vmem>>, vector<1x32xf32>
    %c31 = arith.constant 31 : index
    %c0_94 = arith.constant 0 : index
    %256 = vector.load %arg2[%c31, %c0_94] : memref<48x128xf32, #tpu.memory_space<vmem>>, vector<1x32xf32>
    %cst_95 = arith.constant dense<0.000000e+00> : vector<20xf32>
    %257 = vector.multi_reduction <add>, %254, %cst_95 [1] : vector<20x32xf32> to vector<20xf32>
    %258 = vector.shape_cast %257 : vector<20xf32> to vector<20x1xf32>
    %cst_96 = arith.constant 3.200000e+01 : f32
    %259 = vector.broadcast %cst_96 : f32 to vector<20x1xf32>
    %260 = arith.divf %258, %259 : vector<20x1xf32>
    %261 = vector.broadcast %260 : vector<20x1xf32> to vector<20x32xf32>
    %262 = arith.subf %254, %261 : vector<20x32xf32>
    %263 = arith.mulf %262, %262 : vector<20x32xf32>
    %cst_97 = arith.constant dense<0.000000e+00> : vector<20xf32>
    %264 = vector.multi_reduction <add>, %263, %cst_97 [1] : vector<20x32xf32> to vector<20xf32>
    %265 = vector.shape_cast %264 : vector<20xf32> to vector<20x1xf32>
    %cst_98 = arith.constant 3.200000e+01 : f32
    %266 = vector.broadcast %cst_98 : f32 to vector<20x1xf32>
    %267 = arith.divf %265, %266 : vector<20x1xf32>
    %cst_99 = arith.constant 9.99999997E-7 : f32
    %268 = vector.broadcast %cst_99 : f32 to vector<20x1xf32>
    %269 = arith.addf %267, %268 : vector<20x1xf32>
    %270 = math.rsqrt %269 : vector<20x1xf32>
    %271 = vector.broadcast %270 : vector<20x1xf32> to vector<20x32xf32>
    %272 = arith.mulf %262, %271 : vector<20x32xf32>
    %273 = vector.broadcast %255 : vector<1x32xf32> to vector<20x32xf32>
    %274 = arith.mulf %272, %273 : vector<20x32xf32>
    %275 = vector.broadcast %256 : vector<1x32xf32> to vector<20x32xf32>
    %276 = arith.addf %274, %275 : vector<20x32xf32>
    %277 = arith.truncf %276 : vector<20x32xf32> to vector<20x32xbf16>
    %c1024 = arith.constant 1024 : index
    %c0_100 = arith.constant 0 : index
    %278 = vector.load %arg1[%c1024, %c0_100] : memref<1672x32xbf16, #tpu.memory_space<vmem>>, vector<16x32xbf16>
    %cst_101 = arith.constant dense<0.000000e+00> : vector<20x16xf32>
    %279 = tpu.matmul %277, %278, %cst_101 {dimension_numbers = #tpu.dot_dimension_numbers<[1], [1], [0], [0], [0, 0, 1, 0], [], []>} : vector<20x32xbf16>, vector<16x32xbf16>, vector<20x16xf32> -> vector<20x16xf32>
    %c32 = arith.constant 32 : index
    %c0_102 = arith.constant 0 : index
    %280 = vector.load %arg2[%c32, %c0_102] : memref<48x128xf32, #tpu.memory_space<vmem>>, vector<1x16xf32>
    %281 = vector.broadcast %280 : vector<1x16xf32> to vector<20x16xf32>
    %282 = arith.addf %279, %281 : vector<20x16xf32>
    %c1040 = arith.constant 1040 : index
    %c0_103 = arith.constant 0 : index
    %283 = vector.load %arg1[%c1040, %c0_103] : memref<1672x32xbf16, #tpu.memory_space<vmem>>, vector<16x32xbf16>
    %cst_104 = arith.constant dense<0.000000e+00> : vector<20x16xf32>
    %284 = tpu.matmul %277, %283, %cst_104 {dimension_numbers = #tpu.dot_dimension_numbers<[1], [1], [0], [0], [0, 0, 1, 0], [], []>} : vector<20x32xbf16>, vector<16x32xbf16>, vector<20x16xf32> -> vector<20x16xf32>
    %c33 = arith.constant 33 : index
    %c0_105 = arith.constant 0 : index
    %285 = vector.load %arg2[%c33, %c0_105] : memref<48x128xf32, #tpu.memory_space<vmem>>, vector<1x16xf32>
    %286 = vector.broadcast %285 : vector<1x16xf32> to vector<20x16xf32>
    %287 = arith.addf %284, %286 : vector<20x16xf32>
    %c1056 = arith.constant 1056 : index
    %c0_106 = arith.constant 0 : index
    %288 = vector.load %arg1[%c1056, %c0_106] : memref<1672x32xbf16, #tpu.memory_space<vmem>>, vector<16x32xbf16>
    %cst_107 = arith.constant dense<0.000000e+00> : vector<20x16xf32>
    %289 = tpu.matmul %277, %288, %cst_107 {dimension_numbers = #tpu.dot_dimension_numbers<[1], [1], [0], [0], [0, 0, 1, 0], [], []>} : vector<20x32xbf16>, vector<16x32xbf16>, vector<20x16xf32> -> vector<20x16xf32>
    %c34 = arith.constant 34 : index
    %c0_108 = arith.constant 0 : index
    %290 = vector.load %arg2[%c34, %c0_108] : memref<48x128xf32, #tpu.memory_space<vmem>>, vector<1x16xf32>
    %291 = vector.broadcast %290 : vector<1x16xf32> to vector<20x16xf32>
    %292 = arith.addf %289, %291 : vector<20x16xf32>
    %293 = arith.truncf %282 : vector<20x16xf32> to vector<20x16xbf16>
    %294 = arith.truncf %287 : vector<20x16xf32> to vector<20x16xbf16>
    %cst_109 = arith.constant dense<0.000000e+00> : vector<20x20xf32>
    %295 = tpu.matmul %293, %294, %cst_109 {dimension_numbers = #tpu.dot_dimension_numbers<[1], [1], [0], [0], [0, 0, 1, 0], [], []>} : vector<20x16xbf16>, vector<20x16xbf16>, vector<20x20xf32> -> vector<20x20xf32>
    %cst_110 = arith.constant 2.500000e-01 : f32
    %296 = vector.broadcast %cst_110 : f32 to vector<20x20xf32>
    %297 = arith.mulf %295, %296 : vector<20x20xf32>
    %cst_111 = arith.constant -1.000000e+30 : f32
    %298 = vector.broadcast %cst_111 : f32 to vector<20x20xf32>
    %299 = arith.select %77, %297, %298 : vector<20x20xi1>, vector<20x20xf32>
    %cst_112 = arith.constant dense<0xFF800000> : vector<20xf32>
    %300 = vector.multi_reduction <maximumf>, %299, %cst_112 [1] : vector<20x20xf32> to vector<20xf32>
    %301 = vector.shape_cast %300 : vector<20xf32> to vector<20x1xf32>
    %302 = vector.broadcast %301 : vector<20x1xf32> to vector<20x20xf32>
    %303 = arith.subf %299, %302 : vector<20x20xf32>
    %304 = math.exp %303 : vector<20x20xf32>
    %cst_113 = arith.constant dense<0.000000e+00> : vector<20xf32>
    %305 = vector.multi_reduction <add>, %304, %cst_113 [1] : vector<20x20xf32> to vector<20xf32>
    %306 = vector.shape_cast %305 : vector<20xf32> to vector<20x1xf32>
    %307 = vector.broadcast %306 : vector<20x1xf32> to vector<20x20xf32>
    %308 = arith.divf %304, %307 : vector<20x20xf32>
    %309 = arith.truncf %308 : vector<20x20xf32> to vector<20x20xbf16>
    %310 = arith.truncf %292 : vector<20x16xf32> to vector<20x16xbf16>
    %cst_114 = arith.constant dense<0.000000e+00> : vector<20x16xf32>
    %311 = tpu.matmul %309, %310, %cst_114 {dimension_numbers = #tpu.dot_dimension_numbers<[1], [0], [0], [1], [0, 0, 1, 1], [], []>} : vector<20x20xbf16>, vector<20x16xbf16>, vector<20x16xf32> -> vector<20x16xf32>
    %312 = arith.truncf %311 : vector<20x16xf32> to vector<20x16xbf16>
    %c1120 = arith.constant 1120 : index
    %c0_115 = arith.constant 0 : index
    %313 = vector.load %arg1[%c1120, %c0_115] : memref<1672x32xbf16, #tpu.memory_space<vmem>>, vector<16x32xbf16>
    %cst_116 = arith.constant dense<0.000000e+00> : vector<20x32xf32>
    %314 = tpu.matmul %312, %313, %cst_116 {dimension_numbers = #tpu.dot_dimension_numbers<[1], [0], [0], [1], [0, 0, 1, 1], [], []>} : vector<20x16xbf16>, vector<16x32xbf16>, vector<20x32xf32> -> vector<20x32xf32>
    %c1072 = arith.constant 1072 : index
    %c0_117 = arith.constant 0 : index
    %315 = vector.load %arg1[%c1072, %c0_117] : memref<1672x32xbf16, #tpu.memory_space<vmem>>, vector<16x32xbf16>
    %cst_118 = arith.constant dense<0.000000e+00> : vector<20x16xf32>
    %316 = tpu.matmul %277, %315, %cst_118 {dimension_numbers = #tpu.dot_dimension_numbers<[1], [1], [0], [0], [0, 0, 1, 0], [], []>} : vector<20x32xbf16>, vector<16x32xbf16>, vector<20x16xf32> -> vector<20x16xf32>
    %c32_119 = arith.constant 32 : index
    %c16_120 = arith.constant 16 : index
    %317 = vector.load %arg2[%c32_119, %c16_120] : memref<48x128xf32, #tpu.memory_space<vmem>>, vector<1x16xf32>
    %318 = vector.broadcast %317 : vector<1x16xf32> to vector<20x16xf32>
    %319 = arith.addf %316, %318 : vector<20x16xf32>
    %c1088 = arith.constant 1088 : index
    %c0_121 = arith.constant 0 : index
    %320 = vector.load %arg1[%c1088, %c0_121] : memref<1672x32xbf16, #tpu.memory_space<vmem>>, vector<16x32xbf16>
    %cst_122 = arith.constant dense<0.000000e+00> : vector<20x16xf32>
    %321 = tpu.matmul %277, %320, %cst_122 {dimension_numbers = #tpu.dot_dimension_numbers<[1], [1], [0], [0], [0, 0, 1, 0], [], []>} : vector<20x32xbf16>, vector<16x32xbf16>, vector<20x16xf32> -> vector<20x16xf32>
    %c33_123 = arith.constant 33 : index
    %c16_124 = arith.constant 16 : index
    %322 = vector.load %arg2[%c33_123, %c16_124] : memref<48x128xf32, #tpu.memory_space<vmem>>, vector<1x16xf32>
    %323 = vector.broadcast %322 : vector<1x16xf32> to vector<20x16xf32>
    %324 = arith.addf %321, %323 : vector<20x16xf32>
    %c1104 = arith.constant 1104 : index
    %c0_125 = arith.constant 0 : index
    %325 = vector.load %arg1[%c1104, %c0_125] : memref<1672x32xbf16, #tpu.memory_space<vmem>>, vector<16x32xbf16>
    %cst_126 = arith.constant dense<0.000000e+00> : vector<20x16xf32>
    %326 = tpu.matmul %277, %325, %cst_126 {dimension_numbers = #tpu.dot_dimension_numbers<[1], [1], [0], [0], [0, 0, 1, 0], [], []>} : vector<20x32xbf16>, vector<16x32xbf16>, vector<20x16xf32> -> vector<20x16xf32>
    %c34_127 = arith.constant 34 : index
    %c16_128 = arith.constant 16 : index
    %327 = vector.load %arg2[%c34_127, %c16_128] : memref<48x128xf32, #tpu.memory_space<vmem>>, vector<1x16xf32>
    %328 = vector.broadcast %327 : vector<1x16xf32> to vector<20x16xf32>
    %329 = arith.addf %326, %328 : vector<20x16xf32>
    %330 = arith.truncf %319 : vector<20x16xf32> to vector<20x16xbf16>
    %331 = arith.truncf %324 : vector<20x16xf32> to vector<20x16xbf16>
    %cst_129 = arith.constant dense<0.000000e+00> : vector<20x20xf32>
    %332 = tpu.matmul %330, %331, %cst_129 {dimension_numbers = #tpu.dot_dimension_numbers<[1], [1], [0], [0], [0, 0, 1, 0], [], []>} : vector<20x16xbf16>, vector<20x16xbf16>, vector<20x20xf32> -> vector<20x20xf32>
    %cst_130 = arith.constant 2.500000e-01 : f32
    %333 = vector.broadcast %cst_130 : f32 to vector<20x20xf32>
    %334 = arith.mulf %332, %333 : vector<20x20xf32>
    %cst_131 = arith.constant -1.000000e+30 : f32
    %335 = vector.broadcast %cst_131 : f32 to vector<20x20xf32>
    %336 = arith.select %77, %334, %335 : vector<20x20xi1>, vector<20x20xf32>
    %cst_132 = arith.constant dense<0xFF800000> : vector<20xf32>
    %337 = vector.multi_reduction <maximumf>, %336, %cst_132 [1] : vector<20x20xf32> to vector<20xf32>
    %338 = vector.shape_cast %337 : vector<20xf32> to vector<20x1xf32>
    %339 = vector.broadcast %338 : vector<20x1xf32> to vector<20x20xf32>
    %340 = arith.subf %336, %339 : vector<20x20xf32>
    %341 = math.exp %340 : vector<20x20xf32>
    %cst_133 = arith.constant dense<0.000000e+00> : vector<20xf32>
    %342 = vector.multi_reduction <add>, %341, %cst_133 [1] : vector<20x20xf32> to vector<20xf32>
    %343 = vector.shape_cast %342 : vector<20xf32> to vector<20x1xf32>
    %344 = vector.broadcast %343 : vector<20x1xf32> to vector<20x20xf32>
    %345 = arith.divf %341, %344 : vector<20x20xf32>
    %346 = arith.truncf %345 : vector<20x20xf32> to vector<20x20xbf16>
    %347 = arith.truncf %329 : vector<20x16xf32> to vector<20x16xbf16>
    %cst_134 = arith.constant dense<0.000000e+00> : vector<20x16xf32>
    %348 = tpu.matmul %346, %347, %cst_134 {dimension_numbers = #tpu.dot_dimension_numbers<[1], [0], [0], [1], [0, 0, 1, 1], [], []>} : vector<20x20xbf16>, vector<20x16xbf16>, vector<20x16xf32> -> vector<20x16xf32>
    %349 = arith.truncf %348 : vector<20x16xf32> to vector<20x16xbf16>
    %c1136 = arith.constant 1136 : index
    %c0_135 = arith.constant 0 : index
    %350 = vector.load %arg1[%c1136, %c0_135] : memref<1672x32xbf16, #tpu.memory_space<vmem>>, vector<16x32xbf16>
    %cst_136 = arith.constant dense<0.000000e+00> : vector<20x32xf32>
    %351 = tpu.matmul %349, %350, %cst_136 {dimension_numbers = #tpu.dot_dimension_numbers<[1], [0], [0], [1], [0, 0, 1, 1], [], []>} : vector<20x16xbf16>, vector<16x32xbf16>, vector<20x32xf32> -> vector<20x32xf32>
    %352 = arith.addf %314, %351 : vector<20x32xf32>
    %353 = arith.addf %254, %352 : vector<20x32xf32>
    %c35 = arith.constant 35 : index
    %c0_137 = arith.constant 0 : index
    %354 = vector.load %arg2[%c35, %c0_137] : memref<48x128xf32, #tpu.memory_space<vmem>>, vector<1x32xf32>
    %355 = vector.broadcast %354 : vector<1x32xf32> to vector<20x32xf32>
    %356 = arith.addf %353, %355 : vector<20x32xf32>
    %c36 = arith.constant 36 : index
    %c0_138 = arith.constant 0 : index
    %357 = vector.load %arg2[%c36, %c0_138] : memref<48x128xf32, #tpu.memory_space<vmem>>, vector<1x32xf32>
    %c37 = arith.constant 37 : index
    %c0_139 = arith.constant 0 : index
    %358 = vector.load %arg2[%c37, %c0_139] : memref<48x128xf32, #tpu.memory_space<vmem>>, vector<1x32xf32>
    %cst_140 = arith.constant dense<0.000000e+00> : vector<20xf32>
    %359 = vector.multi_reduction <add>, %356, %cst_140 [1] : vector<20x32xf32> to vector<20xf32>
    %360 = vector.shape_cast %359 : vector<20xf32> to vector<20x1xf32>
    %cst_141 = arith.constant 3.200000e+01 : f32
    %361 = vector.broadcast %cst_141 : f32 to vector<20x1xf32>
    %362 = arith.divf %360, %361 : vector<20x1xf32>
    %363 = vector.broadcast %362 : vector<20x1xf32> to vector<20x32xf32>
    %364 = arith.subf %356, %363 : vector<20x32xf32>
    %365 = arith.mulf %364, %364 : vector<20x32xf32>
    %cst_142 = arith.constant dense<0.000000e+00> : vector<20xf32>
    %366 = vector.multi_reduction <add>, %365, %cst_142 [1] : vector<20x32xf32> to vector<20xf32>
    %367 = vector.shape_cast %366 : vector<20xf32> to vector<20x1xf32>
    %cst_143 = arith.constant 3.200000e+01 : f32
    %368 = vector.broadcast %cst_143 : f32 to vector<20x1xf32>
    %369 = arith.divf %367, %368 : vector<20x1xf32>
    %cst_144 = arith.constant 9.99999997E-7 : f32
    %370 = vector.broadcast %cst_144 : f32 to vector<20x1xf32>
    %371 = arith.addf %369, %370 : vector<20x1xf32>
    %372 = math.rsqrt %371 : vector<20x1xf32>
    %373 = vector.broadcast %372 : vector<20x1xf32> to vector<20x32xf32>
    %374 = arith.mulf %364, %373 : vector<20x32xf32>
    %375 = vector.broadcast %357 : vector<1x32xf32> to vector<20x32xf32>
    %376 = arith.mulf %374, %375 : vector<20x32xf32>
    %377 = vector.broadcast %358 : vector<1x32xf32> to vector<20x32xf32>
    %378 = arith.addf %376, %377 : vector<20x32xf32>
    %379 = arith.truncf %378 : vector<20x32xf32> to vector<20x32xbf16>
    %c1152 = arith.constant 1152 : index
    %c0_145 = arith.constant 0 : index
    %380 = vector.load %arg1[%c1152, %c0_145] : memref<1672x32xbf16, #tpu.memory_space<vmem>>, vector<128x32xbf16>
    %cst_146 = arith.constant dense<0.000000e+00> : vector<20x128xf32>
    %381 = tpu.matmul %379, %380, %cst_146 {dimension_numbers = #tpu.dot_dimension_numbers<[1], [1], [0], [0], [0, 0, 1, 0], [], []>} : vector<20x32xbf16>, vector<128x32xbf16>, vector<20x128xf32> -> vector<20x128xf32>
    %c38 = arith.constant 38 : index
    %c0_147 = arith.constant 0 : index
    %382 = vector.load %arg2[%c38, %c0_147] : memref<48x128xf32, #tpu.memory_space<vmem>>, vector<1x128xf32>
    %383 = vector.broadcast %382 : vector<1x128xf32> to vector<20x128xf32>
    %384 = arith.addf %381, %383 : vector<20x128xf32>
    %cst_148 = arith.constant 5.000000e-01 : f32
    %385 = vector.broadcast %cst_148 : f32 to vector<20x128xf32>
    %386 = arith.mulf %385, %384 : vector<20x128xf32>
    %cst_149 = arith.constant 0.707106769 : f32
    %387 = vector.broadcast %cst_149 : f32 to vector<20x128xf32>
    %388 = arith.mulf %384, %387 : vector<20x128xf32>
    %389 = math.absf %388 : vector<20x128xf32>
    %cst_150 = arith.constant 0.327591091 : f32
    %390 = vector.broadcast %cst_150 : f32 to vector<20x128xf32>
    %391 = arith.mulf %390, %389 : vector<20x128xf32>
    %cst_151 = arith.constant 1.000000e+00 : f32
    %392 = vector.broadcast %cst_151 : f32 to vector<20x128xf32>
    %393 = arith.addf %392, %391 : vector<20x128xf32>
    %cst_152 = arith.constant 1.000000e+00 : f32
    %394 = vector.broadcast %cst_152 : f32 to vector<20x128xf32>
    %395 = arith.divf %394, %393 : vector<20x128xf32>
    %cst_153 = arith.constant 1.06140542 : f32
    %396 = vector.broadcast %cst_153 : f32 to vector<20x128xf32>
    %397 = arith.mulf %396, %395 : vector<20x128xf32>
    %cst_154 = arith.constant -1.45315206 : f32
    %398 = vector.broadcast %cst_154 : f32 to vector<20x128xf32>
    %399 = arith.addf %397, %398 : vector<20x128xf32>
    %400 = arith.mulf %399, %395 : vector<20x128xf32>
    %cst_155 = arith.constant 1.42141378 : f32
    %401 = vector.broadcast %cst_155 : f32 to vector<20x128xf32>
    %402 = arith.addf %400, %401 : vector<20x128xf32>
    %403 = arith.mulf %402, %395 : vector<20x128xf32>
    %cst_156 = arith.constant -0.284496725 : f32
    %404 = vector.broadcast %cst_156 : f32 to vector<20x128xf32>
    %405 = arith.addf %403, %404 : vector<20x128xf32>
    %406 = arith.mulf %405, %395 : vector<20x128xf32>
    %cst_157 = arith.constant 0.254829586 : f32
    %407 = vector.broadcast %cst_157 : f32 to vector<20x128xf32>
    %408 = arith.addf %406, %407 : vector<20x128xf32>
    %409 = arith.mulf %408, %395 : vector<20x128xf32>
    %cst_158 = arith.constant 0.000000e+00 : f32
    %410 = vector.broadcast %cst_158 : f32 to vector<20x128xf32>
    %411 = arith.subf %410, %389 : vector<20x128xf32>
    %412 = arith.mulf %411, %389 : vector<20x128xf32>
    %413 = math.exp %412 : vector<20x128xf32>
    %414 = arith.mulf %409, %413 : vector<20x128xf32>
    %cst_159 = arith.constant 1.000000e+00 : f32
    %415 = vector.broadcast %cst_159 : f32 to vector<20x128xf32>
    %416 = arith.subf %415, %414 : vector<20x128xf32>
    %cst_160 = arith.constant 0.000000e+00 : f32
    %417 = vector.broadcast %cst_160 : f32 to vector<20x128xf32>
    %418 = arith.cmpf olt, %388, %417 : vector<20x128xf32>
    %cst_161 = arith.constant 0.000000e+00 : f32
    %419 = vector.broadcast %cst_161 : f32 to vector<20x128xf32>
    %420 = arith.subf %419, %416 : vector<20x128xf32>
    %421 = arith.select %418, %420, %416 : vector<20x128xi1>, vector<20x128xf32>
    %cst_162 = arith.constant 1.000000e+00 : f32
    %422 = vector.broadcast %cst_162 : f32 to vector<20x128xf32>
    %423 = arith.addf %422, %421 : vector<20x128xf32>
    %424 = arith.mulf %386, %423 : vector<20x128xf32>
    %425 = arith.truncf %424 : vector<20x128xf32> to vector<20x128xbf16>
    %c1280 = arith.constant 1280 : index
    %c0_163 = arith.constant 0 : index
    %426 = vector.load %arg1[%c1280, %c0_163] : memref<1672x32xbf16, #tpu.memory_space<vmem>>, vector<128x32xbf16>
    %cst_164 = arith.constant dense<0.000000e+00> : vector<20x32xf32>
    %427 = tpu.matmul %425, %426, %cst_164 {dimension_numbers = #tpu.dot_dimension_numbers<[1], [0], [0], [1], [0, 0, 1, 1], [], []>} : vector<20x128xbf16>, vector<128x32xbf16>, vector<20x32xf32> -> vector<20x32xf32>
    %428 = arith.addf %356, %427 : vector<20x32xf32>
    %c39 = arith.constant 39 : index
    %c0_165 = arith.constant 0 : index
    %429 = vector.load %arg2[%c39, %c0_165] : memref<48x128xf32, #tpu.memory_space<vmem>>, vector<1x32xf32>
    %430 = vector.broadcast %429 : vector<1x32xf32> to vector<20x32xf32>
    %431 = arith.addf %428, %430 : vector<20x32xf32>
    %c40 = arith.constant 40 : index
    %c0_166 = arith.constant 0 : index
    %432 = vector.load %arg2[%c40, %c0_166] : memref<48x128xf32, #tpu.memory_space<vmem>>, vector<1x32xf32>
    %c41 = arith.constant 41 : index
    %c0_167 = arith.constant 0 : index
    %433 = vector.load %arg2[%c41, %c0_167] : memref<48x128xf32, #tpu.memory_space<vmem>>, vector<1x32xf32>
    %cst_168 = arith.constant dense<0.000000e+00> : vector<20xf32>
    %434 = vector.multi_reduction <add>, %431, %cst_168 [1] : vector<20x32xf32> to vector<20xf32>
    %435 = vector.shape_cast %434 : vector<20xf32> to vector<20x1xf32>
    %cst_169 = arith.constant 3.200000e+01 : f32
    %436 = vector.broadcast %cst_169 : f32 to vector<20x1xf32>
    %437 = arith.divf %435, %436 : vector<20x1xf32>
    %438 = vector.broadcast %437 : vector<20x1xf32> to vector<20x32xf32>
    %439 = arith.subf %431, %438 : vector<20x32xf32>
    %440 = arith.mulf %439, %439 : vector<20x32xf32>
    %cst_170 = arith.constant dense<0.000000e+00> : vector<20xf32>
    %441 = vector.multi_reduction <add>, %440, %cst_170 [1] : vector<20x32xf32> to vector<20xf32>
    %442 = vector.shape_cast %441 : vector<20xf32> to vector<20x1xf32>
    %cst_171 = arith.constant 3.200000e+01 : f32
    %443 = vector.broadcast %cst_171 : f32 to vector<20x1xf32>
    %444 = arith.divf %442, %443 : vector<20x1xf32>
    %cst_172 = arith.constant 9.99999997E-7 : f32
    %445 = vector.broadcast %cst_172 : f32 to vector<20x1xf32>
    %446 = arith.addf %444, %445 : vector<20x1xf32>
    %447 = math.rsqrt %446 : vector<20x1xf32>
    %448 = vector.broadcast %447 : vector<20x1xf32> to vector<20x32xf32>
    %449 = arith.mulf %439, %448 : vector<20x32xf32>
    %450 = vector.broadcast %432 : vector<1x32xf32> to vector<20x32xf32>
    %451 = arith.mulf %449, %450 : vector<20x32xf32>
    %452 = vector.broadcast %433 : vector<1x32xf32> to vector<20x32xf32>
    %453 = arith.addf %451, %452 : vector<20x32xf32>
    %454 = vector.extract_strided_slice %453 {offsets = [16, 0], sizes = [4, 32], strides = [1, 1]} : vector<20x32xf32> to vector<4x32xf32>
    %455 = vector.extract_strided_slice %454 {offsets = [0, 0], sizes = [2, 32], strides = [1, 1]} : vector<4x32xf32> to vector<2x32xf32>
    %456 = arith.truncf %455 : vector<2x32xf32> to vector<2x32xbf16>
    %457 = vector.extract_strided_slice %454 {offsets = [2, 0], sizes = [2, 32], strides = [1, 1]} : vector<4x32xf32> to vector<2x32xf32>
    %458 = arith.truncf %457 : vector<2x32xf32> to vector<2x32xbf16>
    %c1408 = arith.constant 1408 : index
    %c0_173 = arith.constant 0 : index
    %459 = vector.load %arg1[%c1408, %c0_173] : memref<1672x32xbf16, #tpu.memory_space<vmem>>, vector<4x32xbf16>
    %cst_174 = arith.constant dense<0.000000e+00> : vector<2x4xf32>
    %460 = tpu.matmul %456, %459, %cst_174 {dimension_numbers = #tpu.dot_dimension_numbers<[1], [1], [0], [0], [0, 0, 1, 0], [], []>} : vector<2x32xbf16>, vector<4x32xbf16>, vector<2x4xf32> -> vector<2x4xf32>
    %c1412 = arith.constant 1412 : index
    %c0_175 = arith.constant 0 : index
    %461 = vector.load %arg1[%c1412, %c0_175] : memref<1672x32xbf16, #tpu.memory_space<vmem>>, vector<4x32xbf16>
    %cst_176 = arith.constant dense<0.000000e+00> : vector<2x4xf32>
    %462 = tpu.matmul %458, %461, %cst_176 {dimension_numbers = #tpu.dot_dimension_numbers<[1], [1], [0], [0], [0, 0, 1, 0], [], []>} : vector<2x32xbf16>, vector<4x32xbf16>, vector<2x4xf32> -> vector<2x4xf32>
    %463 = arith.addf %460, %462 : vector<2x4xf32>
    %c42 = arith.constant 42 : index
    %c0_177 = arith.constant 0 : index
    %464 = vector.load %arg2[%c42, %c0_177] : memref<48x128xf32, #tpu.memory_space<vmem>>, vector<1x4xf32>
    %465 = vector.broadcast %464 : vector<1x4xf32> to vector<2x4xf32>
    %466 = arith.addf %463, %465 : vector<2x4xf32>
    %c1416 = arith.constant 1416 : index
    %c0_178 = arith.constant 0 : index
    %467 = vector.load %arg1[%c1416, %c0_178] : memref<1672x32xbf16, #tpu.memory_space<vmem>>, vector<128x32xbf16>
    %cst_179 = arith.constant dense<0.000000e+00> : vector<2x128xf32>
    %468 = tpu.matmul %456, %467, %cst_179 {dimension_numbers = #tpu.dot_dimension_numbers<[1], [1], [0], [0], [0, 0, 1, 0], [], []>} : vector<2x32xbf16>, vector<128x32xbf16>, vector<2x128xf32> -> vector<2x128xf32>
    %c1544 = arith.constant 1544 : index
    %c0_180 = arith.constant 0 : index
    %469 = vector.load %arg1[%c1544, %c0_180] : memref<1672x32xbf16, #tpu.memory_space<vmem>>, vector<128x32xbf16>
    %cst_181 = arith.constant dense<0.000000e+00> : vector<2x128xf32>
    %470 = tpu.matmul %458, %469, %cst_181 {dimension_numbers = #tpu.dot_dimension_numbers<[1], [1], [0], [0], [0, 0, 1, 0], [], []>} : vector<2x32xbf16>, vector<128x32xbf16>, vector<2x128xf32> -> vector<2x128xf32>
    %471 = arith.addf %468, %470 : vector<2x128xf32>
    %c43 = arith.constant 43 : index
    %c0_182 = arith.constant 0 : index
    %472 = vector.load %arg2[%c43, %c0_182] : memref<48x128xf32, #tpu.memory_space<vmem>>, vector<1x128xf32>
    %473 = vector.broadcast %472 : vector<1x128xf32> to vector<2x128xf32>
    %474 = arith.addf %471, %473 : vector<2x128xf32>
    %cst_183 = arith.constant 0.000000e+00 : f32
    %475 = vector.broadcast %cst_183 : f32 to vector<2x128xf32>
    %476 = arith.maximumf %474, %475 : vector<2x128xf32>
    %c44 = arith.constant 44 : index
    %c0_184 = arith.constant 0 : index
    %477 = vector.load %arg2[%c44, %c0_184] : memref<48x128xf32, #tpu.memory_space<vmem>>, vector<3x128xf32>
    %cst_185 = arith.constant dense<0.000000e+00> : vector<2x3xf32>
    %478 = tpu.matmul %476, %477, %cst_185 {dimension_numbers = #tpu.dot_dimension_numbers<[1], [1], [0], [0], [0, 0, 1, 0], [], []>} : vector<2x128xf32>, vector<3x128xf32>, vector<2x3xf32> -> vector<2x3xf32>
    %c47 = arith.constant 47 : index
    %c0_186 = arith.constant 0 : index
    %479 = vector.load %arg2[%c47, %c0_186] : memref<48x128xf32, #tpu.memory_space<vmem>>, vector<1x3xf32>
    %480 = vector.broadcast %479 : vector<1x3xf32> to vector<2x3xf32>
    %481 = arith.addf %478, %480 : vector<2x3xf32>
    %cst_187 = arith.constant 0.000000e+00 : f32
    %482 = vector.broadcast %cst_187 : f32 to vector<2x121xf32>
    %483 = tpu.concatenate %466, %481, %482 in 1 : vector<2x4xf32>, vector<2x3xf32>, vector<2x121xf32> -> vector<2x128xf32>
    %c0_188 = arith.constant 0 : index
    %c0_189 = arith.constant 0 : index
    %484 = vector.load %arg3[%c0_188, %c0_189] : memref<2x128xf32, #tpu.memory_space<vmem>>, vector<2x128xf32>
    tpu.vector_store %arg3[%c0_188, %c0_189], %483 {strides = array<i32>} : memref<2x128xf32, #tpu.memory_space<vmem>>, vector<2x128xf32>,
    return
  }
}

</mosaic_0001>

<llo_original>
// kernel: fwd.1
$region0: #{fwd.1}
  #allocation0 [shape = 'u32[]', space=smem, size = 0x4, offset = 0x4, fixed_abs, tag = 'smem constant byte address 0x4 - core index']
  #allocation1 [shape = 'u32[144,128]{1,0:T(1,128)}', space=vmem, size = 0x12000, scoped, tag = 'internal scratch']
  %s0 = inlined_call_operand.vmem [shape: bf16[20,640], index: 0, kind: input, shape index: {}]
  %s1 = inlined_call_operand.vmem [shape: bf16[1672,32], index: 1, kind: input, shape index: {}]
  %s2 = inlined_call_operand.vmem [shape: f32[48,128], index: 2, kind: input, shape index: {}]
  %s3 = inlined_call_operand.vmem [shape: f32[2,128], index: 3, kind: output, shape index: {}]
  %s4 = sld [smem:[#allocation0]]
  $region22: #{fwd.1} parent=0
    _
  %s6 = ssub.s32 1, %s4
  %s7 = scalar_select 0, %s6, %s4
  // Predicated region
  $region2: #{fwd.1} parent=0 // pred_check
    _
  $region3: #{fwd.1} parent=0 // pred_check_branch
    %9 = sbr.rel (0) target = $region5
  $region4: #{fwd.1} parent=0 // pred_region
    _
  $region5: #{fwd.1} parent=0 // pred_fallthru
    _
  // Predicated region
  $region6: #{fwd.1} parent=0 // pred_check
    _
  $region7: #{fwd.1} parent=0 // pred_check_branch
    %11 = sbr.rel (0) target = $region9
  $region8: #{fwd.1} parent=0 // pred_region
    _
  $region9: #{fwd.1} parent=0 // pred_fallthru
    _
  // Predicated region
  $region10: #{fwd.1} parent=0 // pred_check
    _
  $region11: #{fwd.1} parent=0 // pred_check_branch
    %13 = sbr.rel (0) target = $region13
  $region12: #{fwd.1} parent=0 // pred_region
    _
  $region13: #{fwd.1} parent=0 // pred_fallthru
    _
  %v15 = vld [vmem:[%s0] sm:$0xff]
  %v16 = vld [vmem:[%s0 + $0x8] sm:$0xff]
  %v17 = vld [vmem:[%s0 + $0x10] sm:$0xf]
  %v18 = vld [vmem:[%s0 + $0x14] sm:$0xff]
  %v19 = vld [vmem:[%s0 + $0x1c] sm:$0xff]
  %v20 = vld [vmem:[%s0 + $0x24] sm:$0xf]
  %v21 = vld [vmem:[%s0 + $0x28] sm:$0x33]
  %v22 = vld [vmem:[%s0 + $0x30] sm:$0x33]
  %v23 = vld [vmem:[%s0 + $0x38] sm:$0x3]
  %v24 = vld [vmem:[%s1] sm:$0xf]
  %v25 = vld [vmem:[%s1 + $0x4] sm:$0xf]
  %v26 = vld [vmem:[%s1 + $0x8] sm:$0xf]
  %v27 = vld [vmem:[%s1 + $0xc] sm:$0xf]
  %v28 = vld [vmem:[%s1 + $0x10] sm:$0xf]
  %v29 = vld [vmem:[%s1 + $0x14] sm:$0xf]
  %v30 = vld [vmem:[%s1 + $0x18] sm:$0xf]
  %v31 = vld [vmem:[%s1 + $0x1c] sm:$0xf]
  %v32 = vld [vmem:[%s1 + $0x20] sm:$0xf]
  %v33 = vld [vmem:[%s1 + $0x24] sm:$0xf]
  %v34 = vld [vmem:[%s1 + $0x28] sm:$0xf]
  %v35 = vld [vmem:[%s1 + $0x2c] sm:$0xf]
  %v36 = vld [vmem:[%s1 + $0x30] sm:$0xf]
  %v37 = vld [vmem:[%s1 + $0x34] sm:$0xf]
  %v38 = vld [vmem:[%s1 + $0x38] sm:$0xf]
  %v39 = vld [vmem:[%s1 + $0x3c] sm:$0xf]
  %v40 = vld [vmem:[%s1 + $0x40] sm:$0xf]
  %v41 = vld [vmem:[%s1 + $0x44] sm:$0xf]
  %v42 = vld [vmem:[%s1 + $0x48] sm:$0xf]
  %v43 = vld [vmem:[%s1 + $0x4c] sm:$0xf]
  %v44 = vld [vmem:[%s1 + $0x50] sm:$0xf]
  %v45 = vld [vmem:[%s1 + $0x54] sm:$0xf]
  %v46 = vld [vmem:[%s1 + $0x58] sm:$0xf]
  %v47 = vld [vmem:[%s1 + $0x5c] sm:$0xf]
  %v48 = vld [vmem:[%s1 + $0x60] sm:$0xf]
  %v49 = vld [vmem:[%s1 + $0x64] sm:$0xf]
  %v50 = vld [vmem:[%s1 + $0x68] sm:$0xf]
  %v51 = vld [vmem:[%s1 + $0x6c] sm:$0xf]
  %v52 = vld [vmem:[%s1 + $0x70] sm:$0xf]
  %v53 = vld [vmem:[%s1 + $0x74] sm:$0xf]
  %v54 = vld [vmem:[%s1 + $0x78] sm:$0xf]
  %v55 = vld [vmem:[%s1 + $0x7c] sm:$0xf]
  %v56 = vld [vmem:[%s1 + $0x80] sm:$0xf]
  %v57 = vld [vmem:[%s1 + $0x84] sm:$0xf]
  %v58 = vld [vmem:[%s1 + $0x88] sm:$0xf]
  %v59 = vld [vmem:[%s1 + $0x8c] sm:$0xf]
  %v60 = vld [vmem:[%s1 + $0x90] sm:$0xf]
  %v61 = vld [vmem:[%s1 + $0x94] sm:$0xf]
  %v62 = vld [vmem:[%s1 + $0x98] sm:$0xf]
  %v63 = vld [vmem:[%s1 + $0x9c] sm:$0xf]
  %v64 = vld [vmem:[%s1 + $0xa0] sm:$0xf]
  %v65 = vld [vmem:[%s1 + $0xa4] sm:$0xf]
  %v66 = vld [vmem:[%s1 + $0xa8] sm:$0xf]
  %v67 = vld [vmem:[%s1 + $0xac] sm:$0xf]
  %v68 = vld [vmem:[%s1 + $0xb0] sm:$0xf]
  %v69 = vld [vmem:[%s1 + $0xb4] sm:$0xf]
  %v70 = vld [vmem:[%s1 + $0xb8] sm:$0xf]
  %v71 = vld [vmem:[%s1 + $0xbc] sm:$0xf]
  %v72 = vld [vmem:[%s1 + $0xc0] sm:$0xf]
  %v73 = vld [vmem:[%s1 + $0xc4] sm:$0xf]
  %v74 = vld [vmem:[%s1 + $0xc8] sm:$0xf]
  %v75 = vld [vmem:[%s1 + $0xcc] sm:$0xf]
  %v76 = vld [vmem:[%s1 + $0xd0] sm:$0xf]
  %v77 = vld [vmem:[%s1 + $0xd4] sm:$0xf]
  %v78 = vld [vmem:[%s1 + $0xd8] sm:$0xf]
  %v79 = vld [vmem:[%s1 + $0xdc] sm:$0xf]
  %v80 = vld [vmem:[%s1 + $0xe0] sm:$0xf]
  %v81 = vld [vmem:[%s1 + $0xe4] sm:$0xf]
  %v82 = vld [vmem:[%s1 + $0xe8] sm:$0xf]
  %v83 = vld [vmem:[%s1 + $0xec] sm:$0xf]
  %v84 = vld [vmem:[%s1 + $0xf0] sm:$0xf]
  %v85 = vld [vmem:[%s1 + $0xf4] sm:$0xf]
  %v86 = vld [vmem:[%s1 + $0xf8] sm:$0xf]
  %v87 = vld [vmem:[%s1 + $0xfc] sm:$0xf]
  %v88 = vld [vmem:[%s1 + $0x100] sm:$0xf]
  %v89 = vld [vmem:[%s1 + $0x104] sm:$0xf]
  %v90 = vld [vmem:[%s1 + $0x108] sm:$0xf]
  %v91 = vld [vmem:[%s1 + $0x10c] sm:$0xf]
  %v92 = vld [vmem:[%s1 + $0x110] sm:$0xf]
  %v93 = vld [vmem:[%s1 + $0x114] sm:$0xf]
  %v94 = vld [vmem:[%s1 + $0x118] sm:$0xf]
  %v95 = vld [vmem:[%s1 + $0x11c] sm:$0xf]
  %v96 = vld [vmem:[%s1 + $0x120] sm:$0xf]
  %v97 = vld [vmem:[%s1 + $0x124] sm:$0xf]
  %v98 = vld [vmem:[%s1 + $0x128] sm:$0xf]
  %v99 = vld [vmem:[%s1 + $0x12c] sm:$0xf]
  %v100 = vld [vmem:[%s1 + $0x130] sm:$0xf]
  %v101 = vld [vmem:[%s1 + $0x134] sm:$0xf]
  %v102 = vld [vmem:[%s1 + $0x138] sm:$0xf]
  %v103 = vld [vmem:[%s1 + $0x13c] sm:$0xf]
  %v104 = vld [vmem:[%s2] sm:$0xff]
  %v105 = vld [vmem:[%s2 + $0x8] sm:$0xff]
  %v106 = vld [vmem:[%s2 + $0x10] sm:$0xf]
  %v116 = vunpack.c.l.b16 %v15
  %v117 = vunpack.c.h.b16 %v15
  %v118 = vunpack.c.l.b16 %v16
  %v119 = vunpack.c.h.b16 %v16
  %v120 = vunpack.c.l.b16 %v17
  %v121 = vunpack.c.l.b16 %v18
  %v122 = vunpack.c.h.b16 %v18
  %v123 = vunpack.c.l.b16 %v19
  %v124 = vunpack.c.h.b16 %v19
  %v125 = vunpack.c.l.b16 %v20
  %v126 = vunpack.c.l.b16 %v21
  %v127 = vunpack.c.h.b16 %v21
  %v128 = vunpack.c.l.b16 %v22
  %v129 = vunpack.c.h.b16 %v22
  %v130 = vunpack.c.l.b16 %v23
  %v131 = vpack.c.b16 %v121, %v116
  %v132 = vpack.c.b16 %v122, %v117
  %v133 = vpack.c.b16 %v123, %v118
  %v134 = vpack.c.b16 %v124, %v119
  %v135 = vpack.c.b16 %v125, %v120
  %v136 = vpack.c.b16 %v126, %v126
  %v137 = vpack.c.b16 %v127, %v127
  %v138 = vpack.c.b16 %v128, %v128
  %v139 = vpack.c.b16 %v129, %v129
  %v140 = vpack.c.b16 %v130, %v130
  %v231 = vunpack.c.l.b16 %v24
  %v232 = vunpack.c.l.b16 %v25
  %v233 = vunpack.c.l.b16 %v26
  %v234 = vunpack.c.l.b16 %v27
  %v235 = vunpack.c.l.b16 %v28
  %v236 = vunpack.c.l.b16 %v29
  %v237 = vunpack.c.l.b16 %v30
  %v238 = vunpack.c.l.b16 %v31
  %v239 = vunpack.c.l.b16 %v32
  %v240 = vunpack.c.l.b16 %v33
  %v241 = vunpack.c.l.b16 %v34
  %v242 = vunpack.c.l.b16 %v35
  %v243 = vunpack.c.l.b16 %v36
  %v244 = vunpack.c.l.b16 %v37
  %v245 = vunpack.c.l.b16 %v38
  %v246 = vunpack.c.l.b16 %v39
  %v247 = vunpack.c.l.b16 %v40
  %v248 = vunpack.c.l.b16 %v41
  %v249 = vunpack.c.l.b16 %v42
  %v250 = vunpack.c.l.b16 %v43
  %v251 = vunpack.c.l.b16 %v44
  %v252 = vunpack.c.l.b16 %v45
  %v253 = vunpack.c.l.b16 %v46
  %v254 = vunpack.c.l.b16 %v47
  %v255 = vunpack.c.l.b16 %v48
  %v256 = vunpack.c.l.b16 %v49
  %v257 = vunpack.c.l.b16 %v50
  %v258 = vunpack.c.l.b16 %v51
  %v259 = vunpack.c.l.b16 %v52
  %v260 = vunpack.c.l.b16 %v53
  %v261 = vunpack.c.l.b16 %v54
  %v262 = vunpack.c.l.b16 %v55
  %v263 = vunpack.c.l.b16 %v56
  %v264 = vunpack.c.l.b16 %v57
  %v265 = vunpack.c.l.b16 %v58
  %v266 = vunpack.c.l.b16 %v59
  %v267 = vunpack.c.l.b16 %v60
  %v268 = vunpack.c.l.b16 %v61
  %v269 = vunpack.c.l.b16 %v62
  %v270 = vunpack.c.l.b16 %v63
  %v271 = vunpack.c.l.b16 %v64
  %v272 = vunpack.c.l.b16 %v65
  %v273 = vunpack.c.l.b16 %v66
  %v274 = vunpack.c.l.b16 %v67
  %v275 = vunpack.c.l.b16 %v68
  %v276 = vunpack.c.l.b16 %v69
  %v277 = vunpack.c.l.b16 %v70
  %v278 = vunpack.c.l.b16 %v71
  %v279 = vunpack.c.l.b16 %v72
  %v280 = vunpack.c.l.b16 %v73
  %v281 = vunpack.c.l.b16 %v74
  %v282 = vunpack.c.l.b16 %v75
  %v283 = vunpack.c.l.b16 %v76
  %v284 = vunpack.c.l.b16 %v77
  %v285 = vunpack.c.l.b16 %v78
  %v286 = vunpack.c.l.b16 %v79
  %v287 = vunpack.c.l.b16 %v80
  %v288 = vunpack.c.l.b16 %v81
  %v289 = vunpack.c.l.b16 %v82
  %v290 = vunpack.c.l.b16 %v83
  %v291 = vunpack.c.l.b16 %v84
  %v292 = vunpack.c.l.b16 %v85
  %v293 = vunpack.c.l.b16 %v86
  %v294 = vunpack.c.l.b16 %v87
  %v295 = vunpack.c.l.b16 %v88
  %v296 = vunpack.c.l.b16 %v89
  %v297 = vunpack.c.l.b16 %v90
  %v298 = vunpack.c.l.b16 %v91
  %v299 = vunpack.c.l.b16 %v92
  %v300 = vunpack.c.l.b16 %v93
  %v301 = vunpack.c.l.b16 %v94
  %v302 = vunpack.c.l.b16 %v95
  %v303 = vunpack.c.l.b16 %v96
  %v304 = vunpack.c.l.b16 %v97
  %v305 = vunpack.c.l.b16 %v98
  %v306 = vunpack.c.l.b16 %v99
  %v307 = vunpack.c.l.b16 %v100
  %v308 = vunpack.c.l.b16 %v101
  %v309 = vunpack.c.l.b16 %v102
  %v310 = vunpack.c.l.b16 %v103
  %v311 = vpack.c.b16 %v232, %v231
  %v312 = vpack.c.b16 %v234, %v233
  %v313 = vpack.c.b16 %v236, %v235
  %v314 = vpack.c.b16 %v238, %v237
  %v315 = vpack.c.b16 %v240, %v239
  %v316 = vpack.c.b16 %v242, %v241
  %v317 = vpack.c.b16 %v244, %v243
  %v318 = vpack.c.b16 %v246, %v245
  %v319 = vpack.c.b16 %v248, %v247
  %v320 = vpack.c.b16 %v250, %v249
  %v321 = vpack.c.b16 %v252, %v251
  %v322 = vpack.c.b16 %v254, %v253
  %v323 = vpack.c.b16 %v256, %v255
  %v324 = vpack.c.b16 %v258, %v257
  %v325 = vpack.c.b16 %v260, %v259
  %v326 = vpack.c.b16 %v262, %v261
  %v327 = vpack.c.b16 %v264, %v263
  %v328 = vpack.c.b16 %v266, %v265
  %v329 = vpack.c.b16 %v268, %v267
  %v330 = vpack.c.b16 %v270, %v269
  %v331 = vpack.c.b16 %v272, %v271
  %v332 = vpack.c.b16 %v274, %v273
  %v333 = vpack.c.b16 %v276, %v275
  %v334 = vpack.c.b16 %v278, %v277
  %v335 = vpack.c.b16 %v280, %v279
  %v336 = vpack.c.b16 %v282, %v281
  %v337 = vpack.c.b16 %v284, %v283
  %v338 = vpack.c.b16 %v286, %v285
  %v339 = vpack.c.b16 %v288, %v287
  %v340 = vpack.c.b16 %v290, %v289
  %v341 = vpack.c.b16 %v292, %v291
  %v342 = vpack.c.b16 %v294, %v293
  %v343 = vpack.c.b16 %v296, %v295
  %v344 = vpack.c.b16 %v298, %v297
  %v345 = vpack.c.b16 %v300, %v299
  %v346 = vpack.c.b16 %v302, %v301
  %v347 = vpack.c.b16 %v304, %v303
  %v348 = vpack.c.b16 %v306, %v305
  %v349 = vpack.c.b16 %v308, %v307
  %v350 = vpack.c.b16 %v310, %v309
  %391 = vmatprep.subr.bf16.mxu0 0
  %392 = vmatpush1.bf16.msra.mxu0 %v311
  %393 = vmatprep.subr.bf16.mxu0 0
  %394 = vmatpush1.bf16.msra.mxu0 %v312
  %395 = vmatprep.subr.bf16.mxu0 0
  %396 = vmatpush1.bf16.msra.mxu0 %v313
  %397 = vmatprep.subr.bf16.mxu0 0
  %398 = vmatpush1.bf16.msra.mxu0 %v314
  %399 = vmatprep.subr.bf16.mxu0 0
  %400 = vmatpush1.bf16.msra.mxu0 %v315
  %401 = vmatprep.subr.bf16.mxu0 0
  %402 = vmatpush1.bf16.msra.mxu0 %v316
  %403 = vmatprep.subr.bf16.mxu0 0
  %404 = vmatpush1.bf16.msra.mxu0 %v317
  %405 = vmatprep.subr.bf16.mxu0 0
  %406 = vmatpush1.bf16.msra.mxu0 %v318
  %407 = vmatprep.subr.bf16.mxu0 0
  %408 = vmatpush1.bf16.msra.mxu0 %v319
  %409 = vmatprep.subr.bf16.mxu0 0
  %410 = vmatpush1.bf16.msra.mxu0 %v320
  %411 = vmatprep.subr.bf16.mxu0 0
  %412 = vmatpush1.bf16.msra.mxu0 %v321
  %413 = vmatprep.subr.bf16.mxu0 0
  %414 = vmatpush1.bf16.msra.mxu0 %v322
  %415 = vmatprep.subr.bf16.mxu0 0
  %416 = vmatpush1.bf16.msra.mxu0 %v323
  %417 = vmatprep.subr.bf16.mxu0 0
  %418 = vmatpush1.bf16.msra.mxu0 %v324
  %419 = vmatprep.subr.bf16.mxu0 0
  %420 = vmatpush1.bf16.msra.mxu0 %v325
  %421 = vmatprep.subr.bf16.mxu0 0
  %422 = vmatpush1.bf16.msra.mxu0 %v326
  %423 = vmatprep.mubr.bf16.mxu0 %v132
  %424 = vmatmul.mubr.bf16.gmra.mrb[0].mxu0 %v131
  %v425 = vpop.f32.mrb[0].mxu0
  %v426 = vadd.f32 %v104, %v425
  %v427 = vpop.f32.mrb[0].mxu0
  %v428 = vpop.f32.mrb[0].mxu0
  %v429 = vadd.f32 %v105, %v428
  %v430 = vpop.f32.mrb[0].mxu0
  %431 = vmatprep.mubr.bf16.mxu0 %v137
  %432 = vmatmul.mubr.bf16.gmra.mrb[0].mxu0 %v136
  %v433 = vpop.f32.mrb[0].mxu0
  %v434 = vadd.f32 %v106, %v433
  %v435 = vpop.f32.mrb[0].mxu0
  %v436 = vpop.f32.mrb[0].mxu0
  %v437 = vpop.f32.mrb[0].mxu0
  %438 = vdwg.mxu0
  %439 = vmatprep.subr.bf16.mxu0 0
  %440 = vmatpush1.bf16.msra.mxu0 %v327
  %441 = vmatprep.subr.bf16.mxu0 0
  %442 = vmatpush1.bf16.msra.mxu0 %v328
  %443 = vmatprep.subr.bf16.mxu0 0
  %444 = vmatpush1.bf16.msra.mxu0 %v329
  %445 = vmatprep.subr.bf16.mxu0 0
  %446 = vmatpush1.bf16.msra.mxu0 %v330
  %447 = vmatprep.subr.bf16.mxu0 0
  %448 = vmatpush1.bf16.msra.mxu0 %v331
  %449 = vmatprep.subr.bf16.mxu0 0
  %450 = vmatpush1.bf16.msra.mxu0 %v332
  %451 = vmatprep.subr.bf16.mxu0 0
  %452 = vmatpush1.bf16.msra.mxu0 %v333
  %453 = vmatprep.subr.bf16.mxu0 0
  %454 = vmatpush1.bf16.msra.mxu0 %v334
  %455 = vmatprep.subr.bf16.mxu0 0
  %456 = vmatpush1.bf16.msra.mxu0 %v335
  %457 = vmatprep.subr.bf16.mxu0 0
  %458 = vmatpush1.bf16.msra.mxu0 %v336
  %459 = vmatprep.subr.bf16.mxu0 0
  %460 = vmatpush1.bf16.msra.mxu0 %v337
  %461 = vmatprep.subr.bf16.mxu0 0
  %462 = vmatpush1.bf16.msra.mxu0 %v338
  %463 = vmatprep.subr.bf16.mxu0 0
  %464 = vmatpush1.bf16.msra.mxu0 %v339
  %465 = vmatprep.subr.bf16.mxu0 0
  %466 = vmatpush1.bf16.msra.mxu0 %v340
  %467 = vmatprep.subr.bf16.mxu0 0
  %468 = vmatpush1.bf16.msra.mxu0 %v341
  %469 = vmatprep.subr.bf16.mxu0 0
  %470 = vmatpush1.bf16.msra.mxu0 %v342
  %471 = vmatprep.mubr.bf16.mxu0 %v134
  %472 = vmatmul.mubr.bf16.gmra.mrb[0].mxu0 %v133
  %v473 = vpop.f32.mrb[0].mxu0
  %v474 = vadd.f32 %v426, %v473
  %v475 = vpop.f32.mrb[0].mxu0
  %v476 = vpop.f32.mrb[0].mxu0
  %v477 = vadd.f32 %v429, %v476
  %v478 = vpop.f32.mrb[0].mxu0
  %479 = vmatprep.mubr.bf16.mxu0 %v139
  %480 = vmatmul.mubr.bf16.gmra.mrb[0].mxu0 %v138
  %v481 = vpop.f32.mrb[0].mxu0
  %v482 = vadd.f32 %v434, %v481
  %v483 = vpop.f32.mrb[0].mxu0
  %v484 = vpop.f32.mrb[0].mxu0
  %v485 = vpop.f32.mrb[0].mxu0
  %486 = vdwg.mxu0
  %487 = vmatprep.subr.bf16.mxu0 0
  %488 = vmatpush1.bf16.msra.mxu0 %v343
  %489 = vmatprep.subr.bf16.mxu0 0
  %490 = vmatpush1.bf16.msra.mxu0 %v344
  %491 = vmatprep.subr.bf16.mxu0 0
  %492 = vmatpush1.bf16.msra.mxu0 %v345
  %493 = vmatprep.subr.bf16.mxu0 0
  %494 = vmatpush1.bf16.msra.mxu0 %v346
  %495 = vmatprep.subr.bf16.mxu0 0
  %496 = vmatpush1.bf16.msra.mxu0 %v347
  %497 = vmatprep.subr.bf16.mxu0 0
  %498 = vmatpush1.bf16.msra.mxu0 %v348
  %499 = vmatprep.subr.bf16.mxu0 0
  %500 = vmatpush1.bf16.msra.mxu0 %v349
  %501 = vmatprep.subr.bf16.mxu0 0
  %502 = vmatpush1.bf16.msra.mxu0 %v350
  %503 = vmatprep.subr.bf16.mxu0 0
  %504 = vmatpush1.bf16.msra.mxu0 0
  %505 = vmatprep.subr.bf16.mxu0 0
  %506 = vmatpush1.bf16.msra.mxu0 0
  %507 = vmatprep.subr.bf16.mxu0 0
  %508 = vmatpush1.bf16.msra.mxu0 0
  %509 = vmatprep.subr.bf16.mxu0 0
  %510 = vmatpush1.bf16.msra.mxu0 0
  %511 = vmatprep.subr.bf16.mxu0 0
  %512 = vmatpush1.bf16.msra.mxu0 0
  %513 = vmatprep.subr.bf16.mxu0 0
  %514 = vmatpush1.bf16.msra.mxu0 0
  %515 = vmatprep.subr.bf16.mxu0 0
  %516 = vmatpush1.bf16.msra.mxu0 0
  %517 = vmatprep.subr.bf16.mxu0 0
  %518 = vmatpush1.bf16.msra.mxu0 0
  %519 = vmatprep.mubr.bf16.mxu0 0
  %520 = vmatmul.mubr.bf16.gmra.mrb[0].mxu0 %v135
  %v521 = vpop.f32.mrb[0].mxu0
  %v522 = vadd.f32 %v474, %v521
  %v523 = vpop.f32.mrb[0].mxu0
  %v524 = vpop.f32.mrb[0].mxu0
  %v525 = vadd.f32 %v477, %v524
  %v526 = vpop.f32.mrb[0].mxu0
  %527 = vmatprep.mubr.bf16.mxu0 0
  %528 = vmatmul.mubr.bf16.gmra.mrb[0].mxu0 %v140
  %v529 = vpop.f32.mrb[0].mxu0
  %v530 = vadd.f32 %v482, %v529
  %v531 = vpop.f32.mrb[0].mxu0
  %v532 = vpop.f32.mrb[0].mxu0
  %v533 = vpop.f32.mrb[0].mxu0
  %534 = vdwg.mxu0
  %v535 = vlaneseq
  %v536 = vshrl.u32 %v535, 7
  %v537 = vadd.s32 %v536, 8
  %v538 = vadd.s32 %v536, 16
  %v539 = vlaneseq
  %v540 = vand.u32 %v539, 127
  %vm541 = vcmp.ge.s32.totalorder %v536, 0
  %vm542 = vcmp.ge.s32.totalorder %v537, 0
  %vm543 = vcmp.ge.s32.totalorder %v538, 0
  %vm544 = vcmp.lt.s32.totalorder %v536, 4
  %vm545 = vcmp.lt.s32.totalorder %v537, 4
  %vm546 = vcmp.lt.s32.totalorder %v538, 4
  %vm547 = vmand %vm541, %vm544
  %vm548 = vmand %vm542, %vm545
  %vm549 = vmand %vm543, %vm546
  %vm550 = vcmp.eq.s32.totalorder %v536, 16
  %vm551 = vcmp.eq.s32.totalorder %v537, 16
  %vm552 = vcmp.eq.s32.totalorder %v538, 16
  %vm553 = vmor %vm547, %vm550
  %vm554 = vmor %vm548, %vm551
  %vm555 = vmor %vm549, %vm552
  %vm556 = vcmp.ge.s32.totalorder %v540, 0
  %vm557 = vcmp.lt.s32.totalorder %v540, 4
  %vm558 = vmand %vm556, %vm557
  %vm559 = vcmp.eq.s32.totalorder %v540, 16
  %vm560 = vmor %vm558, %vm559
  %vm561 = vmand %vm553, %vm560
  %vm562 = vmand %vm554, %vm560
  %vm563 = vmand %vm555, %vm560
  %vm564 = vcmp.ge.s32.totalorder %v536, 4
  %vm565 = vcmp.ge.s32.totalorder %v537, 4
  %vm566 = vcmp.ge.s32.totalorder %v538, 4
  %vm567 = vcmp.lt.s32.totalorder %v536, 8
  %vm568 = vcmp.lt.s32.totalorder %v537, 8
  %vm569 = vcmp.lt.s32.totalorder %v538, 8
  %vm570 = vmand %vm564, %vm567
  %vm571 = vmand %vm565, %vm568
  %vm572 = vmand %vm566, %vm569
  %vm573 = vcmp.eq.s32.totalorder %v536, 17
  %vm574 = vcmp.eq.s32.totalorder %v537, 17
  %vm575 = vcmp.eq.s32.totalorder %v538, 17
  %vm576 = vmor %vm570, %vm573
  %vm577 = vmor %vm571, %vm574
  %vm578 = vmor %vm572, %vm575
  %vm579 = vcmp.ge.s32.totalorder %v540, 4
  %vm580 = vcmp.lt.s32.totalorder %v540, 8
  %vm581 = vmand %vm579, %vm580
  %vm582 = vcmp.eq.s32.totalorder %v540, 17
  %vm583 = vmor %vm581, %vm582
  %vm584 = vmand %vm576, %vm583
  %vm585 = vmand %vm577, %vm583
  %vm586 = vmand %vm578, %vm583
  %vm587 = vmor %vm561, %vm584
  %vm588 = vmor %vm562, %vm585
  %vm589 = vmor %vm563, %vm586
  %vm590 = vcmp.ge.s32.totalorder %v536, 8
  %vm591 = vcmp.ge.s32.totalorder %v537, 8
  %vm592 = vcmp.ge.s32.totalorder %v538, 8
  %vm593 = vcmp.lt.s32.totalorder %v536, 12
  %vm594 = vcmp.lt.s32.totalorder %v537, 12
  %vm595 = vcmp.lt.s32.totalorder %v538, 12
  %vm596 = vmand %vm590, %vm593
  %vm597 = vmand %vm591, %vm594
  %vm598 = vmand %vm592, %vm595
  %vm599 = vcmp.eq.s32.totalorder %v536, 18
  %vm600 = vcmp.eq.s32.totalorder %v537, 18
  %vm601 = vcmp.eq.s32.totalorder %v538, 18
  %vm602 = vmor %vm596, %vm599
  %vm603 = vmor %vm597, %vm600
  %vm604 = vmor %vm598, %vm601
  %vm605 = vcmp.ge.s32.totalorder %v540, 8
  %vm606 = vcmp.lt.s32.totalorder %v540, 12
  %vm607 = vmand %vm605, %vm606
  %vm608 = vcmp.eq.s32.totalorder %v540, 18
  %vm609 = vmor %vm607, %vm608
  %vm610 = vmand %vm602, %vm609
  %vm611 = vmand %vm603, %vm609
  %vm612 = vmand %vm604, %vm609
  %vm613 = vmor %vm587, %vm610
  %vm614 = vmor %vm588, %vm611
  %vm615 = vmor %vm589, %vm612
  %vm616 = vcmp.ge.s32.totalorder %v536, 12
  %vm617 = vcmp.ge.s32.totalorder %v537, 12
  %vm618 = vcmp.ge.s32.totalorder %v538, 12
  %vm619 = vcmp.lt.s32.totalorder %v536, 16
  %vm620 = vcmp.lt.s32.totalorder %v537, 16
  %vm621 = vcmp.lt.s32.totalorder %v538, 16
  %vm622 = vmand %vm616, %vm619
  %vm623 = vmand %vm617, %vm620
  %vm624 = vmand %vm618, %vm621
  %vm625 = vcmp.eq.s32.totalorder %v536, 19
  %vm626 = vcmp.eq.s32.totalorder %v537, 19
  %vm627 = vcmp.eq.s32.totalorder %v538, 19
  %vm628 = vmor %vm622, %vm625
  %vm629 = vmor %vm623, %vm626
  %vm630 = vmor %vm624, %vm627
  %vm631 = vcmp.ge.s32.totalorder %v540, 12
  %vm632 = vcmp.lt.s32.totalorder %v540, 16
  %vm633 = vmand %vm631, %vm632
  %vm634 = vcmp.eq.s32.totalorder %v540, 19
  %vm635 = vmor %vm633, %vm634
  %vm636 = vmand %vm628, %vm635
  %vm637 = vmand %vm629, %vm635
  %vm638 = vmand %vm630, %vm635
  %vm639 = vmor %vm613, %vm636
  %vm640 = vmor %vm614, %vm637
  %vm641 = vmor %vm615, %vm638
  %v642 = vld [vmem:[%s2 + $0x14] sm:$0x1]
  %v643 = vld [vmem:[%s2 + $0x15] sm:$0x1]
  %vm644 = vcmask 261120
  %v645 = vsel %vm644, %v522, 0.0
  %646 = vadd.xlane.f32.xlu0 %v645
  %v647 = vpop.xlane.xlu0 %646
  %v648 = vsel %vm644, %v525, 0.0
  %649 = vadd.xlane.f32.xlu0 %v648
  %v650 = vpop.xlane.xlu0 %649
  %vm651 = vcmask 257024
  %v652 = vsel %vm651, %v530, 0.0
  %653 = vadd.xlane.f32.xlu0 %v652
  %v654 = vpop.xlane.xlu0 %653
  %v655 = vrcp.pop 32.0
  %v656 = vmul.f32 %v647, %v655
  %v657 = vmul.f32 %v650, %v655
  %v658 = vmul.f32 %v654, %v655
  %v659 = vsub.f32 %v522, %v656
  %v660 = vsub.f32 %v525, %v657
  %v661 = vsub.f32 %v530, %v658
  %v662 = vmul.f32 %v659, %v659
  %v663 = vmul.f32 %v660, %v660
  %v664 = vmul.f32 %v661, %v661
  %v665 = vsel %vm644, %v662, 0.0
  %666 = vadd.xlane.f32.xlu0 %v665
  %v667 = vpop.xlane.xlu0 %666
  %v668 = vsel %vm644, %v663, 0.0
  %669 = vadd.xlane.f32.xlu0 %v668
  %v670 = vpop.xlane.xlu0 %669
  %v671 = vsel %vm651, %v664, 0.0
  %672 = vadd.xlane.f32.xlu0 %v671
  %v673 = vpop.xlane.xlu0 %672
  %v674 = vmul.f32 %v667, %v655
  %v675 = vmul.f32 %v670, %v655
  %v676 = vmul.f32 %v673, %v655
  %v677 = vadd.f32 %v674, 1e-06
  %v678 = vadd.f32 %v675, 1e-06
  %v679 = vadd.f32 %v676, 1e-06
  %v680 = vrsqrt.pop %v677
  %v681 = vrsqrt.pop %v678
  %v682 = vrsqrt.pop %v679
  %v683 = vmul.f32 %v659, %v680
  %v684 = vmul.f32 %v660, %v681
  %v685 = vmul.f32 %v661, %v682
  %v686 = vlaneseq
  %v687 = vshrl.u32 %v686, 7
  %v688 = vsub.s32 0, %v687
  %v689 = vrot.slane %v642, %v688
  %v690 = vmul.f32 %v683, %v689
  %v691 = vmul.f32 %v684, %v689
  %v692 = vmul.f32 %v685, %v689
  %v693 = vlaneseq
  %v694 = vshrl.u32 %v693, 7
  %v695 = vsub.s32 0, %v694
  %v696 = vrot.slane %v643, %v695
  %v697 = vadd.f32 %v690, %v696
  %v698 = vadd.f32 %v691, %v696
  %v699 = vadd.f32 %v692, %v696
  %v700 = vpack.c.bf16 %v698, %v697
  %v701 = vpack.c.bf16 %v699, %v699
  %v702 = vld [vmem:[%s1 + $0x140] sm:$0xf]
  %v703 = vld [vmem:[%s1 + $0x144] sm:$0xf]
  %v704 = vld [vmem:[%s2 + $0x16] sm:$0x1]
  %v705 = vlaneseq
  %v706 = vshrl.u32 %v705, 7
  %v707 = vsub.s32 0, %v706
  %v708 = vrot.slane %v704, %v707
  %v711 = vunpack.c.l.b16 %v702
  %v712 = vunpack.c.l.b16 %v703
  %v713 = vpack.c.b16 %v712, %v711
  %v715 = vsel %vm644, %v700, 0
  %v718 = vsel %vm644, %v701, 0
  %v721 = vsel %vm644, %v713, 0
  %723 = vmatprep.subr.bf16.mxu0 0
  %724 = vmatpush1.bf16.xpose.msra.mxu0 %v721
  %725 = vmatprep.subr.bf16.mxu0 0
  %726 = vmatpush1.bf16.xpose.msra.mxu0 0
  %727 = vmatprep.subr.bf16.mxu0 0
  %728 = vmatpush1.bf16.xpose.msra.mxu0 0
  %729 = vmatprep.subr.bf16.mxu0 0
  %730 = vmatpush1.bf16.xpose.msra.mxu0 0
  %731 = vmatprep.subr.bf16.mxu0 0
  %732 = vmatpush1.bf16.xpose.msra.mxu0 0
  %733 = vmatprep.subr.bf16.mxu0 0
  %734 = vmatpush1.bf16.xpose.msra.mxu0 0
  %735 = vmatprep.subr.bf16.mxu0 0
  %736 = vmatpush1.bf16.xpose.msra.mxu0 0
  %737 = vmatprep.subr.bf16.mxu0 0
  %738 = vmatpush1.bf16.xpose.msra.mxu0 0
  %739 = vmatprep.subr.bf16.mxu0 0
  %740 = vmatpush1.bf16.xpose.msra.mxu0 0
  %741 = vmatprep.subr.bf16.mxu0 0
  %742 = vmatpush1.bf16.xpose.msra.mxu0 0
  %743 = vmatprep.subr.bf16.mxu0 0
  %744 = vmatpush1.bf16.xpose.msra.mxu0 0
  %745 = vmatprep.subr.bf16.mxu0 0
  %746 = vmatpush1.bf16.xpose.msra.mxu0 0
  %747 = vmatprep.subr.bf16.mxu0 0
  %748 = vmatpush1.bf16.xpose.msra.mxu0 0
  %749 = vmatprep.subr.bf16.mxu0 0
  %750 = vmatpush1.bf16.xpose.msra.mxu0 0
  %751 = vmatprep.subr.bf16.mxu0 0
  %752 = vmatpush1.bf16.xpose.msra.mxu0 0
  %753 = vmatprep.subr.bf16.mxu0 0
  %754 = vmatpush1.bf16.xpose.msra.mxu0 0
  %755 = vmatprep.mubr.bf16.mxu0 0
  %756 = vmatmul.mubr.bf16.gmra.mrb[0].mxu0 %v715
  %v757 = vpop.f32.mrb[0].mxu0
  %v758 = vadd.f32 %v708, %v757
  %v759 = vpop.f32.mrb[0].mxu0
  %v760 = vpop.f32.mrb[0].mxu0
  %v761 = vadd.f32 %v708, %v760
  %v762 = vpop.f32.mrb[0].mxu0
  %763 = vmatprep.mubr.bf16.mxu0 0
  %764 = vmatmul.mubr.bf16.gmra.mrb[0].mxu0 %v718
  %v765 = vpop.f32.mrb[0].mxu0
  %v766 = vadd.f32 %v708, %v765
  %v767 = vpop.f32.mrb[0].mxu0
  %v768 = vpop.f32.mrb[0].mxu0
  %v769 = vpop.f32.mrb[0].mxu0
  %770 = vdwg.mxu0
  %v771 = vld [vmem:[%s1 + $0x148] sm:$0xf]
  %v772 = vld [vmem:[%s1 + $0x14c] sm:$0xf]
  %v773 = vld [vmem:[%s2 + $0x17] sm:$0x1]
  %v774 = vlaneseq
  %v775 = vshrl.u32 %v774, 7
  %v776 = vsub.s32 0, %v775
  %v777 = vrot.slane %v773, %v776
  %v780 = vunpack.c.l.b16 %v771
  %v781 = vunpack.c.l.b16 %v772
  %v782 = vpack.c.b16 %v781, %v780
  %v784 = vsel %vm644, %v782, 0
  %786 = vmatprep.subr.bf16.mxu0 0
  %787 = vmatpush1.bf16.xpose.msra.mxu0 %v784
  %788 = vmatprep.subr.bf16.mxu0 0
  %789 = vmatpush1.bf16.xpose.msra.mxu0 0
  %790 = vmatprep.subr.bf16.mxu0 0
  %791 = vmatpush1.bf16.xpose.msra.mxu0 0
  %792 = vmatprep.subr.bf16.mxu0 0
  %793 = vmatpush1.bf16.xpose.msra.mxu0 0
  %794 = vmatprep.subr.bf16.mxu0 0
  %795 = vmatpush1.bf16.xpose.msra.mxu0 0
  %796 = vmatprep.subr.bf16.mxu0 0
  %797 = vmatpush1.bf16.xpose.msra.mxu0 0
  %798 = vmatprep.subr.bf16.mxu0 0
  %799 = vmatpush1.bf16.xpose.msra.mxu0 0
  %800 = vmatprep.subr.bf16.mxu0 0
  %801 = vmatpush1.bf16.xpose.msra.mxu0 0
  %802 = vmatprep.subr.bf16.mxu0 0
  %803 = vmatpush1.bf16.xpose.msra.mxu0 0
  %804 = vmatprep.subr.bf16.mxu0 0
  %805 = vmatpush1.bf16.xpose.msra.mxu0 0
  %806 = vmatprep.subr.bf16.mxu0 0
  %807 = vmatpush1.bf16.xpose.msra.mxu0 0
  %808 = vmatprep.subr.bf16.mxu0 0
  %809 = vmatpush1.bf16.xpose.msra.mxu0 0
  %810 = vmatprep.subr.bf16.mxu0 0
  %811 = vmatpush1.bf16.xpose.msra.mxu0 0
  %812 = vmatprep.subr.bf16.mxu0 0
  %813 = vmatpush1.bf16.xpose.msra.mxu0 0
  %814 = vmatprep.subr.bf16.mxu0 0
  %815 = vmatpush1.bf16.xpose.msra.mxu0 0
  %816 = vmatprep.subr.bf16.mxu0 0
  %817 = vmatpush1.bf16.xpose.msra.mxu0 0
  %818 = vmatprep.mubr.bf16.mxu0 0
  %819 = vmatmul.mubr.bf16.gmra.mrb[0].mxu0 %v715
  %v820 = vpop.f32.mrb[0].mxu0
  %v821 = vadd.f32 %v777, %v820
  %v822 = vpop.f32.mrb[0].mxu0
  %v823 = vpop.f32.mrb[0].mxu0
  %v824 = vadd.f32 %v777, %v823
  %v825 = vpop.f32.mrb[0].mxu0
  %826 = vmatprep.mubr.bf16.mxu0 0
  %827 = vmatmul.mubr.bf16.gmra.mrb[0].mxu0 %v718
  %v828 = vpop.f32.mrb[0].mxu0
  %v829 = vadd.f32 %v777, %v828
  %v830 = vpop.f32.mrb[0].mxu0
  %v831 = vpop.f32.mrb[0].mxu0
  %v832 = vpop.f32.mrb[0].mxu0
  %833 = vdwg.mxu0
  %v834 = vld [vmem:[%s1 + $0x150] sm:$0xf]
  %v835 = vld [vmem:[%s1 + $0x154] sm:$0xf]
  %v836 = vld [vmem:[%s2 + $0x18] sm:$0x1]
  %v837 = vlaneseq
  %v838 = vshrl.u32 %v837, 7
  %v839 = vsub.s32 0, %v838
  %v840 = vrot.slane %v836, %v839
  %v843 = vunpack.c.l.b16 %v834
  %v844 = vunpack.c.l.b16 %v835
  %v845 = vpack.c.b16 %v844, %v843
  %v847 = vsel %vm644, %v845, 0
  %849 = vmatprep.subr.bf16.mxu0 0
  %850 = vmatpush1.bf16.xpose.msra.mxu0 %v847
  %851 = vmatprep.subr.bf16.mxu0 0
  %852 = vmatpush1.bf16.xpose.msra.mxu0 0
  %853 = vmatprep.subr.bf16.mxu0 0
  %854 = vmatpush1.bf16.xpose.msra.mxu0 0
  %855 = vmatprep.subr.bf16.mxu0 0
  %856 = vmatpush1.bf16.xpose.msra.mxu0 0
  %857 = vmatprep.subr.bf16.mxu0 0
  %858 = vmatpush1.bf16.xpose.msra.mxu0 0
  %859 = vmatprep.subr.bf16.mxu0 0
  %860 = vmatpush1.bf16.xpose.msra.mxu0 0
  %861 = vmatprep.subr.bf16.mxu0 0
  %862 = vmatpush1.bf16.xpose.msra.mxu0 0
  %863 = vmatprep.subr.bf16.mxu0 0
  %864 = vmatpush1.bf16.xpose.msra.mxu0 0
  %865 = vmatprep.subr.bf16.mxu0 0
  %866 = vmatpush1.bf16.xpose.msra.mxu0 0
  %867 = vmatprep.subr.bf16.mxu0 0
  %868 = vmatpush1.bf16.xpose.msra.mxu0 0
  %869 = vmatprep.subr.bf16.mxu0 0
  %870 = vmatpush1.bf16.xpose.msra.mxu0 0
  %871 = vmatprep.subr.bf16.mxu0 0
  %872 = vmatpush1.bf16.xpose.msra.mxu0 0
  %873 = vmatprep.subr.bf16.mxu0 0
  %874 = vmatpush1.bf16.xpose.msra.mxu0 0
  %875 = vmatprep.subr.bf16.mxu0 0
  %876 = vmatpush1.bf16.xpose.msra.mxu0 0
  %877 = vmatprep.subr.bf16.mxu0 0
  %878 = vmatpush1.bf16.xpose.msra.mxu0 0
  %879 = vmatprep.subr.bf16.mxu0 0
  %880 = vmatpush1.bf16.xpose.msra.mxu0 0
  %881 = vmatprep.mubr.bf16.mxu0 0
  %882 = vmatmul.mubr.bf16.gmra.mrb[0].mxu0 %v715
  %v883 = vpop.f32.mrb[0].mxu0
  %v884 = vadd.f32 %v840, %v883
  %v885 = vpop.f32.mrb[0].mxu0
  %v886 = vpop.f32.mrb[0].mxu0
  %v887 = vadd.f32 %v840, %v886
  %v888 = vpop.f32.mrb[0].mxu0
  %889 = vmatprep.mubr.bf16.mxu0 0
  %890 = vmatmul.mubr.bf16.gmra.mrb[0].mxu0 %v718
  %v891 = vpop.f32.mrb[0].mxu0
  %v892 = vadd.f32 %v840, %v891
  %v893 = vpop.f32.mrb[0].mxu0
  %v894 = vpop.f32.mrb[0].mxu0
  %v895 = vpop.f32.mrb[0].mxu0
  %896 = vdwg.mxu0
  %v897 = vpack.c.bf16 %v761, %v758
  %v898 = vpack.c.bf16 %v766, %v766
  %v899 = vpack.c.bf16 %v824, %v821
  %v900 = vpack.c.bf16 %v829, %v829
  %vm901 = vcmask 130048
  %v903 = vsel %vm901, %v897, 0
  %v906 = vsel %vm901, %v898, 0
  %v909 = vsel %vm901, %v899, 0
  %v912 = vsel %vm901, %v900, 0
  %914 = vmatprep.subr.bf16.mxu0 0
  %915 = vmatpush1.bf16.xpose.msra.mxu0 %v909
  %916 = vmatprep.subr.bf16.mxu0 0
  %917 = vmatpush1.bf16.xpose.msra.mxu0 %v912
  %918 = vmatprep.subr.bf16.mxu0 0
  %919 = vmatpush1.bf16.xpose.msra.mxu0 0
  %920 = vmatprep.subr.bf16.mxu0 0
  %921 = vmatpush1.bf16.xpose.msra.mxu0 0
  %922 = vmatprep.subr.bf16.mxu0 0
  %923 = vmatpush1.bf16.xpose.msra.mxu0 0
  %924 = vmatprep.subr.bf16.mxu0 0
  %925 = vmatpush1.bf16.xpose.msra.mxu0 0
  %926 = vmatprep.subr.bf16.mxu0 0
  %927 = vmatpush1.bf16.xpose.msra.mxu0 0
  %928 = vmatprep.subr.bf16.mxu0 0
  %929 = vmatpush1.bf16.xpose.msra.mxu0 0
  %930 = vmatprep.subr.bf16.mxu0 0
  %931 = vmatpush1.bf16.xpose.msra.mxu0 0
  %932 = vmatprep.subr.bf16.mxu0 0
  %933 = vmatpush1.bf16.xpose.msra.mxu0 0
  %934 = vmatprep.subr.bf16.mxu0 0
  %935 = vmatpush1.bf16.xpose.msra.mxu0 0
  %936 = vmatprep.subr.bf16.mxu0 0
  %937 = vmatpush1.bf16.xpose.msra.mxu0 0
  %938 = vmatprep.subr.bf16.mxu0 0
  %939 = vmatpush1.bf16.xpose.msra.mxu0 0
  %940 = vmatprep.subr.bf16.mxu0 0
  %941 = vmatpush1.bf16.xpose.msra.mxu0 0
  %942 = vmatprep.subr.bf16.mxu0 0
  %943 = vmatpush1.bf16.xpose.msra.mxu0 0
  %944 = vmatprep.subr.bf16.mxu0 0
  %945 = vmatpush1.bf16.xpose.msra.mxu0 0
  %946 = vmatprep.mubr.bf16.mxu0 0
  %947 = vmatmul.mubr.bf16.gmra.mrb[0].mxu0 %v903
  %v948 = vpop.f32.mrb[0].mxu0
  %v949 = vadd.f32 0.0, %v948
  %v950 = vpop.f32.mrb[0].mxu0
  %v951 = vpop.f32.mrb[0].mxu0
  %v952 = vadd.f32 0.0, %v951
  %v953 = vpop.f32.mrb[0].mxu0
  %954 = vmatprep.mubr.bf16.mxu0 0
  %955 = vmatmul.mubr.bf16.gmra.mrb[0].mxu0 %v906
  %v956 = vpop.f32.mrb[0].mxu0
  %v957 = vadd.f32 0.0, %v956
  %v958 = vpop.f32.mrb[0].mxu0
  %v959 = vpop.f32.mrb[0].mxu0
  %v960 = vpop.f32.mrb[0].mxu0
  %961 = vdwg.mxu0
  %v962 = vmul.f32 %v949, 0.25
  %v963 = vmul.f32 %v952, 0.25
  %v964 = vmul.f32 %v957, 0.25
  %v965 = vsel %vm639, %v962, -1e+30
  %v966 = vsel %vm640, %v963, -1e+30
  %v967 = vsel %vm641, %v964, -1e+30
  %vm968 = vcmask 162816
  %v969 = vsel %vm968, %v965, -inf
  %970 = vmax.xlane.f32.xlu0 %v969
  %v971 = vpop.xlane.xlu0 %970
  %v972 = vsel %vm968, %v966, -inf
  %973 = vmax.xlane.f32.xlu0 %v972
  %v974 = vpop.xlane.xlu0 %973
  %vm975 = vcmask 158720
  %v976 = vsel %vm975, %v967, -inf
  %977 = vmax.xlane.f32.xlu0 %v976
  %v978 = vpop.xlane.xlu0 %977
  %v979 = vsub.f32 %v965, %v971
  %v980 = vsub.f32 %v966, %v974
  %v981 = vsub.f32 %v967, %v978
  %v982 = vmul.f32 %v979, 1.442695
  %v983 = vpow.pop %v982
  %v984 = vmul.f32 %v980, 1.442695
  %v985 = vpow.pop %v984
  %v986 = vmul.f32 %v981, 1.442695
  %v987 = vpow.pop %v986
  %v988 = vsel %vm968, %v983, 0.0
  %989 = vadd.xlane.f32.xlu0 %v988
  %v990 = vpop.xlane.xlu0 %989
  %v991 = vsel %vm968, %v985, 0.0
  %992 = vadd.xlane.f32.xlu0 %v991
  %v993 = vpop.xlane.xlu0 %992
  %v994 = vsel %vm975, %v987, 0.0
  %995 = vadd.xlane.f32.xlu0 %v994
  %v996 = vpop.xlane.xlu0 %995
  %v997 = vrcp.pop %v990
  %v998 = vmul.f32 %v983, %v997
  %v999 = vrcp.pop %v993
  %v1000 = vmul.f32 %v985, %v999
  %v1001 = vrcp.pop %v996
  %v1002 = vmul.f32 %v987, %v1001
  %v1003 = vpack.c.bf16 %v1000, %v998
  %v1004 = vpack.c.bf16 %v1002, %v1002
  %v1005 = vpack.c.bf16 %v887, %v884
  %v1006 = vpack.c.bf16 %v892, %v892
  %v1008 = vsel %vm968, %v1003, 0
  %v1011 = vsel %vm968, %v1004, 0
  %vm1013 = vcmask 1041408
  %v1015 = vsel %vm1013, %v1006, 0
  %1017 = vmatprep.subr.bf16.mxu0 0
  %1018 = vmatpush1.bf16.msra.mxu0 %v1005
  %1019 = vmatprep.subr.bf16.mxu0 0
  %1020 = vmatpush1.bf16.msra.mxu0 %v1015
  %1021 = vmatprep.subr.bf16.mxu0 0
  %1022 = vmatpush1.bf16.msra.mxu0 0
  %1023 = vmatprep.subr.bf16.mxu0 0
  %1024 = vmatpush1.bf16.msra.mxu0 0
  %1025 = vmatprep.subr.bf16.mxu0 0
  %1026 = vmatpush1.bf16.msra.mxu0 0
  %1027 = vmatprep.subr.bf16.mxu0 0
  %1028 = vmatpush1.bf16.msra.mxu0 0
  %1029 = vmatprep.subr.bf16.mxu0 0
  %1030 = vmatpush1.bf16.msra.mxu0 0
  %1031 = vmatprep.subr.bf16.mxu0 0
  %1032 = vmatpush1.bf16.msra.mxu0 0
  %1033 = vmatprep.subr.bf16.mxu0 0
  %1034 = vmatpush1.bf16.msra.mxu0 0
  %1035 = vmatprep.subr.bf16.mxu0 0
  %1036 = vmatpush1.bf16.msra.mxu0 0
  %1037 = vmatprep.subr.bf16.mxu0 0
  %1038 = vmatpush1.bf16.msra.mxu0 0
  %1039 = vmatprep.subr.bf16.mxu0 0
  %1040 = vmatpush1.bf16.msra.mxu0 0
  %1041 = vmatprep.subr.bf16.mxu0 0
  %1042 = vmatpush1.bf16.msra.mxu0 0
  %1043 = vmatprep.subr.bf16.mxu0 0
  %1044 = vmatpush1.bf16.msra.mxu0 0
  %1045 = vmatprep.subr.bf16.mxu0 0
  %1046 = vmatpush1.bf16.msra.mxu0 0
  %1047 = vmatprep.subr.bf16.mxu0 0
  %1048 = vmatpush1.bf16.msra.mxu0 0
  %1049 = vmatprep.mubr.bf16.mxu0 0
  %1050 = vmatmul.mubr.bf16.gmra.mrb[0].mxu0 %v1008
  %v1051 = vpop.f32.mrb[0].mxu0
  %v1052 = vadd.f32 0.0, %v1051
  %v1053 = vpop.f32.mrb[0].mxu0
  %v1054 = vpop.f32.mrb[0].mxu0
  %v1055 = vadd.f32 0.0, %v1054
  %v1056 = vpop.f32.mrb[0].mxu0
  %1057 = vmatprep.mubr.bf16.mxu0 0
  %1058 = vmatmul.mubr.bf16.gmra.mrb[0].mxu0 %v1011
  %v1059 = vpop.f32.mrb[0].mxu0
  %v1060 = vadd.f32 0.0, %v1059
  %v1061 = vpop.f32.mrb[0].mxu0
  %v1062 = vpop.f32.mrb[0].mxu0
  %v1063 = vpop.f32.mrb[0].mxu0
  %1064 = vdwg.mxu0
  %v1065 = vpack.c.bf16 %v1055, %v1052
  %v1066 = vpack.c.bf16 %v1060, %v1060
  %v1067 = vld [vmem:[%s1 + $0x170] sm:$0xf]
  %v1068 = vld [vmem:[%s1 + $0x174] sm:$0xf]
  %v1069 = vld [vmem:[%s1 + $0x158] sm:$0xf]
  %v1070 = vld [vmem:[%s1 + $0x15c] sm:$0xf]
  %v1073 = vunpack.c.l.b16 %v1069
  %v1074 = vunpack.c.l.b16 %v1070
  %v1075 = vpack.c.b16 %v1074, %v1073
  %1077 = vrot.lane.b32.xlu0 %v708, 112
  %v1078 = vpop.permute.xlu0 %1077
  %v1081 = vsel %vm644, %v1075, 0
  %1083 = vmatprep.subr.bf16.mxu0 0
  %1084 = vmatpush1.bf16.xpose.msra.mxu0 %v1081
  %1085 = vmatprep.subr.bf16.mxu0 0
  %1086 = vmatpush1.bf16.xpose.msra.mxu0 0
  %1087 = vmatprep.subr.bf16.mxu0 0
  %1088 = vmatpush1.bf16.xpose.msra.mxu0 0
  %1089 = vmatprep.subr.bf16.mxu0 0
  %1090 = vmatpush1.bf16.xpose.msra.mxu0 0
  %1091 = vmatprep.subr.bf16.mxu0 0
  %1092 = vmatpush1.bf16.xpose.msra.mxu0 0
  %1093 = vmatprep.subr.bf16.mxu0 0
  %1094 = vmatpush1.bf16.xpose.msra.mxu0 0
  %1095 = vmatprep.subr.bf16.mxu0 0
  %1096 = vmatpush1.bf16.xpose.msra.mxu0 0
  %1097 = vmatprep.subr.bf16.mxu0 0
  %1098 = vmatpush1.bf16.xpose.msra.mxu0 0
  %1099 = vmatprep.subr.bf16.mxu0 0
  %1100 = vmatpush1.bf16.xpose.msra.mxu0 0
  %1101 = vmatprep.subr.bf16.mxu0 0
  %1102 = vmatpush1.bf16.xpose.msra.mxu0 0
  %1103 = vmatprep.subr.bf16.mxu0 0
  %1104 = vmatpush1.bf16.xpose.msra.mxu0 0
  %1105 = vmatprep.subr.bf16.mxu0 0
  %1106 = vmatpush1.bf16.xpose.msra.mxu0 0
  %1107 = vmatprep.subr.bf16.mxu0 0
  %1108 = vmatpush1.bf16.xpose.msra.mxu0 0
  %1109 = vmatprep.subr.bf16.mxu0 0
  %1110 = vmatpush1.bf16.xpose.msra.mxu0 0
  %1111 = vmatprep.subr.bf16.mxu0 0
  %1112 = vmatpush1.bf16.xpose.msra.mxu0 0
  %1113 = vmatprep.subr.bf16.mxu0 0
  %1114 = vmatpush1.bf16.xpose.msra.mxu0 0
  %1115 = vmatprep.mubr.bf16.mxu0 0
  %1116 = vmatmul.mubr.bf16.gmra.mrb[0].mxu0 %v715
  %v1117 = vpop.f32.mrb[0].mxu0
  %v1118 = vadd.f32 %v1078, %v1117
  %v1119 = vpop.f32.mrb[0].mxu0
  %v1120 = vpop.f32.mrb[0].mxu0
  %v1121 = vadd.f32 %v1078, %v1120
  %v1122 = vpop.f32.mrb[0].mxu0
  %1123 = vmatprep.mubr.bf16.mxu0 0
  %1124 = vmatmul.mubr.bf16.gmra.mrb[0].mxu0 %v718
  %v1125 = vpop.f32.mrb[0].mxu0
  %v1126 = vadd.f32 %v1078, %v1125
  %v1127 = vpop.f32.mrb[0].mxu0
  %v1128 = vpop.f32.mrb[0].mxu0
  %v1129 = vpop.f32.mrb[0].mxu0
  %1130 = vdwg.mxu0
  %v1131 = vld [vmem:[%s1 + $0x160] sm:$0xf]
  %v1132 = vld [vmem:[%s1 + $0x164] sm:$0xf]
  %v1135 = vunpack.c.l.b16 %v1131
  %v1136 = vunpack.c.l.b16 %v1132
  %v1137 = vpack.c.b16 %v1136, %v1135
  %1139 = vrot.lane.b32.xlu0 %v777, 112
  %v1140 = vpop.permute.xlu0 %1139
  %v1143 = vsel %vm644, %v1137, 0
  %1145 = vmatprep.subr.bf16.mxu0 0
  %1146 = vmatpush1.bf16.xpose.msra.mxu0 %v1143
  %1147 = vmatprep.subr.bf16.mxu0 0
  %1148 = vmatpush1.bf16.xpose.msra.mxu0 0
  %1149 = vmatprep.subr.bf16.mxu0 0
  %1150 = vmatpush1.bf16.xpose.msra.mxu0 0
  %1151 = vmatprep.subr.bf16.mxu0 0
  %1152 = vmatpush1.bf16.xpose.msra.mxu0 0
  %1153 = vmatprep.subr.bf16.mxu0 0
  %1154 = vmatpush1.bf16.xpose.msra.mxu0 0
  %1155 = vmatprep.subr.bf16.mxu0 0
  %1156 = vmatpush1.bf16.xpose.msra.mxu0 0
  %1157 = vmatprep.subr.bf16.mxu0 0
  %1158 = vmatpush1.bf16.xpose.msra.mxu0 0
  %1159 = vmatprep.subr.bf16.mxu0 0
  %1160 = vmatpush1.bf16.xpose.msra.mxu0 0
  %1161 = vmatprep.subr.bf16.mxu0 0
  %1162 = vmatpush1.bf16.xpose.msra.mxu0 0
  %1163 = vmatprep.subr.bf16.mxu0 0
  %1164 = vmatpush1.bf16.xpose.msra.mxu0 0
  %1165 = vmatprep.subr.bf16.mxu0 0
  %1166 = vmatpush1.bf16.xpose.msra.mxu0 0
  %1167 = vmatprep.subr.bf16.mxu0 0
  %1168 = vmatpush1.bf16.xpose.msra.mxu0 0
  %1169 = vmatprep.subr.bf16.mxu0 0
  %1170 = vmatpush1.bf16.xpose.msra.mxu0 0
  %1171 = vmatprep.subr.bf16.mxu0 0
  %1172 = vmatpush1.bf16.xpose.msra.mxu0 0
  %1173 = vmatprep.subr.bf16.mxu0 0
  %1174 = vmatpush1.bf16.xpose.msra.mxu0 0
  %1175 = vmatprep.subr.bf16.mxu0 0
  %1176 = vmatpush1.bf16.xpose.msra.mxu0 0
  %1177 = vmatprep.mubr.bf16.mxu0 0
  %1178 = vmatmul.mubr.bf16.gmra.mrb[0].mxu0 %v715
  %v1179 = vpop.f32.mrb[0].mxu0
  %v1180 = vadd.f32 %v1140, %v1179
  %v1181 = vpop.f32.mrb[0].mxu0
  %v1182 = vpop.f32.mrb[0].mxu0
  %v1183 = vadd.f32 %v1140, %v1182
  %v1184 = vpop.f32.mrb[0].mxu0
  %1185 = vmatprep.mubr.bf16.mxu0 0
  %1186 = vmatmul.mubr.bf16.gmra.mrb[0].mxu0 %v718
  %v1187 = vpop.f32.mrb[0].mxu0
  %v1188 = vadd.f32 %v1140, %v1187
  %v1189 = vpop.f32.mrb[0].mxu0
  %v1190 = vpop.f32.mrb[0].mxu0
  %v1191 = vpop.f32.mrb[0].mxu0
  %1192 = vdwg.mxu0
  %v1193 = vld [vmem:[%s1 + $0x168] sm:$0xf]
  %v1194 = vld [vmem:[%s1 + $0x16c] sm:$0xf]
  %v1197 = vunpack.c.l.b16 %v1193
  %v1198 = vunpack.c.l.b16 %v1194
  %v1199 = vpack.c.b16 %v1198, %v1197
  %1201 = vrot.lane.b32.xlu0 %v840, 112
  %v1202 = vpop.permute.xlu0 %1201
  %v1205 = vsel %vm644, %v1199, 0
  %1207 = vmatprep.subr.bf16.mxu0 0
  %1208 = vmatpush1.bf16.xpose.msra.mxu0 %v1205
  %1209 = vmatprep.subr.bf16.mxu0 0
  %1210 = vmatpush1.bf16.xpose.msra.mxu0 0
  %1211 = vmatprep.subr.bf16.mxu0 0
  %1212 = vmatpush1.bf16.xpose.msra.mxu0 0
  %1213 = vmatprep.subr.bf16.mxu0 0
  %1214 = vmatpush1.bf16.xpose.msra.mxu0 0
  %1215 = vmatprep.subr.bf16.mxu0 0
  %1216 = vmatpush1.bf16.xpose.msra.mxu0 0
  %1217 = vmatprep.subr.bf16.mxu0 0
  %1218 = vmatpush1.bf16.xpose.msra.mxu0 0
  %1219 = vmatprep.subr.bf16.mxu0 0
  %1220 = vmatpush1.bf16.xpose.msra.mxu0 0
  %1221 = vmatprep.subr.bf16.mxu0 0
  %1222 = vmatpush1.bf16.xpose.msra.mxu0 0
  %1223 = vmatprep.subr.bf16.mxu0 0
  %1224 = vmatpush1.bf16.xpose.msra.mxu0 0
  %1225 = vmatprep.subr.bf16.mxu0 0
  %1226 = vmatpush1.bf16.xpose.msra.mxu0 0
  %1227 = vmatprep.subr.bf16.mxu0 0
  %1228 = vmatpush1.bf16.xpose.msra.mxu0 0
  %1229 = vmatprep.subr.bf16.mxu0 0
  %1230 = vmatpush1.bf16.xpose.msra.mxu0 0
  %1231 = vmatprep.subr.bf16.mxu0 0
  %1232 = vmatpush1.bf16.xpose.msra.mxu0 0
  %1233 = vmatprep.subr.bf16.mxu0 0
  %1234 = vmatpush1.bf16.xpose.msra.mxu0 0
  %1235 = vmatprep.subr.bf16.mxu0 0
  %1236 = vmatpush1.bf16.xpose.msra.mxu0 0
  %1237 = vmatprep.subr.bf16.mxu0 0
  %1238 = vmatpush1.bf16.xpose.msra.mxu0 0
  %1239 = vmatprep.mubr.bf16.mxu0 0
  %1240 = vmatmul.mubr.bf16.gmra.mrb[0].mxu0 %v715
  %v1241 = vpop.f32.mrb[0].mxu0
  %v1242 = vadd.f32 %v1202, %v1241
  %v1243 = vpop.f32.mrb[0].mxu0
  %v1244 = vpop.f32.mrb[0].mxu0
  %v1245 = vadd.f32 %v1202, %v1244
  %v1246 = vpop.f32.mrb[0].mxu0
  %1247 = vmatprep.mubr.bf16.mxu0 0
  %1248 = vmatmul.mubr.bf16.gmra.mrb[0].mxu0 %v718
  %v1249 = vpop.f32.mrb[0].mxu0
  %v1250 = vadd.f32 %v1202, %v1249
  %v1251 = vpop.f32.mrb[0].mxu0
  %v1252 = vpop.f32.mrb[0].mxu0
  %v1253 = vpop.f32.mrb[0].mxu0
  %1254 = vdwg.mxu0
  %v1255 = vpack.c.bf16 %v1121, %v1118
  %v1256 = vpack.c.bf16 %v1126, %v1126
  %v1257 = vpack.c.bf16 %v1183, %v1180
  %v1258 = vpack.c.bf16 %v1188, %v1188
  %v1260 = vsel %vm901, %v1255, 0
  %v1263 = vsel %vm901, %v1256, 0
  %v1266 = vsel %vm901, %v1257, 0
  %v1269 = vsel %vm901, %v1258, 0
  %1271 = vmatprep.subr.bf16.mxu0 0
  %1272 = vmatpush1.bf16.xpose.msra.mxu0 %v1266
  %1273 = vmatprep.subr.bf16.mxu0 0
  %1274 = vmatpush1.bf16.xpose.msra.mxu0 %v1269
  %1275 = vmatprep.subr.bf16.mxu0 0
  %1276 = vmatpush1.bf16.xpose.msra.mxu0 0
  %1277 = vmatprep.subr.bf16.mxu0 0
  %1278 = vmatpush1.bf16.xpose.msra.mxu0 0
  %1279 = vmatprep.subr.bf16.mxu0 0
  %1280 = vmatpush1.bf16.xpose.msra.mxu0 0
  %1281 = vmatprep.subr.bf16.mxu0 0
  %1282 = vmatpush1.bf16.xpose.msra.mxu0 0
  %1283 = vmatprep.subr.bf16.mxu0 0
  %1284 = vmatpush1.bf16.xpose.msra.mxu0 0
  %1285 = vmatprep.subr.bf16.mxu0 0
  %1286 = vmatpush1.bf16.xpose.msra.mxu0 0
  %1287 = vmatprep.subr.bf16.mxu0 0
  %1288 = vmatpush1.bf16.xpose.msra.mxu0 0
  %1289 = vmatprep.subr.bf16.mxu0 0
  %1290 = vmatpush1.bf16.xpose.msra.mxu0 0
  %1291 = vmatprep.subr.bf16.mxu0 0
  %1292 = vmatpush1.bf16.xpose.msra.mxu0 0
  %1293 = vmatprep.subr.bf16.mxu0 0
  %1294 = vmatpush1.bf16.xpose.msra.mxu0 0
  %1295 = vmatprep.subr.bf16.mxu0 0
  %1296 = vmatpush1.bf16.xpose.msra.mxu0 0
  %1297 = vmatprep.subr.bf16.mxu0 0
  %1298 = vmatpush1.bf16.xpose.msra.mxu0 0
  %1299 = vmatprep.subr.bf16.mxu0 0
  %1300 = vmatpush1.bf16.xpose.msra.mxu0 0
  %1301 = vmatprep.subr.bf16.mxu0 0
  %1302 = vmatpush1.bf16.xpose.msra.mxu0 0
  %1303 = vmatprep.mubr.bf16.mxu0 0
  %1304 = vmatmul.mubr.bf16.gmra.mrb[0].mxu0 %v1260
  %v1305 = vpop.f32.mrb[0].mxu0
  %v1306 = vadd.f32 0.0, %v1305
  %v1307 = vpop.f32.mrb[0].mxu0
  %v1308 = vpop.f32.mrb[0].mxu0
  %v1309 = vadd.f32 0.0, %v1308
  %v1310 = vpop.f32.mrb[0].mxu0
  %1311 = vmatprep.mubr.bf16.mxu0 0
  %1312 = vmatmul.mubr.bf16.gmra.mrb[0].mxu0 %v1263
  %v1313 = vpop.f32.mrb[0].mxu0
  %v1314 = vadd.f32 0.0, %v1313
  %v1315 = vpop.f32.mrb[0].mxu0
  %v1316 = vpop.f32.mrb[0].mxu0
  %v1317 = vpop.f32.mrb[0].mxu0
  %1318 = vdwg.mxu0
  %v1319 = vmul.f32 %v1306, 0.25
  %v1320 = vmul.f32 %v1309, 0.25
  %v1321 = vmul.f32 %v1314, 0.25
  %v1322 = vsel %vm639, %v1319, -1e+30
  %v1323 = vsel %vm640, %v1320, -1e+30
  %v1324 = vsel %vm641, %v1321, -1e+30
  %v1325 = vsel %vm968, %v1322, -inf
  %1326 = vmax.xlane.f32.xlu0 %v1325
  %v1327 = vpop.xlane.xlu0 %1326
  %v1328 = vsel %vm968, %v1323, -inf
  %1329 = vmax.xlane.f32.xlu0 %v1328
  %v1330 = vpop.xlane.xlu0 %1329
  %v1331 = vsel %vm975, %v1324, -inf
  %1332 = vmax.xlane.f32.xlu0 %v1331
  %v1333 = vpop.xlane.xlu0 %1332
  %v1334 = vsub.f32 %v1322, %v1327
  %v1335 = vsub.f32 %v1323, %v1330
  %v1336 = vsub.f32 %v1324, %v1333
  %v1337 = vmul.f32 %v1334, 1.442695
  %v1338 = vpow.pop %v1337
  %v1339 = vmul.f32 %v1335, 1.442695
  %v1340 = vpow.pop %v1339
  %v1341 = vmul.f32 %v1336, 1.442695
  %v1342 = vpow.pop %v1341
  %v1343 = vsel %vm968, %v1338, 0.0
  %1344 = vadd.xlane.f32.xlu0 %v1343
  %v1345 = vpop.xlane.xlu0 %1344
  %v1346 = vsel %vm968, %v1340, 0.0
  %1347 = vadd.xlane.f32.xlu0 %v1346
  %v1348 = vpop.xlane.xlu0 %1347
  %v1349 = vsel %vm975, %v1342, 0.0
  %1350 = vadd.xlane.f32.xlu0 %v1349
  %v1351 = vpop.xlane.xlu0 %1350
  %v1352 = vrcp.pop %v1345
  %v1353 = vmul.f32 %v1338, %v1352
  %v1354 = vrcp.pop %v1348
  %v1355 = vmul.f32 %v1340, %v1354
  %v1356 = vrcp.pop %v1351
  %v1357 = vmul.f32 %v1342, %v1356
  %v1358 = vpack.c.bf16 %v1355, %v1353
  %v1359 = vpack.c.bf16 %v1357, %v1357
  %v1360 = vpack.c.bf16 %v1245, %v1242
  %v1361 = vpack.c.bf16 %v1250, %v1250
  %v1363 = vsel %vm968, %v1358, 0
  %v1366 = vsel %vm968, %v1359, 0
  %v1369 = vsel %vm1013, %v1361, 0
  %1371 = vmatprep.subr.bf16.mxu0 0
  %1372 = vmatpush1.bf16.msra.mxu0 %v1360
  %1373 = vmatprep.subr.bf16.mxu0 0
  %1374 = vmatpush1.bf16.msra.mxu0 %v1369
  %1375 = vmatprep.subr.bf16.mxu0 0
  %1376 = vmatpush1.bf16.msra.mxu0 0
  %1377 = vmatprep.subr.bf16.mxu0 0
  %1378 = vmatpush1.bf16.msra.mxu0 0
  %1379 = vmatprep.subr.bf16.mxu0 0
  %1380 = vmatpush1.bf16.msra.mxu0 0
  %1381 = vmatprep.subr.bf16.mxu0 0
  %1382 = vmatpush1.bf16.msra.mxu0 0
  %1383 = vmatprep.subr.bf16.mxu0 0
  %1384 = vmatpush1.bf16.msra.mxu0 0
  %1385 = vmatprep.subr.bf16.mxu0 0
  %1386 = vmatpush1.bf16.msra.mxu0 0
  %1387 = vmatprep.subr.bf16.mxu0 0
  %1388 = vmatpush1.bf16.msra.mxu0 0
  %1389 = vmatprep.subr.bf16.mxu0 0
  %1390 = vmatpush1.bf16.msra.mxu0 0
  %1391 = vmatprep.subr.bf16.mxu0 0
  %1392 = vmatpush1.bf16.msra.mxu0 0
  %1393 = vmatprep.subr.bf16.mxu0 0
  %1394 = vmatpush1.bf16.msra.mxu0 0
  %1395 = vmatprep.subr.bf16.mxu0 0
  %1396 = vmatpush1.bf16.msra.mxu0 0
  %1397 = vmatprep.subr.bf16.mxu0 0
  %1398 = vmatpush1.bf16.msra.mxu0 0
  %1399 = vmatprep.subr.bf16.mxu0 0
  %1400 = vmatpush1.bf16.msra.mxu0 0
  %1401 = vmatprep.subr.bf16.mxu0 0
  %1402 = vmatpush1.bf16.msra.mxu0 0
  %1403 = vmatprep.mubr.bf16.mxu0 0
  %1404 = vmatmul.mubr.bf16.gmra.mrb[0].mxu0 %v1363
  %v1405 = vpop.f32.mrb[0].mxu0
  %v1406 = vadd.f32 0.0, %v1405
  %v1407 = vpop.f32.mrb[0].mxu0
  %v1408 = vpop.f32.mrb[0].mxu0
  %v1409 = vadd.f32 0.0, %v1408
  %v1410 = vpop.f32.mrb[0].mxu0
  %1411 = vmatprep.mubr.bf16.mxu0 0
  %1412 = vmatmul.mubr.bf16.gmra.mrb[0].mxu0 %v1366
  %v1413 = vpop.f32.mrb[0].mxu0
  %v1414 = vadd.f32 0.0, %v1413
  %v1415 = vpop.f32.mrb[0].mxu0
  %v1416 = vpop.f32.mrb[0].mxu0
  %v1417 = vpop.f32.mrb[0].mxu0
  %1418 = vdwg.mxu0
  %v1419 = vpack.c.bf16 %v1409, %v1406
  %v1420 = vpack.c.bf16 %v1414, %v1414
  %v1421 = vld [vmem:[%s1 + $0x178] sm:$0xf]
  %v1422 = vld [vmem:[%s1 + $0x17c] sm:$0xf]
  %v1425 = vunpack.c.l.b16 %v1421
  %v1426 = vunpack.c.l.b16 %v1422
  %v1427 = vpack.c.b16 %v1426, %v1425
  %v1430 = vsel %vm901, %v1419, 0
  %v1433 = vsel %vm901, %v1420, 0
  %1435 = vmatprep.subr.bf16.mxu0 0
  %1436 = vmatpush1.bf16.msra.mxu0 %v1427
  %1437 = vmatprep.subr.bf16.mxu0 0
  %1438 = vmatpush1.bf16.msra.mxu0 0
  %1439 = vmatprep.subr.bf16.mxu0 0
  %1440 = vmatpush1.bf16.msra.mxu0 0
  %1441 = vmatprep.subr.bf16.mxu0 0
  %1442 = vmatpush1.bf16.msra.mxu0 0
  %1443 = vmatprep.subr.bf16.mxu0 0
  %1444 = vmatpush1.bf16.msra.mxu0 0
  %1445 = vmatprep.subr.bf16.mxu0 0
  %1446 = vmatpush1.bf16.msra.mxu0 0
  %1447 = vmatprep.subr.bf16.mxu0 0
  %1448 = vmatpush1.bf16.msra.mxu0 0
  %1449 = vmatprep.subr.bf16.mxu0 0
  %1450 = vmatpush1.bf16.msra.mxu0 0
  %1451 = vmatprep.subr.bf16.mxu0 0
  %1452 = vmatpush1.bf16.msra.mxu0 0
  %1453 = vmatprep.subr.bf16.mxu0 0
  %1454 = vmatpush1.bf16.msra.mxu0 0
  %1455 = vmatprep.subr.bf16.mxu0 0
  %1456 = vmatpush1.bf16.msra.mxu0 0
  %1457 = vmatprep.subr.bf16.mxu0 0
  %1458 = vmatpush1.bf16.msra.mxu0 0
  %1459 = vmatprep.subr.bf16.mxu0 0
  %1460 = vmatpush1.bf16.msra.mxu0 0
  %1461 = vmatprep.subr.bf16.mxu0 0
  %1462 = vmatpush1.bf16.msra.mxu0 0
  %1463 = vmatprep.subr.bf16.mxu0 0
  %1464 = vmatpush1.bf16.msra.mxu0 0
  %1465 = vmatprep.subr.bf16.mxu0 0
  %1466 = vmatpush1.bf16.msra.mxu0 0
  %1467 = vmatprep.mubr.bf16.mxu0 0
  %1468 = vmatmul.mubr.bf16.gmra.mrb[0].mxu0 %v1430
  %v1469 = vpop.f32.mrb[0].mxu0
  %v1470 = vadd.f32 0.0, %v1469
  %v1471 = vpop.f32.mrb[0].mxu0
  %v1472 = vpop.f32.mrb[0].mxu0
  %v1473 = vadd.f32 0.0, %v1472
  %v1474 = vpop.f32.mrb[0].mxu0
  %1475 = vmatprep.mubr.bf16.mxu0 0
  %1476 = vmatmul.mubr.bf16.gmra.mrb[0].mxu0 %v1433
  %v1477 = vpop.f32.mrb[0].mxu0
  %v1478 = vadd.f32 0.0, %v1477
  %v1479 = vpop.f32.mrb[0].mxu0
  %v1480 = vpop.f32.mrb[0].mxu0
  %v1481 = vpop.f32.mrb[0].mxu0
  %1482 = vdwg.mxu0
  %v1485 = vunpack.c.l.b16 %v1067
  %v1486 = vunpack.c.l.b16 %v1068
  %v1487 = vpack.c.b16 %v1486, %v1485
  %v1490 = vsel %vm901, %v1065, 0
  %v1493 = vsel %vm901, %v1066, 0
  %1495 = vmatprep.subr.bf16.mxu0 0
  %1496 = vmatpush1.bf16.msra.mxu0 %v1487
  %1497 = vmatprep.subr.bf16.mxu0 0
  %1498 = vmatpush1.bf16.msra.mxu0 0
  %1499 = vmatprep.subr.bf16.mxu0 0
  %1500 = vmatpush1.bf16.msra.mxu0 0
  %1501 = vmatprep.subr.bf16.mxu0 0
  %1502 = vmatpush1.bf16.msra.mxu0 0
  %1503 = vmatprep.subr.bf16.mxu0 0
  %1504 = vmatpush1.bf16.msra.mxu0 0
  %1505 = vmatprep.subr.bf16.mxu0 0
  %1506 = vmatpush1.bf16.msra.mxu0 0
  %1507 = vmatprep.subr.bf16.mxu0 0
  %1508 = vmatpush1.bf16.msra.mxu0 0
  %1509 = vmatprep.subr.bf16.mxu0 0
  %1510 = vmatpush1.bf16.msra.mxu0 0
  %1511 = vmatprep.subr.bf16.mxu0 0
  %1512 = vmatpush1.bf16.msra.mxu0 0
  %1513 = vmatprep.subr.bf16.mxu0 0
  %1514 = vmatpush1.bf16.msra.mxu0 0
  %1515 = vmatprep.subr.bf16.mxu0 0
  %1516 = vmatpush1.bf16.msra.mxu0 0
  %1517 = vmatprep.subr.bf16.mxu0 0
  %1518 = vmatpush1.bf16.msra.mxu0 0
  %1519 = vmatprep.subr.bf16.mxu0 0
  %1520 = vmatpush1.bf16.msra.mxu0 0
  %1521 = vmatprep.subr.bf16.mxu0 0
  %1522 = vmatpush1.bf16.msra.mxu0 0
  %1523 = vmatprep.subr.bf16.mxu0 0
  %1524 = vmatpush1.bf16.msra.mxu0 0
  %1525 = vmatprep.subr.bf16.mxu0 0
  %1526 = vmatpush1.bf16.msra.mxu0 0
  %1527 = vmatprep.mubr.bf16.mxu0 0
  %1528 = vmatmul.mubr.bf16.gmra.mrb[0].mxu0 %v1490
  %v1529 = vpop.f32.mrb[0].mxu0
  %v1530 = vadd.f32 %v1470, %v1529
  %v1531 = vpop.f32.mrb[0].mxu0
  %v1532 = vpop.f32.mrb[0].mxu0
  %v1533 = vadd.f32 %v1473, %v1532
  %v1534 = vpop.f32.mrb[0].mxu0
  %1535 = vmatprep.mubr.bf16.mxu0 0
  %1536 = vmatmul.mubr.bf16.gmra.mrb[0].mxu0 %v1493
  %v1537 = vpop.f32.mrb[0].mxu0
  %v1538 = vadd.f32 %v1478, %v1537
  %v1539 = vpop.f32.mrb[0].mxu0
  %v1540 = vpop.f32.mrb[0].mxu0
  %v1541 = vpop.f32.mrb[0].mxu0
  %1542 = vdwg.mxu0
  %v1543 = vadd.f32 %v522, %v1530
  %v1544 = vadd.f32 %v525, %v1533
  %v1545 = vadd.f32 %v530, %v1538
  %v1546 = vld [vmem:[%s2 + $0x19] sm:$0x1]
  %v1547 = vlaneseq
  %v1548 = vshrl.u32 %v1547, 7
  %v1549 = vsub.s32 0, %v1548
  %v1550 = vrot.slane %v1546, %v1549
  %v1551 = vadd.f32 %v1543, %v1550
  %v1552 = vadd.f32 %v1544, %v1550
  %v1553 = vadd.f32 %v1545, %v1550
  %v1554 = vld [vmem:[%s2 + $0x1a] sm:$0x1]
  %v1555 = vld [vmem:[%s2 + $0x1b] sm:$0x1]
  %v1556 = vsel %vm644, %v1551, 0.0
  %1557 = vadd.xlane.f32.xlu0 %v1556
  %v1558 = vpop.xlane.xlu0 %1557
  %v1559 = vsel %vm644, %v1552, 0.0
  %1560 = vadd.xlane.f32.xlu0 %v1559
  %v1561 = vpop.xlane.xlu0 %1560
  %v1562 = vsel %vm651, %v1553, 0.0
  %1563 = vadd.xlane.f32.xlu0 %v1562
  %v1564 = vpop.xlane.xlu0 %1563
  %v1565 = vmul.f32 %v1558, %v655
  %v1566 = vmul.f32 %v1561, %v655
  %v1567 = vmul.f32 %v1564, %v655
  %v1568 = vsub.f32 %v1551, %v1565
  %v1569 = vsub.f32 %v1552, %v1566
  %v1570 = vsub.f32 %v1553, %v1567
  %v1571 = vmul.f32 %v1568, %v1568
  %v1572 = vmul.f32 %v1569, %v1569
  %v1573 = vmul.f32 %v1570, %v1570
  %v1574 = vsel %vm644, %v1571, 0.0
  %1575 = vadd.xlane.f32.xlu0 %v1574
  %v1576 = vpop.xlane.xlu0 %1575
  %v1577 = vsel %vm644, %v1572, 0.0
  %1578 = vadd.xlane.f32.xlu0 %v1577
  %v1579 = vpop.xlane.xlu0 %1578
  %v1580 = vsel %vm651, %v1573, 0.0
  %1581 = vadd.xlane.f32.xlu0 %v1580
  %v1582 = vpop.xlane.xlu0 %1581
  %v1583 = vmul.f32 %v1576, %v655
  %v1584 = vmul.f32 %v1579, %v655
  %v1585 = vmul.f32 %v1582, %v655
  %v1586 = vadd.f32 %v1583, 1e-06
  %v1587 = vadd.f32 %v1584, 1e-06
  %v1588 = vadd.f32 %v1585, 1e-06
  %v1589 = vrsqrt.pop %v1586
  %v1590 = vrsqrt.pop %v1587
  %v1591 = vrsqrt.pop %v1588
  %v1592 = vmul.f32 %v1568, %v1589
  %v1593 = vmul.f32 %v1569, %v1590
  %v1594 = vmul.f32 %v1570, %v1591
  %v1595 = vlaneseq
  %v1596 = vshrl.u32 %v1595, 7
  %v1597 = vsub.s32 0, %v1596
  %v1598 = vrot.slane %v1554, %v1597
  %v1599 = vmul.f32 %v1592, %v1598
  %v1600 = vmul.f32 %v1593, %v1598
  %v1601 = vmul.f32 %v1594, %v1598
  %v1602 = vlaneseq
  %v1603 = vshrl.u32 %v1602, 7
  %v1604 = vsub.s32 0, %v1603
  %v1605 = vrot.slane %v1555, %v1604
  %v1606 = vadd.f32 %v1599, %v1605
  %v1607 = vadd.f32 %v1600, %v1605
  %v1608 = vadd.f32 %v1601, %v1605
  %v1609 = vpack.c.bf16 %v1607, %v1606
  %v1610 = vpack.c.bf16 %v1608, %v1608
  %v1611 = vld [vmem:[%s1 + $0x180] sm:$0xf]
  %v1612 = vld [vmem:[%s1 + $0x184] sm:$0xf]
  %v1613 = vld [vmem:[%s1 + $0x188] sm:$0xf]
  %v1614 = vld [vmem:[%s1 + $0x18c] sm:$0xf]
  %v1615 = vld [vmem:[%s1 + $0x190] sm:$0xf]
  %v1616 = vld [vmem:[%s1 + $0x194] sm:$0xf]
  %v1617 = vld [vmem:[%s1 + $0x198] sm:$0xf]
  %v1618 = vld [vmem:[%s1 + $0x19c] sm:$0xf]
  %v1619 = vld [vmem:[%s1 + $0x1a0] sm:$0xf]
  %v1620 = vld [vmem:[%s1 + $0x1a4] sm:$0xf]
  %v1621 = vld [vmem:[%s1 + $0x1a8] sm:$0xf]
  %v1622 = vld [vmem:[%s1 + $0x1ac] sm:$0xf]
  %v1623 = vld [vmem:[%s1 + $0x1b0] sm:$0xf]
  %v1624 = vld [vmem:[%s1 + $0x1b4] sm:$0xf]
  %v1625 = vld [vmem:[%s1 + $0x1b8] sm:$0xf]
  %v1626 = vld [vmem:[%s1 + $0x1bc] sm:$0xf]
  %v1627 = vld [vmem:[%s2 + $0x1c] sm:$0x1]
  %v1628 = vlaneseq
  %v1629 = vshrl.u32 %v1628, 7
  %v1630 = vsub.s32 0, %v1629
  %v1631 = vrot.slane %v1627, %v1630
  %v1648 = vunpack.c.l.b16 %v1611
  %v1649 = vunpack.c.l.b16 %v1612
  %v1650 = vunpack.c.l.b16 %v1613
  %v1651 = vunpack.c.l.b16 %v1614
  %v1652 = vunpack.c.l.b16 %v1615
  %v1653 = vunpack.c.l.b16 %v1616
  %v1654 = vunpack.c.l.b16 %v1617
  %v1655 = vunpack.c.l.b16 %v1618
  %v1656 = vunpack.c.l.b16 %v1619
  %v1657 = vunpack.c.l.b16 %v1620
  %v1658 = vunpack.c.l.b16 %v1621
  %v1659 = vunpack.c.l.b16 %v1622
  %v1660 = vunpack.c.l.b16 %v1623
  %v1661 = vunpack.c.l.b16 %v1624
  %v1662 = vunpack.c.l.b16 %v1625
  %v1663 = vunpack.c.l.b16 %v1626
  %v1664 = vpack.c.b16 %v1649, %v1648
  %v1665 = vpack.c.b16 %v1651, %v1650
  %v1666 = vpack.c.b16 %v1653, %v1652
  %v1667 = vpack.c.b16 %v1655, %v1654
  %v1668 = vpack.c.b16 %v1657, %v1656
  %v1669 = vpack.c.b16 %v1659, %v1658
  %v1670 = vpack.c.b16 %v1661, %v1660
  %v1671 = vpack.c.b16 %v1663, %v1662
  %v1673 = vsel %vm644, %v1609, 0
  %v1676 = vsel %vm644, %v1610, 0
  %v1679 = vsel %vm644, %v1664, 0
  %v1682 = vsel %vm644, %v1665, 0
  %v1685 = vsel %vm644, %v1666, 0
  %v1688 = vsel %vm644, %v1667, 0
  %v1691 = vsel %vm644, %v1668, 0
  %v1694 = vsel %vm644, %v1669, 0
  %v1697 = vsel %vm644, %v1670, 0
  %v1700 = vsel %vm644, %v1671, 0
  %1702 = vmatprep.subr.bf16.mxu0 0
  %1703 = vmatpush1.bf16.xpose.msra.mxu0 %v1679
  %1704 = vmatprep.subr.bf16.mxu0 0
  %1705 = vmatpush1.bf16.xpose.msra.mxu0 %v1682
  %1706 = vmatprep.subr.bf16.mxu0 0
  %1707 = vmatpush1.bf16.xpose.msra.mxu0 %v1685
  %1708 = vmatprep.subr.bf16.mxu0 0
  %1709 = vmatpush1.bf16.xpose.msra.mxu0 %v1688
  %1710 = vmatprep.subr.bf16.mxu0 0
  %1711 = vmatpush1.bf16.xpose.msra.mxu0 %v1691
  %1712 = vmatprep.subr.bf16.mxu0 0
  %1713 = vmatpush1.bf16.xpose.msra.mxu0 %v1694
  %1714 = vmatprep.subr.bf16.mxu0 0
  %1715 = vmatpush1.bf16.xpose.msra.mxu0 %v1697
  %1716 = vmatprep.subr.bf16.mxu0 0
  %1717 = vmatpush1.bf16.xpose.msra.mxu0 %v1700
  %1718 = vmatprep.subr.bf16.mxu0 0
  %1719 = vmatpush1.bf16.xpose.msra.mxu0 0
  %1720 = vmatprep.subr.bf16.mxu0 0
  %1721 = vmatpush1.bf16.xpose.msra.mxu0 0
  %1722 = vmatprep.subr.bf16.mxu0 0
  %1723 = vmatpush1.bf16.xpose.msra.mxu0 0
  %1724 = vmatprep.subr.bf16.mxu0 0
  %1725 = vmatpush1.bf16.xpose.msra.mxu0 0
  %1726 = vmatprep.subr.bf16.mxu0 0
  %1727 = vmatpush1.bf16.xpose.msra.mxu0 0
  %1728 = vmatprep.subr.bf16.mxu0 0
  %1729 = vmatpush1.bf16.xpose.msra.mxu0 0
  %1730 = vmatprep.subr.bf16.mxu0 0
  %1731 = vmatpush1.bf16.xpose.msra.mxu0 0
  %1732 = vmatprep.subr.bf16.mxu0 0
  %1733 = vmatpush1.bf16.xpose.msra.mxu0 0
  %1734 = vmatprep.mubr.bf16.mxu0 0
  %1735 = vmatmul.mubr.bf16.gmra.mrb[0].mxu0 %v1673
  %v1736 = vpop.f32.mrb[0].mxu0
  %v1737 = vadd.f32 %v1631, %v1736
  %v1738 = vpop.f32.mrb[0].mxu0
  %v1739 = vpop.f32.mrb[0].mxu0
  %v1740 = vadd.f32 %v1631, %v1739
  %v1741 = vpop.f32.mrb[0].mxu0
  %1742 = vmatprep.mubr.bf16.mxu0 0
  %1743 = vmatmul.mubr.bf16.gmra.mrb[0].mxu0 %v1676
  %v1744 = vpop.f32.mrb[0].mxu0
  %v1745 = vadd.f32 %v1631, %v1744
  %v1746 = vpop.f32.mrb[0].mxu0
  %v1747 = vpop.f32.mrb[0].mxu0
  %v1748 = vpop.f32.mrb[0].mxu0
  %1749 = vdwg.mxu0
  %v1750 = vmul.f32 %v1737, 0.5
  %v1751 = vmul.f32 %v1740, 0.5
  %v1752 = vmul.f32 %v1745, 0.5
  %v1753 = vmul.f32 %v1737, 0.70710677
  %v1754 = vmul.f32 %v1740, 0.70710677
  %v1755 = vmul.f32 %v1745, 0.70710677
  %v1756 = vand.u32 2147483647, %v1753
  %v1757 = vand.u32 2147483647, %v1754
  %v1758 = vand.u32 2147483647, %v1755
  %v1759 = vmul.f32 %v1756, 0.3275911
  %v1760 = vmul.f32 %v1757, 0.3275911
  %v1761 = vmul.f32 %v1758, 0.3275911
  %v1762 = vadd.f32 %v1759, 1.0
  %v1763 = vadd.f32 %v1760, 1.0
  %v1764 = vadd.f32 %v1761, 1.0
  %v1765 = vrcp.pop %v1762
  %v1766 = vmul.f32 1.0, %v1765
  %v1767 = vrcp.pop %v1763
  %v1768 = vmul.f32 1.0, %v1767
  %v1769 = vrcp.pop %v1764
  %v1770 = vmul.f32 1.0, %v1769
  %v1771 = vmul.f32 %v1766, 1.0614054
  %v1772 = vmul.f32 %v1768, 1.0614054
  %v1773 = vmul.f32 %v1770, 1.0614054
  %v1774 = vadd.f32 %v1771, -1.4531521
  %v1775 = vadd.f32 %v1772, -1.4531521
  %v1776 = vadd.f32 %v1773, -1.4531521
  %v1777 = vmul.f32 %v1774, %v1766
  %v1778 = vmul.f32 %v1775, %v1768
  %v1779 = vmul.f32 %v1776, %v1770
  %v1780 = vadd.f32 %v1777, 1.4214138
  %v1781 = vadd.f32 %v1778, 1.4214138
  %v1782 = vadd.f32 %v1779, 1.4214138
  %v1783 = vmul.f32 %v1780, %v1766
  %v1784 = vmul.f32 %v1781, %v1768
  %v1785 = vmul.f32 %v1782, %v1770
  %v1786 = vadd.f32 %v1783, -0.28449672
  %v1787 = vadd.f32 %v1784, -0.28449672
  %v1788 = vadd.f32 %v1785, -0.28449672
  %v1789 = vmul.f32 %v1786, %v1766
  %v1790 = vmul.f32 %v1787, %v1768
  %v1791 = vmul.f32 %v1788, %v1770
  %v1792 = vadd.f32 %v1789, 0.2548296
  %v1793 = vadd.f32 %v1790, 0.2548296
  %v1794 = vadd.f32 %v1791, 0.2548296
  %v1795 = vmul.f32 %v1792, %v1766
  %v1796 = vmul.f32 %v1793, %v1768
  %v1797 = vmul.f32 %v1794, %v1770
  %v1798 = vsub.f32 0.0, %v1756
  %v1799 = vsub.f32 0.0, %v1757
  %v1800 = vsub.f32 0.0, %v1758
  %v1801 = vmul.f32 %v1798, %v1756
  %v1802 = vmul.f32 %v1799, %v1757
  %v1803 = vmul.f32 %v1800, %v1758
  %v1804 = vmul.f32 %v1801, 1.442695
  %v1805 = vpow.pop %v1804
  %v1806 = vmul.f32 %v1802, 1.442695
  %v1807 = vpow.pop %v1806
  %v1808 = vmul.f32 %v1803, 1.442695
  %v1809 = vpow.pop %v1808
  %v1810 = vmul.f32 %v1795, %v1805
  %v1811 = vmul.f32 %v1796, %v1807
  %v1812 = vmul.f32 %v1797, %v1809
  %v1813 = vsub.f32 1.0, %v1810
  %v1814 = vsub.f32 1.0, %v1811
  %v1815 = vsub.f32 1.0, %v1812
  %vm1816 = vcmp.lt.f32.partialorder %v1753, 0.0
  %vm1817 = vcmp.lt.f32.partialorder %v1754, 0.0
  %vm1818 = vcmp.lt.f32.partialorder %v1755, 0.0
  %v1819 = vsub.f32 0.0, %v1813
  %v1820 = vsub.f32 0.0, %v1814
  %v1821 = vsub.f32 0.0, %v1815
  %v1822 = vsel %vm1816, %v1819, %v1813
  %v1823 = vsel %vm1817, %v1820, %v1814
  %v1824 = vsel %vm1818, %v1821, %v1815
  %v1825 = vadd.f32 %v1822, 1.0
  %v1826 = vadd.f32 %v1823, 1.0
  %v1827 = vadd.f32 %v1824, 1.0
  %v1828 = vmul.f32 %v1750, %v1825
  %v1829 = vmul.f32 %v1751, %v1826
  %v1830 = vmul.f32 %v1752, %v1827
  %v1831 = vpack.c.bf16 %v1829, %v1828
  %v1832 = vpack.c.bf16 %v1830, %v1830
  %v1833 = vld [vmem:[%s1 + $0x1c0] sm:$0xf]
  %v1834 = vld [vmem:[%s1 + $0x1c4] sm:$0xf]
  %v1835 = vld [vmem:[%s1 + $0x1c8] sm:$0xf]
  %v1836 = vld [vmem:[%s1 + $0x1cc] sm:$0xf]
  %v1837 = vld [vmem:[%s1 + $0x1d0] sm:$0xf]
  %v1838 = vld [vmem:[%s1 + $0x1d4] sm:$0xf]
  %v1839 = vld [vmem:[%s1 + $0x1d8] sm:$0xf]
  %v1840 = vld [vmem:[%s1 + $0x1dc] sm:$0xf]
  %v1841 = vld [vmem:[%s1 + $0x1e0] sm:$0xf]
  %v1842 = vld [vmem:[%s1 + $0x1e4] sm:$0xf]
  %v1843 = vld [vmem:[%s1 + $0x1e8] sm:$0xf]
  %v1844 = vld [vmem:[%s1 + $0x1ec] sm:$0xf]
  %v1845 = vld [vmem:[%s1 + $0x1f0] sm:$0xf]
  %v1846 = vld [vmem:[%s1 + $0x1f4] sm:$0xf]
  %v1847 = vld [vmem:[%s1 + $0x1f8] sm:$0xf]
  %v1848 = vld [vmem:[%s1 + $0x1fc] sm:$0xf]
  %v1865 = vunpack.c.l.b16 %v1833
  %v1866 = vunpack.c.l.b16 %v1834
  %v1867 = vunpack.c.l.b16 %v1835
  %v1868 = vunpack.c.l.b16 %v1836
  %v1869 = vunpack.c.l.b16 %v1837
  %v1870 = vunpack.c.l.b16 %v1838
  %v1871 = vunpack.c.l.b16 %v1839
  %v1872 = vunpack.c.l.b16 %v1840
  %v1873 = vunpack.c.l.b16 %v1841
  %v1874 = vunpack.c.l.b16 %v1842
  %v1875 = vunpack.c.l.b16 %v1843
  %v1876 = vunpack.c.l.b16 %v1844
  %v1877 = vunpack.c.l.b16 %v1845
  %v1878 = vunpack.c.l.b16 %v1846
  %v1879 = vunpack.c.l.b16 %v1847
  %v1880 = vunpack.c.l.b16 %v1848
  %v1881 = vpack.c.b16 %v1866, %v1865
  %v1882 = vpack.c.b16 %v1868, %v1867
  %v1883 = vpack.c.b16 %v1870, %v1869
  %v1884 = vpack.c.b16 %v1872, %v1871
  %v1885 = vpack.c.b16 %v1874, %v1873
  %v1886 = vpack.c.b16 %v1876, %v1875
  %v1887 = vpack.c.b16 %v1878, %v1877
  %v1888 = vpack.c.b16 %v1880, %v1879
  %1897 = vmatprep.subr.bf16.mxu0 0
  %1898 = vmatpush1.bf16.msra.mxu0 %v1881
  %1899 = vmatprep.subr.bf16.mxu0 0
  %1900 = vmatpush1.bf16.msra.mxu0 %v1882
  %1901 = vmatprep.subr.bf16.mxu0 0
  %1902 = vmatpush1.bf16.msra.mxu0 %v1883
  %1903 = vmatprep.subr.bf16.mxu0 0
  %1904 = vmatpush1.bf16.msra.mxu0 %v1884
  %1905 = vmatprep.subr.bf16.mxu0 0
  %1906 = vmatpush1.bf16.msra.mxu0 %v1885
  %1907 = vmatprep.subr.bf16.mxu0 0
  %1908 = vmatpush1.bf16.msra.mxu0 %v1886
  %1909 = vmatprep.subr.bf16.mxu0 0
  %1910 = vmatpush1.bf16.msra.mxu0 %v1887
  %1911 = vmatprep.subr.bf16.mxu0 0
  %1912 = vmatpush1.bf16.msra.mxu0 %v1888
  %1913 = vmatprep.subr.bf16.mxu0 0
  %1914 = vmatpush1.bf16.msra.mxu0 0
  %1915 = vmatprep.subr.bf16.mxu0 0
  %1916 = vmatpush1.bf16.msra.mxu0 0
  %1917 = vmatprep.subr.bf16.mxu0 0
  %1918 = vmatpush1.bf16.msra.mxu0 0
  %1919 = vmatprep.subr.bf16.mxu0 0
  %1920 = vmatpush1.bf16.msra.mxu0 0
  %1921 = vmatprep.subr.bf16.mxu0 0
  %1922 = vmatpush1.bf16.msra.mxu0 0
  %1923 = vmatprep.subr.bf16.mxu0 0
  %1924 = vmatpush1.bf16.msra.mxu0 0
  %1925 = vmatprep.subr.bf16.mxu0 0
  %1926 = vmatpush1.bf16.msra.mxu0 0
  %1927 = vmatprep.subr.bf16.mxu0 0
  %1928 = vmatpush1.bf16.msra.mxu0 0
  %1929 = vmatprep.mubr.bf16.mxu0 0
  %1930 = vmatmul.mubr.bf16.gmra.mrb[0].mxu0 %v1831
  %v1931 = vpop.f32.mrb[0].mxu0
  %v1932 = vadd.f32 0.0, %v1931
  %v1933 = vpop.f32.mrb[0].mxu0
  %v1934 = vpop.f32.mrb[0].mxu0
  %v1935 = vadd.f32 0.0, %v1934
  %v1936 = vpop.f32.mrb[0].mxu0
  %1937 = vmatprep.mubr.bf16.mxu0 0
  %1938 = vmatmul.mubr.bf16.gmra.mrb[0].mxu0 %v1832
  %v1939 = vpop.f32.mrb[0].mxu0
  %v1940 = vadd.f32 0.0, %v1939
  %v1941 = vpop.f32.mrb[0].mxu0
  %v1942 = vpop.f32.mrb[0].mxu0
  %v1943 = vpop.f32.mrb[0].mxu0
  %1944 = vdwg.mxu0
  %v1945 = vadd.f32 %v1551, %v1932
  %v1946 = vadd.f32 %v1552, %v1935
  %v1947 = vadd.f32 %v1553, %v1940
  %v1948 = vld [vmem:[%s2 + $0x1d] sm:$0x1]
  %v1949 = vlaneseq
  %v1950 = vshrl.u32 %v1949, 7
  %v1951 = vsub.s32 0, %v1950
  %v1952 = vrot.slane %v1948, %v1951
  %v1953 = vadd.f32 %v1945, %v1952
  %v1954 = vadd.f32 %v1946, %v1952
  %v1955 = vadd.f32 %v1947, %v1952
  %v1956 = vld [vmem:[%s2 + $0x1e] sm:$0x1]
  %v1957 = vld [vmem:[%s2 + $0x1f] sm:$0x1]
  %v1958 = vsel %vm644, %v1953, 0.0
  %1959 = vadd.xlane.f32.xlu0 %v1958
  %v1960 = vpop.xlane.xlu0 %1959
  %v1961 = vsel %vm644, %v1954, 0.0
  %1962 = vadd.xlane.f32.xlu0 %v1961
  %v1963 = vpop.xlane.xlu0 %1962
  %v1964 = vsel %vm651, %v1955, 0.0
  %1965 = vadd.xlane.f32.xlu0 %v1964
  %v1966 = vpop.xlane.xlu0 %1965
  %v1967 = vmul.f32 %v1960, %v655
  %v1968 = vmul.f32 %v1963, %v655
  %v1969 = vmul.f32 %v1966, %v655
  %v1970 = vsub.f32 %v1953, %v1967
  %v1971 = vsub.f32 %v1954, %v1968
  %v1972 = vsub.f32 %v1955, %v1969
  %v1973 = vmul.f32 %v1970, %v1970
  %v1974 = vmul.f32 %v1971, %v1971
  %v1975 = vmul.f32 %v1972, %v1972
  %v1976 = vsel %vm644, %v1973, 0.0
  %1977 = vadd.xlane.f32.xlu0 %v1976
  %v1978 = vpop.xlane.xlu0 %1977
  %v1979 = vsel %vm644, %v1974, 0.0
  %1980 = vadd.xlane.f32.xlu0 %v1979
  %v1981 = vpop.xlane.xlu0 %1980
  %v1982 = vsel %vm651, %v1975, 0.0
  %1983 = vadd.xlane.f32.xlu0 %v1982
  %v1984 = vpop.xlane.xlu0 %1983
  %v1985 = vmul.f32 %v1978, %v655
  %v1986 = vmul.f32 %v1981, %v655
  %v1987 = vmul.f32 %v1984, %v655
  %v1988 = vadd.f32 %v1985, 1e-06
  %v1989 = vadd.f32 %v1986, 1e-06
  %v1990 = vadd.f32 %v1987, 1e-06
  %v1991 = vrsqrt.pop %v1988
  %v1992 = vrsqrt.pop %v1989
  %v1993 = vrsqrt.pop %v1990
  %v1994 = vmul.f32 %v1970, %v1991
  %v1995 = vmul.f32 %v1971, %v1992
  %v1996 = vmul.f32 %v1972, %v1993
  %v1997 = vlaneseq
  %v1998 = vshrl.u32 %v1997, 7
  %v1999 = vsub.s32 0, %v1998
  %v2000 = vrot.slane %v1956, %v1999
  %v2001 = vmul.f32 %v1994, %v2000
  %v2002 = vmul.f32 %v1995, %v2000
  %v2003 = vmul.f32 %v1996, %v2000
  %v2004 = vlaneseq
  %v2005 = vshrl.u32 %v2004, 7
  %v2006 = vsub.s32 0, %v2005
  %v2007 = vrot.slane %v1957, %v2006
  %v2008 = vadd.f32 %v2001, %v2007
  %v2009 = vadd.f32 %v2002, %v2007
  %v2010 = vadd.f32 %v2003, %v2007
  %v2011 = vpack.c.bf16 %v2009, %v2008
  %v2012 = vpack.c.bf16 %v2010, %v2010
  %v2013 = vld [vmem:[%s1 + $0x200] sm:$0xf]
  %v2014 = vld [vmem:[%s1 + $0x204] sm:$0xf]
  %v2015 = vld [vmem:[%s2 + $0x20] sm:$0x1]
  %v2016 = vlaneseq
  %v2017 = vshrl.u32 %v2016, 7
  %v2018 = vsub.s32 0, %v2017
  %v2019 = vrot.slane %v2015, %v2018
  %v2022 = vunpack.c.l.b16 %v2013
  %v2023 = vunpack.c.l.b16 %v2014
  %v2024 = vpack.c.b16 %v2023, %v2022
  %v2026 = vsel %vm644, %v2011, 0
  %v2029 = vsel %vm644, %v2012, 0
  %v2032 = vsel %vm644, %v2024, 0
  %2034 = vmatprep.subr.bf16.mxu0 0
  %2035 = vmatpush1.bf16.xpose.msra.mxu0 %v2032
  %2036 = vmatprep.subr.bf16.mxu0 0
  %2037 = vmatpush1.bf16.xpose.msra.mxu0 0
  %2038 = vmatprep.subr.bf16.mxu0 0
  %2039 = vmatpush1.bf16.xpose.msra.mxu0 0
  %2040 = vmatprep.subr.bf16.mxu0 0
  %2041 = vmatpush1.bf16.xpose.msra.mxu0 0
  %2042 = vmatprep.subr.bf16.mxu0 0
  %2043 = vmatpush1.bf16.xpose.msra.mxu0 0
  %2044 = vmatprep.subr.bf16.mxu0 0
  %2045 = vmatpush1.bf16.xpose.msra.mxu0 0
  %2046 = vmatprep.subr.bf16.mxu0 0
  %2047 = vmatpush1.bf16.xpose.msra.mxu0 0
  %2048 = vmatprep.subr.bf16.mxu0 0
  %2049 = vmatpush1.bf16.xpose.msra.mxu0 0
  %2050 = vmatprep.subr.bf16.mxu0 0
  %2051 = vmatpush1.bf16.xpose.msra.mxu0 0
  %2052 = vmatprep.subr.bf16.mxu0 0
  %2053 = vmatpush1.bf16.xpose.msra.mxu0 0
  %2054 = vmatprep.subr.bf16.mxu0 0
  %2055 = vmatpush1.bf16.xpose.msra.mxu0 0
  %2056 = vmatprep.subr.bf16.mxu0 0
  %2057 = vmatpush1.bf16.xpose.msra.mxu0 0
  %2058 = vmatprep.subr.bf16.mxu0 0
  %2059 = vmatpush1.bf16.xpose.msra.mxu0 0
  %2060 = vmatprep.subr.bf16.mxu0 0
  %2061 = vmatpush1.bf16.xpose.msra.mxu0 0
  %2062 = vmatprep.subr.bf16.mxu0 0
  %2063 = vmatpush1.bf16.xpose.msra.mxu0 0
  %2064 = vmatprep.subr.bf16.mxu0 0
  %2065 = vmatpush1.bf16.xpose.msra.mxu0 0
  %2066 = vmatprep.mubr.bf16.mxu0 0
  %2067 = vmatmul.mubr.bf16.gmra.mrb[0].mxu0 %v2026
  %v2068 = vpop.f32.mrb[0].mxu0
  %v2069 = vadd.f32 %v2019, %v2068
  %v2070 = vpop.f32.mrb[0].mxu0
  %v2071 = vpop.f32.mrb[0].mxu0
  %v2072 = vadd.f32 %v2019, %v2071
  %v2073 = vpop.f32.mrb[0].mxu0
  %2074 = vmatprep.mubr.bf16.mxu0 0
  %2075 = vmatmul.mubr.bf16.gmra.mrb[0].mxu0 %v2029
  %v2076 = vpop.f32.mrb[0].mxu0
  %v2077 = vadd.f32 %v2019, %v2076
  %v2078 = vpop.f32.mrb[0].mxu0
  %v2079 = vpop.f32.mrb[0].mxu0
  %v2080 = vpop.f32.mrb[0].mxu0
  %2081 = vdwg.mxu0
  %v2082 = vld [vmem:[%s1 + $0x208] sm:$0xf]
  %v2083 = vld [vmem:[%s1 + $0x20c] sm:$0xf]
  %v2084 = vld [vmem:[%s2 + $0x21] sm:$0x1]
  %v2085 = vlaneseq
  %v2086 = vshrl.u32 %v2085, 7
  %v2087 = vsub.s32 0, %v2086
  %v2088 = vrot.slane %v2084, %v2087
  %v2091 = vunpack.c.l.b16 %v2082
  %v2092 = vunpack.c.l.b16 %v2083
  %v2093 = vpack.c.b16 %v2092, %v2091
  %v2095 = vsel %vm644, %v2093, 0
  %2097 = vmatprep.subr.bf16.mxu0 0
  %2098 = vmatpush1.bf16.xpose.msra.mxu0 %v2095
  %2099 = vmatprep.subr.bf16.mxu0 0
  %2100 = vmatpush1.bf16.xpose.msra.mxu0 0
  %2101 = vmatprep.subr.bf16.mxu0 0
  %2102 = vmatpush1.bf16.xpose.msra.mxu0 0
  %2103 = vmatprep.subr.bf16.mxu0 0
  %2104 = vmatpush1.bf16.xpose.msra.mxu0 0
  %2105 = vmatprep.subr.bf16.mxu0 0
  %2106 = vmatpush1.bf16.xpose.msra.mxu0 0
  %2107 = vmatprep.subr.bf16.mxu0 0
  %2108 = vmatpush1.bf16.xpose.msra.mxu0 0
  %2109 = vmatprep.subr.bf16.mxu0 0
  %2110 = vmatpush1.bf16.xpose.msra.mxu0 0
  %2111 = vmatprep.subr.bf16.mxu0 0
  %2112 = vmatpush1.bf16.xpose.msra.mxu0 0
  %2113 = vmatprep.subr.bf16.mxu0 0
  %2114 = vmatpush1.bf16.xpose.msra.mxu0 0
  %2115 = vmatprep.subr.bf16.mxu0 0
  %2116 = vmatpush1.bf16.xpose.msra.mxu0 0
  %2117 = vmatprep.subr.bf16.mxu0 0
  %2118 = vmatpush1.bf16.xpose.msra.mxu0 0
  %2119 = vmatprep.subr.bf16.mxu0 0
  %2120 = vmatpush1.bf16.xpose.msra.mxu0 0
  %2121 = vmatprep.subr.bf16.mxu0 0
  %2122 = vmatpush1.bf16.xpose.msra.mxu0 0
  %2123 = vmatprep.subr.bf16.mxu0 0
  %2124 = vmatpush1.bf16.xpose.msra.mxu0 0
  %2125 = vmatprep.subr.bf16.mxu0 0
  %2126 = vmatpush1.bf16.xpose.msra.mxu0 0
  %2127 = vmatprep.subr.bf16.mxu0 0
  %2128 = vmatpush1.bf16.xpose.msra.mxu0 0
  %2129 = vmatprep.mubr.bf16.mxu0 0
  %2130 = vmatmul.mubr.bf16.gmra.mrb[0].mxu0 %v2026
  %v2131 = vpop.f32.mrb[0].mxu0
  %v2132 = vadd.f32 %v2088, %v2131
  %v2133 = vpop.f32.mrb[0].mxu0
  %v2134 = vpop.f32.mrb[0].mxu0
  %v2135 = vadd.f32 %v2088, %v2134
  %v2136 = vpop.f32.mrb[0].mxu0
  %2137 = vmatprep.mubr.bf16.mxu0 0
  %2138 = vmatmul.mubr.bf16.gmra.mrb[0].mxu0 %v2029
  %v2139 = vpop.f32.mrb[0].mxu0
  %v2140 = vadd.f32 %v2088, %v2139
  %v2141 = vpop.f32.mrb[0].mxu0
  %v2142 = vpop.f32.mrb[0].mxu0
  %v2143 = vpop.f32.mrb[0].mxu0
  %2144 = vdwg.mxu0
  %v2145 = vld [vmem:[%s1 + $0x210] sm:$0xf]
  %v2146 = vld [vmem:[%s1 + $0x214] sm:$0xf]
  %v2147 = vld [vmem:[%s2 + $0x22] sm:$0x1]
  %v2148 = vlaneseq
  %v2149 = vshrl.u32 %v2148, 7
  %v2150 = vsub.s32 0, %v2149
  %v2151 = vrot.slane %v2147, %v2150
  %v2154 = vunpack.c.l.b16 %v2145
  %v2155 = vunpack.c.l.b16 %v2146
  %v2156 = vpack.c.b16 %v2155, %v2154
  %v2158 = vsel %vm644, %v2156, 0
  %2160 = vmatprep.subr.bf16.mxu0 0
  %2161 = vmatpush1.bf16.xpose.msra.mxu0 %v2158
  %2162 = vmatprep.subr.bf16.mxu0 0
  %2163 = vmatpush1.bf16.xpose.msra.mxu0 0
  %2164 = vmatprep.subr.bf16.mxu0 0
  %2165 = vmatpush1.bf16.xpose.msra.mxu0 0
  %2166 = vmatprep.subr.bf16.mxu0 0
  %2167 = vmatpush1.bf16.xpose.msra.mxu0 0
  %2168 = vmatprep.subr.bf16.mxu0 0
  %2169 = vmatpush1.bf16.xpose.msra.mxu0 0
  %2170 = vmatprep.subr.bf16.mxu0 0
  %2171 = vmatpush1.bf16.xpose.msra.mxu0 0
  %2172 = vmatprep.subr.bf16.mxu0 0
  %2173 = vmatpush1.bf16.xpose.msra.mxu0 0
  %2174 = vmatprep.subr.bf16.mxu0 0
  %2175 = vmatpush1.bf16.xpose.msra.mxu0 0
  %2176 = vmatprep.subr.bf16.mxu0 0
  %2177 = vmatpush1.bf16.xpose.msra.mxu0 0
  %2178 = vmatprep.subr.bf16.mxu0 0
  %2179 = vmatpush1.bf16.xpose.msra.mxu0 0
  %2180 = vmatprep.subr.bf16.mxu0 0
  %2181 = vmatpush1.bf16.xpose.msra.mxu0 0
  %2182 = vmatprep.subr.bf16.mxu0 0
  %2183 = vmatpush1.bf16.xpose.msra.mxu0 0
  %2184 = vmatprep.subr.bf16.mxu0 0
  %2185 = vmatpush1.bf16.xpose.msra.mxu0 0
  %2186 = vmatprep.subr.bf16.mxu0 0
  %2187 = vmatpush1.bf16.xpose.msra.mxu0 0
  %2188 = vmatprep.subr.bf16.mxu0 0
  %2189 = vmatpush1.bf16.xpose.msra.mxu0 0
  %2190 = vmatprep.subr.bf16.mxu0 0
  %2191 = vmatpush1.bf16.xpose.msra.mxu0 0
  %2192 = vmatprep.mubr.bf16.mxu0 0
  %2193 = vmatmul.mubr.bf16.gmra.mrb[0].mxu0 %v2026
  %v2194 = vpop.f32.mrb[0].mxu0
  %v2195 = vadd.f32 %v2151, %v2194
  %v2196 = vpop.f32.mrb[0].mxu0
  %v2197 = vpop.f32.mrb[0].mxu0
  %v2198 = vadd.f32 %v2151, %v2197
  %v2199 = vpop.f32.mrb[0].mxu0
  %2200 = vmatprep.mubr.bf16.mxu0 0
  %2201 = vmatmul.mubr.bf16.gmra.mrb[0].mxu0 %v2029
  %v2202 = vpop.f32.mrb[0].mxu0
  %v2203 = vadd.f32 %v2151, %v2202
  %v2204 = vpop.f32.mrb[0].mxu0
  %v2205 = vpop.f32.mrb[0].mxu0
  %v2206 = vpop.f32.mrb[0].mxu0
  %2207 = vdwg.mxu0
  %v2208 = vpack.c.bf16 %v2072, %v2069
  %v2209 = vpack.c.bf16 %v2077, %v2077
  %v2210 = vpack.c.bf16 %v2135, %v2132
  %v2211 = vpack.c.bf16 %v2140, %v2140
  %v2213 = vsel %vm901, %v2208, 0
  %v2216 = vsel %vm901, %v2209, 0
  %v2219 = vsel %vm901, %v2210, 0
  %v2222 = vsel %vm901, %v2211, 0
  %2224 = vmatprep.subr.bf16.mxu0 0
  %2225 = vmatpush1.bf16.xpose.msra.mxu0 %v2219
  %2226 = vmatprep.subr.bf16.mxu0 0
  %2227 = vmatpush1.bf16.xpose.msra.mxu0 %v2222
  %2228 = vmatprep.subr.bf16.mxu0 0
  %2229 = vmatpush1.bf16.xpose.msra.mxu0 0
  %2230 = vmatprep.subr.bf16.mxu0 0
  %2231 = vmatpush1.bf16.xpose.msra.mxu0 0
  %2232 = vmatprep.subr.bf16.mxu0 0
  %2233 = vmatpush1.bf16.xpose.msra.mxu0 0
  %2234 = vmatprep.subr.bf16.mxu0 0
  %2235 = vmatpush1.bf16.xpose.msra.mxu0 0
  %2236 = vmatprep.subr.bf16.mxu0 0
  %2237 = vmatpush1.bf16.xpose.msra.mxu0 0
  %2238 = vmatprep.subr.bf16.mxu0 0
  %2239 = vmatpush1.bf16.xpose.msra.mxu0 0
  %2240 = vmatprep.subr.bf16.mxu0 0
  %2241 = vmatpush1.bf16.xpose.msra.mxu0 0
  %2242 = vmatprep.subr.bf16.mxu0 0
  %2243 = vmatpush1.bf16.xpose.msra.mxu0 0
  %2244 = vmatprep.subr.bf16.mxu0 0
  %2245 = vmatpush1.bf16.xpose.msra.mxu0 0
  %2246 = vmatprep.subr.bf16.mxu0 0
  %2247 = vmatpush1.bf16.xpose.msra.mxu0 0
  %2248 = vmatprep.subr.bf16.mxu0 0
  %2249 = vmatpush1.bf16.xpose.msra.mxu0 0
  %2250 = vmatprep.subr.bf16.mxu0 0
  %2251 = vmatpush1.bf16.xpose.msra.mxu0 0
  %2252 = vmatprep.subr.bf16.mxu0 0
  %2253 = vmatpush1.bf16.xpose.msra.mxu0 0
  %2254 = vmatprep.subr.bf16.mxu0 0
  %2255 = vmatpush1.bf16.xpose.msra.mxu0 0
  %2256 = vmatprep.mubr.bf16.mxu0 0
  %2257 = vmatmul.mubr.bf16.gmra.mrb[0].mxu0 %v2213
  %v2258 = vpop.f32.mrb[0].mxu0
  %v2259 = vadd.f32 0.0, %v2258
  %v2260 = vpop.f32.mrb[0].mxu0
  %v2261 = vpop.f32.mrb[0].mxu0
  %v2262 = vadd.f32 0.0, %v2261
  %v2263 = vpop.f32.mrb[0].mxu0
  %2264 = vmatprep.mubr.bf16.mxu0 0
  %2265 = vmatmul.mubr.bf16.gmra.mrb[0].mxu0 %v2216
  %v2266 = vpop.f32.mrb[0].mxu0
  %v2267 = vadd.f32 0.0, %v2266
  %v2268 = vpop.f32.mrb[0].mxu0
  %v2269 = vpop.f32.mrb[0].mxu0
  %v2270 = vpop.f32.mrb[0].mxu0
  %2271 = vdwg.mxu0
  %v2272 = vmul.f32 %v2259, 0.25
  %v2273 = vmul.f32 %v2262, 0.25
  %v2274 = vmul.f32 %v2267, 0.25
  %v2275 = vsel %vm639, %v2272, -1e+30
  %v2276 = vsel %vm640, %v2273, -1e+30
  %v2277 = vsel %vm641, %v2274, -1e+30
  %v2278 = vsel %vm968, %v2275, -inf
  %2279 = vmax.xlane.f32.xlu0 %v2278
  %v2280 = vpop.xlane.xlu0 %2279
  %v2281 = vsel %vm968, %v2276, -inf
  %2282 = vmax.xlane.f32.xlu0 %v2281
  %v2283 = vpop.xlane.xlu0 %2282
  %v2284 = vsel %vm975, %v2277, -inf
  %2285 = vmax.xlane.f32.xlu0 %v2284
  %v2286 = vpop.xlane.xlu0 %2285
  %v2287 = vsub.f32 %v2275, %v2280
  %v2288 = vsub.f32 %v2276, %v2283
  %v2289 = vsub.f32 %v2277, %v2286
  %v2290 = vmul.f32 %v2287, 1.442695
  %v2291 = vpow.pop %v2290
  %v2292 = vmul.f32 %v2288, 1.442695
  %v2293 = vpow.pop %v2292
  %v2294 = vmul.f32 %v2289, 1.442695
  %v2295 = vpow.pop %v2294
  %v2296 = vsel %vm968, %v2291, 0.0
  %2297 = vadd.xlane.f32.xlu0 %v2296
  %v2298 = vpop.xlane.xlu0 %2297
  %v2299 = vsel %vm968, %v2293, 0.0
  %2300 = vadd.xlane.f32.xlu0 %v2299
  %v2301 = vpop.xlane.xlu0 %2300
  %v2302 = vsel %vm975, %v2295, 0.0
  %2303 = vadd.xlane.f32.xlu0 %v2302
  %v2304 = vpop.xlane.xlu0 %2303
  %v2305 = vrcp.pop %v2298
  %v2306 = vmul.f32 %v2291, %v2305
  %v2307 = vrcp.pop %v2301
  %v2308 = vmul.f32 %v2293, %v2307
  %v2309 = vrcp.pop %v2304
  %v2310 = vmul.f32 %v2295, %v2309
  %v2311 = vpack.c.bf16 %v2308, %v2306
  %v2312 = vpack.c.bf16 %v2310, %v2310
  %v2313 = vpack.c.bf16 %v2198, %v2195
  %v2314 = vpack.c.bf16 %v2203, %v2203
  %v2316 = vsel %vm968, %v2311, 0
  %v2319 = vsel %vm968, %v2312, 0
  %v2322 = vsel %vm1013, %v2314, 0
  %2324 = vmatprep.subr.bf16.mxu0 0
  %2325 = vmatpush1.bf16.msra.mxu0 %v2313
  %2326 = vmatprep.subr.bf16.mxu0 0
  %2327 = vmatpush1.bf16.msra.mxu0 %v2322
  %2328 = vmatprep.subr.bf16.mxu0 0
  %2329 = vmatpush1.bf16.msra.mxu0 0
  %2330 = vmatprep.subr.bf16.mxu0 0
  %2331 = vmatpush1.bf16.msra.mxu0 0
  %2332 = vmatprep.subr.bf16.mxu0 0
  %2333 = vmatpush1.bf16.msra.mxu0 0
  %2334 = vmatprep.subr.bf16.mxu0 0
  %2335 = vmatpush1.bf16.msra.mxu0 0
  %2336 = vmatprep.subr.bf16.mxu0 0
  %2337 = vmatpush1.bf16.msra.mxu0 0
  %2338 = vmatprep.subr.bf16.mxu0 0
  %2339 = vmatpush1.bf16.msra.mxu0 0
  %2340 = vmatprep.subr.bf16.mxu0 0
  %2341 = vmatpush1.bf16.msra.mxu0 0
  %2342 = vmatprep.subr.bf16.mxu0 0
  %2343 = vmatpush1.bf16.msra.mxu0 0
  %2344 = vmatprep.subr.bf16.mxu0 0
  %2345 = vmatpush1.bf16.msra.mxu0 0
  %2346 = vmatprep.subr.bf16.mxu0 0
  %2347 = vmatpush1.bf16.msra.mxu0 0
  %2348 = vmatprep.subr.bf16.mxu0 0
  %2349 = vmatpush1.bf16.msra.mxu0 0
  %2350 = vmatprep.subr.bf16.mxu0 0
  %2351 = vmatpush1.bf16.msra.mxu0 0
  %2352 = vmatprep.subr.bf16.mxu0 0
  %2353 = vmatpush1.bf16.msra.mxu0 0
  %2354 = vmatprep.subr.bf16.mxu0 0
  %2355 = vmatpush1.bf16.msra.mxu0 0
  %2356 = vmatprep.mubr.bf16.mxu0 0
  %2357 = vmatmul.mubr.bf16.gmra.mrb[0].mxu0 %v2316
  %v2358 = vpop.f32.mrb[0].mxu0
  %v2359 = vadd.f32 0.0, %v2358
  %v2360 = vpop.f32.mrb[0].mxu0
  %v2361 = vpop.f32.mrb[0].mxu0
  %v2362 = vadd.f32 0.0, %v2361
  %v2363 = vpop.f32.mrb[0].mxu0
  %2364 = vmatprep.mubr.bf16.mxu0 0
  %2365 = vmatmul.mubr.bf16.gmra.mrb[0].mxu0 %v2319
  %v2366 = vpop.f32.mrb[0].mxu0
  %v2367 = vadd.f32 0.0, %v2366
  %v2368 = vpop.f32.mrb[0].mxu0
  %v2369 = vpop.f32.mrb[0].mxu0
  %v2370 = vpop.f32.mrb[0].mxu0
  %2371 = vdwg.mxu0
  %v2372 = vpack.c.bf16 %v2362, %v2359
  %v2373 = vpack.c.bf16 %v2367, %v2367
  %v2374 = vld [vmem:[%s1 + $0x230] sm:$0xf]
  %v2375 = vld [vmem:[%s1 + $0x234] sm:$0xf]
  %v2376 = vld [vmem:[%s1 + $0x218] sm:$0xf]
  %v2377 = vld [vmem:[%s1 + $0x21c] sm:$0xf]
  %v2380 = vunpack.c.l.b16 %v2376
  %v2381 = vunpack.c.l.b16 %v2377
  %v2382 = vpack.c.b16 %v2381, %v2380
  %2384 = vrot.lane.b32.xlu0 %v2019, 112
  %v2385 = vpop.permute.xlu0 %2384
  %v2388 = vsel %vm644, %v2382, 0
  %2390 = vmatprep.subr.bf16.mxu0 0
  %2391 = vmatpush1.bf16.xpose.msra.mxu0 %v2388
  %2392 = vmatprep.subr.bf16.mxu0 0
  %2393 = vmatpush1.bf16.xpose.msra.mxu0 0
  %2394 = vmatprep.subr.bf16.mxu0 0
  %2395 = vmatpush1.bf16.xpose.msra.mxu0 0
  %2396 = vmatprep.subr.bf16.mxu0 0
  %2397 = vmatpush1.bf16.xpose.msra.mxu0 0
  %2398 = vmatprep.subr.bf16.mxu0 0
  %2399 = vmatpush1.bf16.xpose.msra.mxu0 0
  %2400 = vmatprep.subr.bf16.mxu0 0
  %2401 = vmatpush1.bf16.xpose.msra.mxu0 0
  %2402 = vmatprep.subr.bf16.mxu0 0
  %2403 = vmatpush1.bf16.xpose.msra.mxu0 0
  %2404 = vmatprep.subr.bf16.mxu0 0
  %2405 = vmatpush1.bf16.xpose.msra.mxu0 0
  %2406 = vmatprep.subr.bf16.mxu0 0
  %2407 = vmatpush1.bf16.xpose.msra.mxu0 0
  %2408 = vmatprep.subr.bf16.mxu0 0
  %2409 = vmatpush1.bf16.xpose.msra.mxu0 0
  %2410 = vmatprep.subr.bf16.mxu0 0
  %2411 = vmatpush1.bf16.xpose.msra.mxu0 0
  %2412 = vmatprep.subr.bf16.mxu0 0
  %2413 = vmatpush1.bf16.xpose.msra.mxu0 0
  %2414 = vmatprep.subr.bf16.mxu0 0
  %2415 = vmatpush1.bf16.xpose.msra.mxu0 0
  %2416 = vmatprep.subr.bf16.mxu0 0
  %2417 = vmatpush1.bf16.xpose.msra.mxu0 0
  %2418 = vmatprep.subr.bf16.mxu0 0
  %2419 = vmatpush1.bf16.xpose.msra.mxu0 0
  %2420 = vmatprep.subr.bf16.mxu0 0
  %2421 = vmatpush1.bf16.xpose.msra.mxu0 0
  %2422 = vmatprep.mubr.bf16.mxu0 0
  %2423 = vmatmul.mubr.bf16.gmra.mrb[0].mxu0 %v2026
  %v2424 = vpop.f32.mrb[0].mxu0
  %v2425 = vadd.f32 %v2385, %v2424
  %v2426 = vpop.f32.mrb[0].mxu0
  %v2427 = vpop.f32.mrb[0].mxu0
  %v2428 = vadd.f32 %v2385, %v2427
  %v2429 = vpop.f32.mrb[0].mxu0
  %2430 = vmatprep.mubr.bf16.mxu0 0
  %2431 = vmatmul.mubr.bf16.gmra.mrb[0].mxu0 %v2029
  %v2432 = vpop.f32.mrb[0].mxu0
  %v2433 = vadd.f32 %v2385, %v2432
  %v2434 = vpop.f32.mrb[0].mxu0
  %v2435 = vpop.f32.mrb[0].mxu0
  %v2436 = vpop.f32.mrb[0].mxu0
  %2437 = vdwg.mxu0
  %v2438 = vld [vmem:[%s1 + $0x220] sm:$0xf]
  %v2439 = vld [vmem:[%s1 + $0x224] sm:$0xf]
  %v2442 = vunpack.c.l.b16 %v2438
  %v2443 = vunpack.c.l.b16 %v2439
  %v2444 = vpack.c.b16 %v2443, %v2442
  %2446 = vrot.lane.b32.xlu0 %v2088, 112
  %v2447 = vpop.permute.xlu0 %2446
  %v2450 = vsel %vm644, %v2444, 0
  %2452 = vmatprep.subr.bf16.mxu0 0
  %2453 = vmatpush1.bf16.xpose.msra.mxu0 %v2450
  %2454 = vmatprep.subr.bf16.mxu0 0
  %2455 = vmatpush1.bf16.xpose.msra.mxu0 0
  %2456 = vmatprep.subr.bf16.mxu0 0
  %2457 = vmatpush1.bf16.xpose.msra.mxu0 0
  %2458 = vmatprep.subr.bf16.mxu0 0
  %2459 = vmatpush1.bf16.xpose.msra.mxu0 0
  %2460 = vmatprep.subr.bf16.mxu0 0
  %2461 = vmatpush1.bf16.xpose.msra.mxu0 0
  %2462 = vmatprep.subr.bf16.mxu0 0
  %2463 = vmatpush1.bf16.xpose.msra.mxu0 0
  %2464 = vmatprep.subr.bf16.mxu0 0
  %2465 = vmatpush1.bf16.xpose.msra.mxu0 0
  %2466 = vmatprep.subr.bf16.mxu0 0
  %2467 = vmatpush1.bf16.xpose.msra.mxu0 0
  %2468 = vmatprep.subr.bf16.mxu0 0
  %2469 = vmatpush1.bf16.xpose.msra.mxu0 0
  %2470 = vmatprep.subr.bf16.mxu0 0
  %2471 = vmatpush1.bf16.xpose.msra.mxu0 0
  %2472 = vmatprep.subr.bf16.mxu0 0
  %2473 = vmatpush1.bf16.xpose.msra.mxu0 0
  %2474 = vmatprep.subr.bf16.mxu0 0
  %2475 = vmatpush1.bf16.xpose.msra.mxu0 0
  %2476 = vmatprep.subr.bf16.mxu0 0
  %2477 = vmatpush1.bf16.xpose.msra.mxu0 0
  %2478 = vmatprep.subr.bf16.mxu0 0
  %2479 = vmatpush1.bf16.xpose.msra.mxu0 0
  %2480 = vmatprep.subr.bf16.mxu0 0
  %2481 = vmatpush1.bf16.xpose.msra.mxu0 0
  %2482 = vmatprep.subr.bf16.mxu0 0
  %2483 = vmatpush1.bf16.xpose.msra.mxu0 0
  %2484 = vmatprep.mubr.bf16.mxu0 0
  %2485 = vmatmul.mubr.bf16.gmra.mrb[0].mxu0 %v2026
  %v2486 = vpop.f32.mrb[0].mxu0
  %v2487 = vadd.f32 %v2447, %v2486
  %v2488 = vpop.f32.mrb[0].mxu0
  %v2489 = vpop.f32.mrb[0].mxu0
  %v2490 = vadd.f32 %v2447, %v2489
  %v2491 = vpop.f32.mrb[0].mxu0
  %2492 = vmatprep.mubr.bf16.mxu0 0
  %2493 = vmatmul.mubr.bf16.gmra.mrb[0].mxu0 %v2029
  %v2494 = vpop.f32.mrb[0].mxu0
  %v2495 = vadd.f32 %v2447, %v2494
  %v2496 = vpop.f32.mrb[0].mxu0
  %v2497 = vpop.f32.mrb[0].mxu0
  %v2498 = vpop.f32.mrb[0].mxu0
  %2499 = vdwg.mxu0
  %v2500 = vld [vmem:[%s1 + $0x228] sm:$0xf]
  %v2501 = vld [vmem:[%s1 + $0x22c] sm:$0xf]
  %v2504 = vunpack.c.l.b16 %v2500
  %v2505 = vunpack.c.l.b16 %v2501
  %v2506 = vpack.c.b16 %v2505, %v2504
  %2508 = vrot.lane.b32.xlu0 %v2151, 112
  %v2509 = vpop.permute.xlu0 %2508
  %v2512 = vsel %vm644, %v2506, 0
  %2514 = vmatprep.subr.bf16.mxu0 0
  %2515 = vmatpush1.bf16.xpose.msra.mxu0 %v2512
  %2516 = vmatprep.subr.bf16.mxu0 0
  %2517 = vmatpush1.bf16.xpose.msra.mxu0 0
  %2518 = vmatprep.subr.bf16.mxu0 0
  %2519 = vmatpush1.bf16.xpose.msra.mxu0 0
  %2520 = vmatprep.subr.bf16.mxu0 0
  %2521 = vmatpush1.bf16.xpose.msra.mxu0 0
  %2522 = vmatprep.subr.bf16.mxu0 0
  %2523 = vmatpush1.bf16.xpose.msra.mxu0 0
  %2524 = vmatprep.subr.bf16.mxu0 0
  %2525 = vmatpush1.bf16.xpose.msra.mxu0 0
  %2526 = vmatprep.subr.bf16.mxu0 0
  %2527 = vmatpush1.bf16.xpose.msra.mxu0 0
  %2528 = vmatprep.subr.bf16.mxu0 0
  %2529 = vmatpush1.bf16.xpose.msra.mxu0 0
  %2530 = vmatprep.subr.bf16.mxu0 0
  %2531 = vmatpush1.bf16.xpose.msra.mxu0 0
  %2532 = vmatprep.subr.bf16.mxu0 0
  %2533 = vmatpush1.bf16.xpose.msra.mxu0 0
  %2534 = vmatprep.subr.bf16.mxu0 0
  %2535 = vmatpush1.bf16.xpose.msra.mxu0 0
  %2536 = vmatprep.subr.bf16.mxu0 0
  %2537 = vmatpush1.bf16.xpose.msra.mxu0 0
  %2538 = vmatprep.subr.bf16.mxu0 0
  %2539 = vmatpush1.bf16.xpose.msra.mxu0 0
  %2540 = vmatprep.subr.bf16.mxu0 0
  %2541 = vmatpush1.bf16.xpose.msra.mxu0 0
  %2542 = vmatprep.subr.bf16.mxu0 0
  %2543 = vmatpush1.bf16.xpose.msra.mxu0 0
  %2544 = vmatprep.subr.bf16.mxu0 0
  %2545 = vmatpush1.bf16.xpose.msra.mxu0 0
  %2546 = vmatprep.mubr.bf16.mxu0 0
  %2547 = vmatmul.mubr.bf16.gmra.mrb[0].mxu0 %v2026
  %v2548 = vpop.f32.mrb[0].mxu0
  %v2549 = vadd.f32 %v2509, %v2548
  %v2550 = vpop.f32.mrb[0].mxu0
  %v2551 = vpop.f32.mrb[0].mxu0
  %v2552 = vadd.f32 %v2509, %v2551
  %v2553 = vpop.f32.mrb[0].mxu0
  %2554 = vmatprep.mubr.bf16.mxu0 0
  %2555 = vmatmul.mubr.bf16.gmra.mrb[0].mxu0 %v2029
  %v2556 = vpop.f32.mrb[0].mxu0
  %v2557 = vadd.f32 %v2509, %v2556
  %v2558 = vpop.f32.mrb[0].mxu0
  %v2559 = vpop.f32.mrb[0].mxu0
  %v2560 = vpop.f32.mrb[0].mxu0
  %2561 = vdwg.mxu0
  %v2562 = vpack.c.bf16 %v2428, %v2425
  %v2563 = vpack.c.bf16 %v2433, %v2433
  %v2564 = vpack.c.bf16 %v2490, %v2487
  %v2565 = vpack.c.bf16 %v2495, %v2495
  %v2567 = vsel %vm901, %v2562, 0
  %v2570 = vsel %vm901, %v2563, 0
  %v2573 = vsel %vm901, %v2564, 0
  %v2576 = vsel %vm901, %v2565, 0
  %2578 = vmatprep.subr.bf16.mxu0 0
  %2579 = vmatpush1.bf16.xpose.msra.mxu0 %v2573
  %2580 = vmatprep.subr.bf16.mxu0 0
  %2581 = vmatpush1.bf16.xpose.msra.mxu0 %v2576
  %2582 = vmatprep.subr.bf16.mxu0 0
  %2583 = vmatpush1.bf16.xpose.msra.mxu0 0
  %2584 = vmatprep.subr.bf16.mxu0 0
  %2585 = vmatpush1.bf16.xpose.msra.mxu0 0
  %2586 = vmatprep.subr.bf16.mxu0 0
  %2587 = vmatpush1.bf16.xpose.msra.mxu0 0
  %2588 = vmatprep.subr.bf16.mxu0 0
  %2589 = vmatpush1.bf16.xpose.msra.mxu0 0
  %2590 = vmatprep.subr.bf16.mxu0 0
  %2591 = vmatpush1.bf16.xpose.msra.mxu0 0
  %2592 = vmatprep.subr.bf16.mxu0 0
  %2593 = vmatpush1.bf16.xpose.msra.mxu0 0
  %2594 = vmatprep.subr.bf16.mxu0 0
  %2595 = vmatpush1.bf16.xpose.msra.mxu0 0
  %2596 = vmatprep.subr.bf16.mxu0 0
  %2597 = vmatpush1.bf16.xpose.msra.mxu0 0
  %2598 = vmatprep.subr.bf16.mxu0 0
  %2599 = vmatpush1.bf16.xpose.msra.mxu0 0
  %2600 = vmatprep.subr.bf16.mxu0 0
  %2601 = vmatpush1.bf16.xpose.msra.mxu0 0
  %2602 = vmatprep.subr.bf16.mxu0 0
  %2603 = vmatpush1.bf16.xpose.msra.mxu0 0
  %2604 = vmatprep.subr.bf16.mxu0 0
  %2605 = vmatpush1.bf16.xpose.msra.mxu0 0
  %2606 = vmatprep.subr.bf16.mxu0 0
  %2607 = vmatpush1.bf16.xpose.msra.mxu0 0
  %2608 = vmatprep.subr.bf16.mxu0 0
  %2609 = vmatpush1.bf16.xpose.msra.mxu0 0
  %2610 = vmatprep.mubr.bf16.mxu0 0
  %2611 = vmatmul.mubr.bf16.gmra.mrb[0].mxu0 %v2567
  %v2612 = vpop.f32.mrb[0].mxu0
  %v2613 = vadd.f32 0.0, %v2612
  %v2614 = vpop.f32.mrb[0].mxu0
  %v2615 = vpop.f32.mrb[0].mxu0
  %v2616 = vadd.f32 0.0, %v2615
  %v2617 = vpop.f32.mrb[0].mxu0
  %2618 = vmatprep.mubr.bf16.mxu0 0
  %2619 = vmatmul.mubr.bf16.gmra.mrb[0].mxu0 %v2570
  %v2620 = vpop.f32.mrb[0].mxu0
  %v2621 = vadd.f32 0.0, %v2620
  %v2622 = vpop.f32.mrb[0].mxu0
  %v2623 = vpop.f32.mrb[0].mxu0
  %v2624 = vpop.f32.mrb[0].mxu0
  %2625 = vdwg.mxu0
  %v2626 = vmul.f32 %v2613, 0.25
  %v2627 = vmul.f32 %v2616, 0.25
  %v2628 = vmul.f32 %v2621, 0.25
  %v2629 = vsel %vm639, %v2626, -1e+30
  %v2630 = vsel %vm640, %v2627, -1e+30
  %v2631 = vsel %vm641, %v2628, -1e+30
  %v2632 = vsel %vm968, %v2629, -inf
  %2633 = vmax.xlane.f32.xlu0 %v2632
  %v2634 = vpop.xlane.xlu0 %2633
  %v2635 = vsel %vm968, %v2630, -inf
  %2636 = vmax.xlane.f32.xlu0 %v2635
  %v2637 = vpop.xlane.xlu0 %2636
  %v2638 = vsel %vm975, %v2631, -inf
  %2639 = vmax.xlane.f32.xlu0 %v2638
  %v2640 = vpop.xlane.xlu0 %2639
  %v2641 = vsub.f32 %v2629, %v2634
  %v2642 = vsub.f32 %v2630, %v2637
  %v2643 = vsub.f32 %v2631, %v2640
  %v2644 = vmul.f32 %v2641, 1.442695
  %v2645 = vpow.pop %v2644
  %v2646 = vmul.f32 %v2642, 1.442695
  %v2647 = vpow.pop %v2646
  %v2648 = vmul.f32 %v2643, 1.442695
  %v2649 = vpow.pop %v2648
  %v2650 = vsel %vm968, %v2645, 0.0
  %2651 = vadd.xlane.f32.xlu0 %v2650
  %v2652 = vpop.xlane.xlu0 %2651
  %v2653 = vsel %vm968, %v2647, 0.0
  %2654 = vadd.xlane.f32.xlu0 %v2653
  %v2655 = vpop.xlane.xlu0 %2654
  %v2656 = vsel %vm975, %v2649, 0.0
  %2657 = vadd.xlane.f32.xlu0 %v2656
  %v2658 = vpop.xlane.xlu0 %2657
  %v2659 = vrcp.pop %v2652
  %v2660 = vmul.f32 %v2645, %v2659
  %v2661 = vrcp.pop %v2655
  %v2662 = vmul.f32 %v2647, %v2661
  %v2663 = vrcp.pop %v2658
  %v2664 = vmul.f32 %v2649, %v2663
  %v2665 = vpack.c.bf16 %v2662, %v2660
  %v2666 = vpack.c.bf16 %v2664, %v2664
  %v2667 = vpack.c.bf16 %v2552, %v2549
  %v2668 = vpack.c.bf16 %v2557, %v2557
  %v2670 = vsel %vm968, %v2665, 0
  %v2673 = vsel %vm968, %v2666, 0
  %v2676 = vsel %vm1013, %v2668, 0
  %2678 = vmatprep.subr.bf16.mxu0 0
  %2679 = vmatpush1.bf16.msra.mxu0 %v2667
  %2680 = vmatprep.subr.bf16.mxu0 0
  %2681 = vmatpush1.bf16.msra.mxu0 %v2676
  %2682 = vmatprep.subr.bf16.mxu0 0
  %2683 = vmatpush1.bf16.msra.mxu0 0
  %2684 = vmatprep.subr.bf16.mxu0 0
  %2685 = vmatpush1.bf16.msra.mxu0 0
  %2686 = vmatprep.subr.bf16.mxu0 0
  %2687 = vmatpush1.bf16.msra.mxu0 0
  %2688 = vmatprep.subr.bf16.mxu0 0
  %2689 = vmatpush1.bf16.msra.mxu0 0
  %2690 = vmatprep.subr.bf16.mxu0 0
  %2691 = vmatpush1.bf16.msra.mxu0 0
  %2692 = vmatprep.subr.bf16.mxu0 0
  %2693 = vmatpush1.bf16.msra.mxu0 0
  %2694 = vmatprep.subr.bf16.mxu0 0
  %2695 = vmatpush1.bf16.msra.mxu0 0
  %2696 = vmatprep.subr.bf16.mxu0 0
  %2697 = vmatpush1.bf16.msra.mxu0 0
  %2698 = vmatprep.subr.bf16.mxu0 0
  %2699 = vmatpush1.bf16.msra.mxu0 0
  %2700 = vmatprep.subr.bf16.mxu0 0
  %2701 = vmatpush1.bf16.msra.mxu0 0
  %2702 = vmatprep.subr.bf16.mxu0 0
  %2703 = vmatpush1.bf16.msra.mxu0 0
  %2704 = vmatprep.subr.bf16.mxu0 0
  %2705 = vmatpush1.bf16.msra.mxu0 0
  %2706 = vmatprep.subr.bf16.mxu0 0
  %2707 = vmatpush1.bf16.msra.mxu0 0
  %2708 = vmatprep.subr.bf16.mxu0 0
  %2709 = vmatpush1.bf16.msra.mxu0 0
  %2710 = vmatprep.mubr.bf16.mxu0 0
  %2711 = vmatmul.mubr.bf16.gmra.mrb[0].mxu0 %v2670
  %v2712 = vpop.f32.mrb[0].mxu0
  %v2713 = vadd.f32 0.0, %v2712
  %v2714 = vpop.f32.mrb[0].mxu0
  %v2715 = vpop.f32.mrb[0].mxu0
  %v2716 = vadd.f32 0.0, %v2715
  %v2717 = vpop.f32.mrb[0].mxu0
  %2718 = vmatprep.mubr.bf16.mxu0 0
  %2719 = vmatmul.mubr.bf16.gmra.mrb[0].mxu0 %v2673
  %v2720 = vpop.f32.mrb[0].mxu0
  %v2721 = vadd.f32 0.0, %v2720
  %v2722 = vpop.f32.mrb[0].mxu0
  %v2723 = vpop.f32.mrb[0].mxu0
  %v2724 = vpop.f32.mrb[0].mxu0
  %2725 = vdwg.mxu0
  %v2726 = vpack.c.bf16 %v2716, %v2713
  %v2727 = vpack.c.bf16 %v2721, %v2721
  %v2728 = vld [vmem:[%s1 + $0x238] sm:$0xf]
  %v2729 = vld [vmem:[%s1 + $0x23c] sm:$0xf]
  %v2732 = vunpack.c.l.b16 %v2728
  %v2733 = vunpack.c.l.b16 %v2729
  %v2734 = vpack.c.b16 %v2733, %v2732
  %v2737 = vsel %vm901, %v2726, 0
  %v2740 = vsel %vm901, %v2727, 0
  %2742 = vmatprep.subr.bf16.mxu0 0
  %2743 = vmatpush1.bf16.msra.mxu0 %v2734
  %2744 = vmatprep.subr.bf16.mxu0 0
  %2745 = vmatpush1.bf16.msra.mxu0 0
  %2746 = vmatprep.subr.bf16.mxu0 0
  %2747 = vmatpush1.bf16.msra.mxu0 0
  %2748 = vmatprep.subr.bf16.mxu0 0
  %2749 = vmatpush1.bf16.msra.mxu0 0
  %2750 = vmatprep.subr.bf16.mxu0 0
  %2751 = vmatpush1.bf16.msra.mxu0 0
  %2752 = vmatprep.subr.bf16.mxu0 0
  %2753 = vmatpush1.bf16.msra.mxu0 0
  %2754 = vmatprep.subr.bf16.mxu0 0
  %2755 = vmatpush1.bf16.msra.mxu0 0
  %2756 = vmatprep.subr.bf16.mxu0 0
  %2757 = vmatpush1.bf16.msra.mxu0 0
  %2758 = vmatprep.subr.bf16.mxu0 0
  %2759 = vmatpush1.bf16.msra.mxu0 0
  %2760 = vmatprep.subr.bf16.mxu0 0
  %2761 = vmatpush1.bf16.msra.mxu0 0
  %2762 = vmatprep.subr.bf16.mxu0 0
  %2763 = vmatpush1.bf16.msra.mxu0 0
  %2764 = vmatprep.subr.bf16.mxu0 0
  %2765 = vmatpush1.bf16.msra.mxu0 0
  %2766 = vmatprep.subr.bf16.mxu0 0
  %2767 = vmatpush1.bf16.msra.mxu0 0
  %2768 = vmatprep.subr.bf16.mxu0 0
  %2769 = vmatpush1.bf16.msra.mxu0 0
  %2770 = vmatprep.subr.bf16.mxu0 0
  %2771 = vmatpush1.bf16.msra.mxu0 0
  %2772 = vmatprep.subr.bf16.mxu0 0
  %2773 = vmatpush1.bf16.msra.mxu0 0
  %2774 = vmatprep.mubr.bf16.mxu0 0
  %2775 = vmatmul.mubr.bf16.gmra.mrb[0].mxu0 %v2737
  %v2776 = vpop.f32.mrb[0].mxu0
  %v2777 = vadd.f32 0.0, %v2776
  %v2778 = vpop.f32.mrb[0].mxu0
  %v2779 = vpop.f32.mrb[0].mxu0
  %v2780 = vadd.f32 0.0, %v2779
  %v2781 = vpop.f32.mrb[0].mxu0
  %2782 = vmatprep.mubr.bf16.mxu0 0
  %2783 = vmatmul.mubr.bf16.gmra.mrb[0].mxu0 %v2740
  %v2784 = vpop.f32.mrb[0].mxu0
  %v2785 = vadd.f32 0.0, %v2784
  %v2786 = vpop.f32.mrb[0].mxu0
  %v2787 = vpop.f32.mrb[0].mxu0
  %v2788 = vpop.f32.mrb[0].mxu0
  %2789 = vdwg.mxu0
  %v2792 = vunpack.c.l.b16 %v2374
  %v2793 = vunpack.c.l.b16 %v2375
  %v2794 = vpack.c.b16 %v2793, %v2792
  %v2797 = vsel %vm901, %v2372, 0
  %v2800 = vsel %vm901, %v2373, 0
  %2802 = vmatprep.subr.bf16.mxu0 0
  %2803 = vmatpush1.bf16.msra.mxu0 %v2794
  %2804 = vmatprep.subr.bf16.mxu0 0
  %2805 = vmatpush1.bf16.msra.mxu0 0
  %2806 = vmatprep.subr.bf16.mxu0 0
  %2807 = vmatpush1.bf16.msra.mxu0 0
  %2808 = vmatprep.subr.bf16.mxu0 0
  %2809 = vmatpush1.bf16.msra.mxu0 0
  %2810 = vmatprep.subr.bf16.mxu0 0
  %2811 = vmatpush1.bf16.msra.mxu0 0
  %2812 = vmatprep.subr.bf16.mxu0 0
  %2813 = vmatpush1.bf16.msra.mxu0 0
  %2814 = vmatprep.subr.bf16.mxu0 0
  %2815 = vmatpush1.bf16.msra.mxu0 0
  %2816 = vmatprep.subr.bf16.mxu0 0
  %2817 = vmatpush1.bf16.msra.mxu0 0
  %2818 = vmatprep.subr.bf16.mxu0 0
  %2819 = vmatpush1.bf16.msra.mxu0 0
  %2820 = vmatprep.subr.bf16.mxu0 0
  %2821 = vmatpush1.bf16.msra.mxu0 0
  %2822 = vmatprep.subr.bf16.mxu0 0
  %2823 = vmatpush1.bf16.msra.mxu0 0
  %2824 = vmatprep.subr.bf16.mxu0 0
  %2825 = vmatpush1.bf16.msra.mxu0 0
  %2826 = vmatprep.subr.bf16.mxu0 0
  %2827 = vmatpush1.bf16.msra.mxu0 0
  %2828 = vmatprep.subr.bf16.mxu0 0
  %2829 = vmatpush1.bf16.msra.mxu0 0
  %2830 = vmatprep.subr.bf16.mxu0 0
  %2831 = vmatpush1.bf16.msra.mxu0 0
  %2832 = vmatprep.subr.bf16.mxu0 0
  %2833 = vmatpush1.bf16.msra.mxu0 0
  %2834 = vmatprep.mubr.bf16.mxu0 0
  %2835 = vmatmul.mubr.bf16.gmra.mrb[0].mxu0 %v2797
  %v2836 = vpop.f32.mrb[0].mxu0
  %v2837 = vadd.f32 %v2777, %v2836
  %v2838 = vpop.f32.mrb[0].mxu0
  %v2839 = vpop.f32.mrb[0].mxu0
  %v2840 = vadd.f32 %v2780, %v2839
  %v2841 = vpop.f32.mrb[0].mxu0
  %2842 = vmatprep.mubr.bf16.mxu0 0
  %2843 = vmatmul.mubr.bf16.gmra.mrb[0].mxu0 %v2800
  %v2844 = vpop.f32.mrb[0].mxu0
  %v2845 = vadd.f32 %v2785, %v2844
  %v2846 = vpop.f32.mrb[0].mxu0
  %v2847 = vpop.f32.mrb[0].mxu0
  %v2848 = vpop.f32.mrb[0].mxu0
  %2849 = vdwg.mxu0
  %v2850 = vadd.f32 %v1953, %v2837
  %v2851 = vadd.f32 %v1954, %v2840
  %v2852 = vadd.f32 %v1955, %v2845
  %v2853 = vld [vmem:[%s2 + $0x23] sm:$0x1]
  %v2854 = vlaneseq
  %v2855 = vshrl.u32 %v2854, 7
  %v2856 = vsub.s32 0, %v2855
  %v2857 = vrot.slane %v2853, %v2856
  %v2858 = vadd.f32 %v2850, %v2857
  %v2859 = vadd.f32 %v2851, %v2857
  %v2860 = vadd.f32 %v2852, %v2857
  %v2861 = vld [vmem:[%s2 + $0x24] sm:$0x1]
  %v2862 = vld [vmem:[%s2 + $0x25] sm:$0x1]
  %v2863 = vsel %vm644, %v2858, 0.0
  %2864 = vadd.xlane.f32.xlu0 %v2863
  %v2865 = vpop.xlane.xlu0 %2864
  %v2866 = vsel %vm644, %v2859, 0.0
  %2867 = vadd.xlane.f32.xlu0 %v2866
  %v2868 = vpop.xlane.xlu0 %2867
  %v2869 = vsel %vm651, %v2860, 0.0
  %2870 = vadd.xlane.f32.xlu0 %v2869
  %v2871 = vpop.xlane.xlu0 %2870
  %v2872 = vmul.f32 %v2865, %v655
  %v2873 = vmul.f32 %v2868, %v655
  %v2874 = vmul.f32 %v2871, %v655
  %v2875 = vsub.f32 %v2858, %v2872
  %v2876 = vsub.f32 %v2859, %v2873
  %v2877 = vsub.f32 %v2860, %v2874
  %v2878 = vmul.f32 %v2875, %v2875
  %v2879 = vmul.f32 %v2876, %v2876
  %v2880 = vmul.f32 %v2877, %v2877
  %v2881 = vsel %vm644, %v2878, 0.0
  %2882 = vadd.xlane.f32.xlu0 %v2881
  %v2883 = vpop.xlane.xlu0 %2882
  %v2884 = vsel %vm644, %v2879, 0.0
  %2885 = vadd.xlane.f32.xlu0 %v2884
  %v2886 = vpop.xlane.xlu0 %2885
  %v2887 = vsel %vm651, %v2880, 0.0
  %2888 = vadd.xlane.f32.xlu0 %v2887
  %v2889 = vpop.xlane.xlu0 %2888
  %v2890 = vmul.f32 %v2883, %v655
  %v2891 = vmul.f32 %v2886, %v655
  %v2892 = vmul.f32 %v2889, %v655
  %v2893 = vadd.f32 %v2890, 1e-06
  %v2894 = vadd.f32 %v2891, 1e-06
  %v2895 = vadd.f32 %v2892, 1e-06
  %v2896 = vrsqrt.pop %v2893
  %v2897 = vrsqrt.pop %v2894
  %v2898 = vrsqrt.pop %v2895
  %v2899 = vmul.f32 %v2875, %v2896
  %v2900 = vmul.f32 %v2876, %v2897
  %v2901 = vmul.f32 %v2877, %v2898
  %v2902 = vlaneseq
  %v2903 = vshrl.u32 %v2902, 7
  %v2904 = vsub.s32 0, %v2903
  %v2905 = vrot.slane %v2861, %v2904
  %v2906 = vmul.f32 %v2899, %v2905
  %v2907 = vmul.f32 %v2900, %v2905
  %v2908 = vmul.f32 %v2901, %v2905
  %v2909 = vlaneseq
  %v2910 = vshrl.u32 %v2909, 7
  %v2911 = vsub.s32 0, %v2910
  %v2912 = vrot.slane %v2862, %v2911
  %v2913 = vadd.f32 %v2906, %v2912
  %v2914 = vadd.f32 %v2907, %v2912
  %v2915 = vadd.f32 %v2908, %v2912
  %v2916 = vpack.c.bf16 %v2914, %v2913
  %v2917 = vpack.c.bf16 %v2915, %v2915
  %v2918 = vld [vmem:[%s1 + $0x240] sm:$0xf]
  %v2919 = vld [vmem:[%s1 + $0x244] sm:$0xf]
  %v2920 = vld [vmem:[%s1 + $0x248] sm:$0xf]
  %v2921 = vld [vmem:[%s1 + $0x24c] sm:$0xf]
  %v2922 = vld [vmem:[%s1 + $0x250] sm:$0xf]
  %v2923 = vld [vmem:[%s1 + $0x254] sm:$0xf]
  %v2924 = vld [vmem:[%s1 + $0x258] sm:$0xf]
  %v2925 = vld [vmem:[%s1 + $0x25c] sm:$0xf]
  %v2926 = vld [vmem:[%s1 + $0x260] sm:$0xf]
  %v2927 = vld [vmem:[%s1 + $0x264] sm:$0xf]
  %v2928 = vld [vmem:[%s1 + $0x268] sm:$0xf]
  %v2929 = vld [vmem:[%s1 + $0x26c] sm:$0xf]
  %v2930 = vld [vmem:[%s1 + $0x270] sm:$0xf]
  %v2931 = vld [vmem:[%s1 + $0x274] sm:$0xf]
  %v2932 = vld [vmem:[%s1 + $0x278] sm:$0xf]
  %v2933 = vld [vmem:[%s1 + $0x27c] sm:$0xf]
  %v2934 = vld [vmem:[%s2 + $0x26] sm:$0x1]
  %v2935 = vlaneseq
  %v2936 = vshrl.u32 %v2935, 7
  %v2937 = vsub.s32 0, %v2936
  %v2938 = vrot.slane %v2934, %v2937
  %v2955 = vunpack.c.l.b16 %v2918
  %v2956 = vunpack.c.l.b16 %v2919
  %v2957 = vunpack.c.l.b16 %v2920
  %v2958 = vunpack.c.l.b16 %v2921
  %v2959 = vunpack.c.l.b16 %v2922
  %v2960 = vunpack.c.l.b16 %v2923
  %v2961 = vunpack.c.l.b16 %v2924
  %v2962 = vunpack.c.l.b16 %v2925
  %v2963 = vunpack.c.l.b16 %v2926
  %v2964 = vunpack.c.l.b16 %v2927
  %v2965 = vunpack.c.l.b16 %v2928
  %v2966 = vunpack.c.l.b16 %v2929
  %v2967 = vunpack.c.l.b16 %v2930
  %v2968 = vunpack.c.l.b16 %v2931
  %v2969 = vunpack.c.l.b16 %v2932
  %v2970 = vunpack.c.l.b16 %v2933
  %v2971 = vpack.c.b16 %v2956, %v2955
  %v2972 = vpack.c.b16 %v2958, %v2957
  %v2973 = vpack.c.b16 %v2960, %v2959
  %v2974 = vpack.c.b16 %v2962, %v2961
  %v2975 = vpack.c.b16 %v2964, %v2963
  %v2976 = vpack.c.b16 %v2966, %v2965
  %v2977 = vpack.c.b16 %v2968, %v2967
  %v2978 = vpack.c.b16 %v2970, %v2969
  %v2980 = vsel %vm644, %v2916, 0
  %v2983 = vsel %vm644, %v2917, 0
  %v2986 = vsel %vm644, %v2971, 0
  %v2989 = vsel %vm644, %v2972, 0
  %v2992 = vsel %vm644, %v2973, 0
  %v2995 = vsel %vm644, %v2974, 0
  %v2998 = vsel %vm644, %v2975, 0
  %v3001 = vsel %vm644, %v2976, 0
  %v3004 = vsel %vm644, %v2977, 0
  %v3007 = vsel %vm644, %v2978, 0
  %3009 = vmatprep.subr.bf16.mxu0 0
  %3010 = vmatpush1.bf16.xpose.msra.mxu0 %v2986
  %3011 = vmatprep.subr.bf16.mxu0 0
  %3012 = vmatpush1.bf16.xpose.msra.mxu0 %v2989
  %3013 = vmatprep.subr.bf16.mxu0 0
  %3014 = vmatpush1.bf16.xpose.msra.mxu0 %v2992
  %3015 = vmatprep.subr.bf16.mxu0 0
  %3016 = vmatpush1.bf16.xpose.msra.mxu0 %v2995
  %3017 = vmatprep.subr.bf16.mxu0 0
  %3018 = vmatpush1.bf16.xpose.msra.mxu0 %v2998
  %3019 = vmatprep.subr.bf16.mxu0 0
  %3020 = vmatpush1.bf16.xpose.msra.mxu0 %v3001
  %3021 = vmatprep.subr.bf16.mxu0 0
  %3022 = vmatpush1.bf16.xpose.msra.mxu0 %v3004
  %3023 = vmatprep.subr.bf16.mxu0 0
  %3024 = vmatpush1.bf16.xpose.msra.mxu0 %v3007
  %3025 = vmatprep.subr.bf16.mxu0 0
  %3026 = vmatpush1.bf16.xpose.msra.mxu0 0
  %3027 = vmatprep.subr.bf16.mxu0 0
  %3028 = vmatpush1.bf16.xpose.msra.mxu0 0
  %3029 = vmatprep.subr.bf16.mxu0 0
  %3030 = vmatpush1.bf16.xpose.msra.mxu0 0
  %3031 = vmatprep.subr.bf16.mxu0 0
  %3032 = vmatpush1.bf16.xpose.msra.mxu0 0
  %3033 = vmatprep.subr.bf16.mxu0 0
  %3034 = vmatpush1.bf16.xpose.msra.mxu0 0
  %3035 = vmatprep.subr.bf16.mxu0 0
  %3036 = vmatpush1.bf16.xpose.msra.mxu0 0
  %3037 = vmatprep.subr.bf16.mxu0 0
  %3038 = vmatpush1.bf16.xpose.msra.mxu0 0
  %3039 = vmatprep.subr.bf16.mxu0 0
  %3040 = vmatpush1.bf16.xpose.msra.mxu0 0
  %3041 = vmatprep.mubr.bf16.mxu0 0
  %3042 = vmatmul.mubr.bf16.gmra.mrb[0].mxu0 %v2980
  %v3043 = vpop.f32.mrb[0].mxu0
  %v3044 = vadd.f32 %v2938, %v3043
  %v3045 = vpop.f32.mrb[0].mxu0
  %v3046 = vpop.f32.mrb[0].mxu0
  %v3047 = vadd.f32 %v2938, %v3046
  %v3048 = vpop.f32.mrb[0].mxu0
  %3049 = vmatprep.mubr.bf16.mxu0 0
  %3050 = vmatmul.mubr.bf16.gmra.mrb[0].mxu0 %v2983
  %v3051 = vpop.f32.mrb[0].mxu0
  %v3052 = vadd.f32 %v2938, %v3051
  %v3053 = vpop.f32.mrb[0].mxu0
  %v3054 = vpop.f32.mrb[0].mxu0
  %v3055 = vpop.f32.mrb[0].mxu0
  %3056 = vdwg.mxu0
  %v3057 = vmul.f32 %v3044, 0.5
  %v3058 = vmul.f32 %v3047, 0.5
  %v3059 = vmul.f32 %v3052, 0.5
  %v3060 = vmul.f32 %v3044, 0.70710677
  %v3061 = vmul.f32 %v3047, 0.70710677
  %v3062 = vmul.f32 %v3052, 0.70710677
  %v3063 = vand.u32 2147483647, %v3060
  %v3064 = vand.u32 2147483647, %v3061
  %v3065 = vand.u32 2147483647, %v3062
  %v3066 = vmul.f32 %v3063, 0.3275911
  %v3067 = vmul.f32 %v3064, 0.3275911
  %v3068 = vmul.f32 %v3065, 0.3275911
  %v3069 = vadd.f32 %v3066, 1.0
  %v3070 = vadd.f32 %v3067, 1.0
  %v3071 = vadd.f32 %v3068, 1.0
  %v3072 = vrcp.pop %v3069
  %v3073 = vmul.f32 1.0, %v3072
  %v3074 = vrcp.pop %v3070
  %v3075 = vmul.f32 1.0, %v3074
  %v3076 = vrcp.pop %v3071
  %v3077 = vmul.f32 1.0, %v3076
  %v3078 = vmul.f32 %v3073, 1.0614054
  %v3079 = vmul.f32 %v3075, 1.0614054
  %v3080 = vmul.f32 %v3077, 1.0614054
  %v3081 = vadd.f32 %v3078, -1.4531521
  %v3082 = vadd.f32 %v3079, -1.4531521
  %v3083 = vadd.f32 %v3080, -1.4531521
  %v3084 = vmul.f32 %v3081, %v3073
  %v3085 = vmul.f32 %v3082, %v3075
  %v3086 = vmul.f32 %v3083, %v3077
  %v3087 = vadd.f32 %v3084, 1.4214138
  %v3088 = vadd.f32 %v3085, 1.4214138
  %v3089 = vadd.f32 %v3086, 1.4214138
  %v3090 = vmul.f32 %v3087, %v3073
  %v3091 = vmul.f32 %v3088, %v3075
  %v3092 = vmul.f32 %v3089, %v3077
  %v3093 = vadd.f32 %v3090, -0.28449672
  %v3094 = vadd.f32 %v3091, -0.28449672
  %v3095 = vadd.f32 %v3092, -0.28449672
  %v3096 = vmul.f32 %v3093, %v3073
  %v3097 = vmul.f32 %v3094, %v3075
  %v3098 = vmul.f32 %v3095, %v3077
  %v3099 = vadd.f32 %v3096, 0.2548296
  %v3100 = vadd.f32 %v3097, 0.2548296
  %v3101 = vadd.f32 %v3098, 0.2548296
  %v3102 = vmul.f32 %v3099, %v3073
  %v3103 = vmul.f32 %v3100, %v3075
  %v3104 = vmul.f32 %v3101, %v3077
  %v3105 = vsub.f32 0.0, %v3063
  %v3106 = vsub.f32 0.0, %v3064
  %v3107 = vsub.f32 0.0, %v3065
  %v3108 = vmul.f32 %v3105, %v3063
  %v3109 = vmul.f32 %v3106, %v3064
  %v3110 = vmul.f32 %v3107, %v3065
  %v3111 = vmul.f32 %v3108, 1.442695
  %v3112 = vpow.pop %v3111
  %v3113 = vmul.f32 %v3109, 1.442695
  %v3114 = vpow.pop %v3113
  %v3115 = vmul.f32 %v3110, 1.442695
  %v3116 = vpow.pop %v3115
  %v3117 = vmul.f32 %v3102, %v3112
  %v3118 = vmul.f32 %v3103, %v3114
  %v3119 = vmul.f32 %v3104, %v3116
  %v3120 = vsub.f32 1.0, %v3117
  %v3121 = vsub.f32 1.0, %v3118
  %v3122 = vsub.f32 1.0, %v3119
  %vm3123 = vcmp.lt.f32.partialorder %v3060, 0.0
  %vm3124 = vcmp.lt.f32.partialorder %v3061, 0.0
  %vm3125 = vcmp.lt.f32.partialorder %v3062, 0.0
  %v3126 = vsub.f32 0.0, %v3120
  %v3127 = vsub.f32 0.0, %v3121
  %v3128 = vsub.f32 0.0, %v3122
  %v3129 = vsel %vm3123, %v3126, %v3120
  %v3130 = vsel %vm3124, %v3127, %v3121
  %v3131 = vsel %vm3125, %v3128, %v3122
  %v3132 = vadd.f32 %v3129, 1.0
  %v3133 = vadd.f32 %v3130, 1.0
  %v3134 = vadd.f32 %v3131, 1.0
  %v3135 = vmul.f32 %v3057, %v3132
  %v3136 = vmul.f32 %v3058, %v3133
  %v3137 = vmul.f32 %v3059, %v3134
  %v3138 = vpack.c.bf16 %v3136, %v3135
  %v3139 = vpack.c.bf16 %v3137, %v3137
  %v3140 = vld [vmem:[%s1 + $0x280] sm:$0xf]
  %v3141 = vld [vmem:[%s1 + $0x284] sm:$0xf]
  %v3142 = vld [vmem:[%s1 + $0x288] sm:$0xf]
  %v3143 = vld [vmem:[%s1 + $0x28c] sm:$0xf]
  %v3144 = vld [vmem:[%s1 + $0x290] sm:$0xf]
  %v3145 = vld [vmem:[%s1 + $0x294] sm:$0xf]
  %v3146 = vld [vmem:[%s1 + $0x298] sm:$0xf]
  %v3147 = vld [vmem:[%s1 + $0x29c] sm:$0xf]
  %v3148 = vld [vmem:[%s1 + $0x2a0] sm:$0xf]
  %v3149 = vld [vmem:[%s1 + $0x2a4] sm:$0xf]
  %v3150 = vld [vmem:[%s1 + $0x2a8] sm:$0xf]
  %v3151 = vld [vmem:[%s1 + $0x2ac] sm:$0xf]
  %v3152 = vld [vmem:[%s1 + $0x2b0] sm:$0xf]
  %v3153 = vld [vmem:[%s1 + $0x2b4] sm:$0xf]
  %v3154 = vld [vmem:[%s1 + $0x2b8] sm:$0xf]
  %v3155 = vld [vmem:[%s1 + $0x2bc] sm:$0xf]
  %v3172 = vunpack.c.l.b16 %v3140
  %v3173 = vunpack.c.l.b16 %v3141
  %v3174 = vunpack.c.l.b16 %v3142
  %v3175 = vunpack.c.l.b16 %v3143
  %v3176 = vunpack.c.l.b16 %v3144
  %v3177 = vunpack.c.l.b16 %v3145
  %v3178 = vunpack.c.l.b16 %v3146
  %v3179 = vunpack.c.l.b16 %v3147
  %v3180 = vunpack.c.l.b16 %v3148
  %v3181 = vunpack.c.l.b16 %v3149
  %v3182 = vunpack.c.l.b16 %v3150
  %v3183 = vunpack.c.l.b16 %v3151
  %v3184 = vunpack.c.l.b16 %v3152
  %v3185 = vunpack.c.l.b16 %v3153
  %v3186 = vunpack.c.l.b16 %v3154
  %v3187 = vunpack.c.l.b16 %v3155
  %v3188 = vpack.c.b16 %v3173, %v3172
  %v3189 = vpack.c.b16 %v3175, %v3174
  %v3190 = vpack.c.b16 %v3177, %v3176
  %v3191 = vpack.c.b16 %v3179, %v3178
  %v3192 = vpack.c.b16 %v3181, %v3180
  %v3193 = vpack.c.b16 %v3183, %v3182
  %v3194 = vpack.c.b16 %v3185, %v3184
  %v3195 = vpack.c.b16 %v3187, %v3186
  %3204 = vmatprep.subr.bf16.mxu0 0
  %3205 = vmatpush1.bf16.msra.mxu0 %v3188
  %3206 = vmatprep.subr.bf16.mxu0 0
  %3207 = vmatpush1.bf16.msra.mxu0 %v3189
  %3208 = vmatprep.subr.bf16.mxu0 0
  %3209 = vmatpush1.bf16.msra.mxu0 %v3190
  %3210 = vmatprep.subr.bf16.mxu0 0
  %3211 = vmatpush1.bf16.msra.mxu0 %v3191
  %3212 = vmatprep.subr.bf16.mxu0 0
  %3213 = vmatpush1.bf16.msra.mxu0 %v3192
  %3214 = vmatprep.subr.bf16.mxu0 0
  %3215 = vmatpush1.bf16.msra.mxu0 %v3193
  %3216 = vmatprep.subr.bf16.mxu0 0
  %3217 = vmatpush1.bf16.msra.mxu0 %v3194
  %3218 = vmatprep.subr.bf16.mxu0 0
  %3219 = vmatpush1.bf16.msra.mxu0 %v3195
  %3220 = vmatprep.subr.bf16.mxu0 0
  %3221 = vmatpush1.bf16.msra.mxu0 0
  %3222 = vmatprep.subr.bf16.mxu0 0
  %3223 = vmatpush1.bf16.msra.mxu0 0
  %3224 = vmatprep.subr.bf16.mxu0 0
  %3225 = vmatpush1.bf16.msra.mxu0 0
  %3226 = vmatprep.subr.bf16.mxu0 0
  %3227 = vmatpush1.bf16.msra.mxu0 0
  %3228 = vmatprep.subr.bf16.mxu0 0
  %3229 = vmatpush1.bf16.msra.mxu0 0
  %3230 = vmatprep.subr.bf16.mxu0 0
  %3231 = vmatpush1.bf16.msra.mxu0 0
  %3232 = vmatprep.subr.bf16.mxu0 0
  %3233 = vmatpush1.bf16.msra.mxu0 0
  %3234 = vmatprep.subr.bf16.mxu0 0
  %3235 = vmatpush1.bf16.msra.mxu0 0
  %3236 = vmatprep.mubr.bf16.mxu0 0
  %3237 = vmatmul.mubr.bf16.gmra.mrb[0].mxu0 %v3138
  %v3238 = vpop.f32.mrb[0].mxu0
  %v3239 = vpop.f32.mrb[0].mxu0
  %v3240 = vpop.f32.mrb[0].mxu0
  %v3241 = vpop.f32.mrb[0].mxu0
  %3242 = vmatprep.mubr.bf16.mxu0 0
  %3243 = vmatmul.mubr.bf16.gmra.mrb[0].mxu0 %v3139
  %v3244 = vpop.f32.mrb[0].mxu0
  %v3245 = vadd.f32 0.0, %v3244
  %v3246 = vpop.f32.mrb[0].mxu0
  %v3247 = vpop.f32.mrb[0].mxu0
  %v3248 = vpop.f32.mrb[0].mxu0
  %3249 = vdwg.mxu0
  %v3250 = vadd.f32 %v2860, %v3245
  %v3251 = vld [vmem:[%s2 + $0x27] sm:$0x1]
  %v3252 = vlaneseq
  %v3253 = vshrl.u32 %v3252, 7
  %v3254 = vsub.s32 0, %v3253
  %v3255 = vrot.slane %v3251, %v3254
  %v3256 = vadd.f32 %v3250, %v3255
  %v3257 = vld [vmem:[%s2 + $0x28] sm:$0x1]
  %v3258 = vld [vmem:[%s2 + $0x29] sm:$0x1]
  %v3259 = vsel %vm651, %v3256, 0.0
  %3260 = vadd.xlane.f32.xlu0 %v3259
  %v3261 = vpop.xlane.xlu0 %3260
  %v3262 = vmul.f32 %v3261, %v655
  %v3263 = vsub.f32 %v3256, %v3262
  %v3264 = vmul.f32 %v3263, %v3263
  %v3265 = vsel %vm651, %v3264, 0.0
  %3266 = vadd.xlane.f32.xlu0 %v3265
  %v3267 = vpop.xlane.xlu0 %3266
  %v3268 = vmul.f32 %v3267, %v655
  %v3269 = vadd.f32 %v3268, 1e-06
  %v3270 = vrsqrt.pop %v3269
  %v3271 = vmul.f32 %v3263, %v3270
  %v3272 = vlaneseq
  %v3273 = vshrl.u32 %v3272, 7
  %v3274 = vsub.s32 0, %v3273
  %v3275 = vrot.slane %v3257, %v3274
  %v3276 = vmul.f32 %v3271, %v3275
  %v3277 = vlaneseq
  %v3278 = vshrl.u32 %v3277, 7
  %v3279 = vsub.s32 0, %v3278
  %v3280 = vrot.slane %v3258, %v3279
  %v3281 = vadd.f32 %v3276, %v3280
  %v3282 = vpack.c.bf16 %v3281, %v3281
  %v3283 = vld [vmem:[%s1 + $0x2c0] sm:$0x3]
  %v3284 = vld [vmem:[%s1 + $0x2c0] sm:$0xc]
  %v3286 = vrot.slane %v3282, 1
  %v3288 = vunpack.c.l.b16 %v3284
  %v3289 = vpack.c.b16 %v3288, %v3288
  %v3290 = vrot.slane %v3289, 2
  %v3292 = vsel %vm644, %v3286, 0
  %v3295 = vsel %vm644, %v3290, 0
  %3297 = vmatprep.subr.bf16.mxu0 0
  %3298 = vmatpush1.bf16.xpose.msra.mxu0 %v3295
  %3299 = vmatprep.subr.bf16.mxu0 0
  %3300 = vmatpush1.bf16.xpose.msra.mxu0 0
  %3301 = vmatprep.subr.bf16.mxu0 0
  %3302 = vmatpush1.bf16.xpose.msra.mxu0 0
  %3303 = vmatprep.subr.bf16.mxu0 0
  %3304 = vmatpush1.bf16.xpose.msra.mxu0 0
  %3305 = vmatprep.subr.bf16.mxu0 0
  %3306 = vmatpush1.bf16.xpose.msra.mxu0 0
  %3307 = vmatprep.subr.bf16.mxu0 0
  %3308 = vmatpush1.bf16.xpose.msra.mxu0 0
  %3309 = vmatprep.subr.bf16.mxu0 0
  %3310 = vmatpush1.bf16.xpose.msra.mxu0 0
  %3311 = vmatprep.subr.bf16.mxu0 0
  %3312 = vmatpush1.bf16.xpose.msra.mxu0 0
  %3313 = vmatprep.subr.bf16.mxu0 0
  %3314 = vmatpush1.bf16.xpose.msra.mxu0 0
  %3315 = vmatprep.subr.bf16.mxu0 0
  %3316 = vmatpush1.bf16.xpose.msra.mxu0 0
  %3317 = vmatprep.subr.bf16.mxu0 0
  %3318 = vmatpush1.bf16.xpose.msra.mxu0 0
  %3319 = vmatprep.subr.bf16.mxu0 0
  %3320 = vmatpush1.bf16.xpose.msra.mxu0 0
  %3321 = vmatprep.subr.bf16.mxu0 0
  %3322 = vmatpush1.bf16.xpose.msra.mxu0 0
  %3323 = vmatprep.subr.bf16.mxu0 0
  %3324 = vmatpush1.bf16.xpose.msra.mxu0 0
  %3325 = vmatprep.subr.bf16.mxu0 0
  %3326 = vmatpush1.bf16.xpose.msra.mxu0 0
  %3327 = vmatprep.subr.bf16.mxu0 0
  %3328 = vmatpush1.bf16.xpose.msra.mxu0 0
  %3329 = vmatprep.mubr.bf16.mxu0 0
  %3330 = vmatmul.mubr.bf16.gmra.mrb[0].mxu0 %v3292
  %v3331 = vpop.f32.mrb[0].mxu0
  %v3332 = vadd.f32 0.0, %v3331
  %v3333 = vpop.f32.mrb[0].mxu0
  %v3334 = vpop.f32.mrb[0].mxu0
  %v3335 = vpop.f32.mrb[0].mxu0
  %3336 = vdwg.mxu0
  %v3338 = vsel %vm644, %v3282, 0
  %v3341 = vsel %vm644, %v3283, 0
  %3343 = vmatprep.subr.bf16.mxu0 0
  %3344 = vmatpush1.bf16.xpose.msra.mxu0 %v3341
  %3345 = vmatprep.subr.bf16.mxu0 0
  %3346 = vmatpush1.bf16.xpose.msra.mxu0 0
  %3347 = vmatprep.subr.bf16.mxu0 0
  %3348 = vmatpush1.bf16.xpose.msra.mxu0 0
  %3349 = vmatprep.subr.bf16.mxu0 0
  %3350 = vmatpush1.bf16.xpose.msra.mxu0 0
  %3351 = vmatprep.subr.bf16.mxu0 0
  %3352 = vmatpush1.bf16.xpose.msra.mxu0 0
  %3353 = vmatprep.subr.bf16.mxu0 0
  %3354 = vmatpush1.bf16.xpose.msra.mxu0 0
  %3355 = vmatprep.subr.bf16.mxu0 0
  %3356 = vmatpush1.bf16.xpose.msra.mxu0 0
  %3357 = vmatprep.subr.bf16.mxu0 0
  %3358 = vmatpush1.bf16.xpose.msra.mxu0 0
  %3359 = vmatprep.subr.bf16.mxu0 0
  %3360 = vmatpush1.bf16.xpose.msra.mxu0 0
  %3361 = vmatprep.subr.bf16.mxu0 0
  %3362 = vmatpush1.bf16.xpose.msra.mxu0 0
  %3363 = vmatprep.subr.bf16.mxu0 0
  %3364 = vmatpush1.bf16.xpose.msra.mxu0 0
  %3365 = vmatprep.subr.bf16.mxu0 0
  %3366 = vmatpush1.bf16.xpose.msra.mxu0 0
  %3367 = vmatprep.subr.bf16.mxu0 0
  %3368 = vmatpush1.bf16.xpose.msra.mxu0 0
  %3369 = vmatprep.subr.bf16.mxu0 0
  %3370 = vmatpush1.bf16.xpose.msra.mxu0 0
  %3371 = vmatprep.subr.bf16.mxu0 0
  %3372 = vmatpush1.bf16.xpose.msra.mxu0 0
  %3373 = vmatprep.subr.bf16.mxu0 0
  %3374 = vmatpush1.bf16.xpose.msra.mxu0 0
  %3375 = vmatprep.mubr.bf16.mxu0 0
  %3376 = vmatmul.mubr.bf16.gmra.mrb[0].mxu0 %v3338
  %v3377 = vpop.f32.mrb[0].mxu0
  %v3378 = vadd.f32 %v3332, %v3377
  %v3379 = vpop.f32.mrb[0].mxu0
  %v3380 = vpop.f32.mrb[0].mxu0
  %v3381 = vpop.f32.mrb[0].mxu0
  %3382 = vdwg.mxu0
  %v3383 = vld [vmem:[%s2 + $0x2a] sm:$0x1]
  %v3384 = vlaneseq
  %v3385 = vshrl.u32 %v3384, 7
  %v3386 = vsub.s32 0, %v3385
  %v3387 = vrot.slane %v3383, %v3386
  %v3388 = vadd.f32 %v3378, %v3387
  %v3389 = vld [vmem:[%s1 + $0x2c4] sm:$0xf]
  %v3390 = vld [vmem:[%s1 + $0x2c8] sm:$0xf]
  %v3391 = vld [vmem:[%s1 + $0x2cc] sm:$0xf]
  %v3392 = vld [vmem:[%s1 + $0x2d0] sm:$0xf]
  %v3393 = vld [vmem:[%s1 + $0x2d4] sm:$0xf]
  %v3394 = vld [vmem:[%s1 + $0x2d8] sm:$0xf]
  %v3395 = vld [vmem:[%s1 + $0x2dc] sm:$0xf]
  %v3396 = vld [vmem:[%s1 + $0x2e0] sm:$0xf]
  %v3397 = vld [vmem:[%s1 + $0x2e4] sm:$0xf]
  %v3398 = vld [vmem:[%s1 + $0x2e8] sm:$0xf]
  %v3399 = vld [vmem:[%s1 + $0x2ec] sm:$0xf]
  %v3400 = vld [vmem:[%s1 + $0x2f0] sm:$0xf]
  %v3401 = vld [vmem:[%s1 + $0x2f4] sm:$0xf]
  %v3402 = vld [vmem:[%s1 + $0x2f8] sm:$0xf]
  %v3403 = vld [vmem:[%s1 + $0x2fc] sm:$0xf]
  %v3404 = vld [vmem:[%s1 + $0x300] sm:$0xf]
  %v3405 = vld [vmem:[%s1 + $0x304] sm:$0xf]
  %v3406 = vld [vmem:[%s1 + $0x308] sm:$0xf]
  %v3407 = vld [vmem:[%s1 + $0x30c] sm:$0xf]
  %v3408 = vld [vmem:[%s1 + $0x310] sm:$0xf]
  %v3409 = vld [vmem:[%s1 + $0x314] sm:$0xf]
  %v3410 = vld [vmem:[%s1 + $0x318] sm:$0xf]
  %v3411 = vld [vmem:[%s1 + $0x31c] sm:$0xf]
  %v3412 = vld [vmem:[%s1 + $0x320] sm:$0xf]
  %v3413 = vld [vmem:[%s1 + $0x324] sm:$0xf]
  %v3414 = vld [vmem:[%s1 + $0x328] sm:$0xf]
  %v3415 = vld [vmem:[%s1 + $0x32c] sm:$0xf]
  %v3416 = vld [vmem:[%s1 + $0x330] sm:$0xf]
  %v3417 = vld [vmem:[%s1 + $0x334] sm:$0xf]
  %v3418 = vld [vmem:[%s1 + $0x338] sm:$0xf]
  %v3419 = vld [vmem:[%s1 + $0x33c] sm:$0xf]
  %v3420 = vld [vmem:[%s1 + $0x340] sm:$0xf]
  %v3437 = vunpack.c.l.b16 %v3405
  %v3438 = vunpack.c.l.b16 %v3406
  %v3439 = vunpack.c.l.b16 %v3407
  %v3440 = vunpack.c.l.b16 %v3408
  %v3441 = vunpack.c.l.b16 %v3409
  %v3442 = vunpack.c.l.b16 %v3410
  %v3443 = vunpack.c.l.b16 %v3411
  %v3444 = vunpack.c.l.b16 %v3412
  %v3445 = vunpack.c.l.b16 %v3413
  %v3446 = vunpack.c.l.b16 %v3414
  %v3447 = vunpack.c.l.b16 %v3415
  %v3448 = vunpack.c.l.b16 %v3416
  %v3449 = vunpack.c.l.b16 %v3417
  %v3450 = vunpack.c.l.b16 %v3418
  %v3451 = vunpack.c.l.b16 %v3419
  %v3452 = vunpack.c.l.b16 %v3420
  %v3453 = vpack.c.b16 %v3438, %v3437
  %v3454 = vpack.c.b16 %v3440, %v3439
  %v3455 = vpack.c.b16 %v3442, %v3441
  %v3456 = vpack.c.b16 %v3444, %v3443
  %v3457 = vpack.c.b16 %v3446, %v3445
  %v3458 = vpack.c.b16 %v3448, %v3447
  %v3459 = vpack.c.b16 %v3450, %v3449
  %v3460 = vpack.c.b16 %v3452, %v3451
  %v3462 = vsel %vm644, %v3453, 0
  %v3465 = vsel %vm644, %v3454, 0
  %v3468 = vsel %vm644, %v3455, 0
  %v3471 = vsel %vm644, %v3456, 0
  %v3474 = vsel %vm644, %v3457, 0
  %v3477 = vsel %vm644, %v3458, 0
  %v3480 = vsel %vm644, %v3459, 0
  %v3483 = vsel %vm644, %v3460, 0
  %3485 = vmatprep.subr.bf16.mxu0 0
  %3486 = vmatpush1.bf16.xpose.msra.mxu0 %v3462
  %3487 = vmatprep.subr.bf16.mxu0 0
  %3488 = vmatpush1.bf16.xpose.msra.mxu0 %v3465
  %3489 = vmatprep.subr.bf16.mxu0 0
  %3490 = vmatpush1.bf16.xpose.msra.mxu0 %v3468
  %3491 = vmatprep.subr.bf16.mxu0 0
  %3492 = vmatpush1.bf16.xpose.msra.mxu0 %v3471
  %3493 = vmatprep.subr.bf16.mxu0 0
  %3494 = vmatpush1.bf16.xpose.msra.mxu0 %v3474
  %3495 = vmatprep.subr.bf16.mxu0 0
  %3496 = vmatpush1.bf16.xpose.msra.mxu0 %v3477
  %3497 = vmatprep.subr.bf16.mxu0 0
  %3498 = vmatpush1.bf16.xpose.msra.mxu0 %v3480
  %3499 = vmatprep.subr.bf16.mxu0 0
  %3500 = vmatpush1.bf16.xpose.msra.mxu0 %v3483
  %3501 = vmatprep.subr.bf16.mxu0 0
  %3502 = vmatpush1.bf16.xpose.msra.mxu0 0
  %3503 = vmatprep.subr.bf16.mxu0 0
  %3504 = vmatpush1.bf16.xpose.msra.mxu0 0
  %3505 = vmatprep.subr.bf16.mxu0 0
  %3506 = vmatpush1.bf16.xpose.msra.mxu0 0
  %3507 = vmatprep.subr.bf16.mxu0 0
  %3508 = vmatpush1.bf16.xpose.msra.mxu0 0
  %3509 = vmatprep.subr.bf16.mxu0 0
  %3510 = vmatpush1.bf16.xpose.msra.mxu0 0
  %3511 = vmatprep.subr.bf16.mxu0 0
  %3512 = vmatpush1.bf16.xpose.msra.mxu0 0
  %3513 = vmatprep.subr.bf16.mxu0 0
  %3514 = vmatpush1.bf16.xpose.msra.mxu0 0
  %3515 = vmatprep.subr.bf16.mxu0 0
  %3516 = vmatpush1.bf16.xpose.msra.mxu0 0
  %3517 = vmatprep.mubr.bf16.mxu0 0
  %3518 = vmatmul.mubr.bf16.gmra.mrb[0].mxu0 %v3292
  %v3519 = vpop.f32.mrb[0].mxu0
  %v3520 = vadd.f32 0.0, %v3519
  %v3521 = vpop.f32.mrb[0].mxu0
  %v3522 = vpop.f32.mrb[0].mxu0
  %v3523 = vpop.f32.mrb[0].mxu0
  %3524 = vdwg.mxu0
  %v3541 = vunpack.c.l.b16 %v3389
  %v3542 = vunpack.c.l.b16 %v3390
  %v3543 = vunpack.c.l.b16 %v3391
  %v3544 = vunpack.c.l.b16 %v3392
  %v3545 = vunpack.c.l.b16 %v3393
  %v3546 = vunpack.c.l.b16 %v3394
  %v3547 = vunpack.c.l.b16 %v3395
  %v3548 = vunpack.c.l.b16 %v3396
  %v3549 = vunpack.c.l.b16 %v3397
  %v3550 = vunpack.c.l.b16 %v3398
  %v3551 = vunpack.c.l.b16 %v3399
  %v3552 = vunpack.c.l.b16 %v3400
  %v3553 = vunpack.c.l.b16 %v3401
  %v3554 = vunpack.c.l.b16 %v3402
  %v3555 = vunpack.c.l.b16 %v3403
  %v3556 = vunpack.c.l.b16 %v3404
  %v3557 = vpack.c.b16 %v3542, %v3541
  %v3558 = vpack.c.b16 %v3544, %v3543
  %v3559 = vpack.c.b16 %v3546, %v3545
  %v3560 = vpack.c.b16 %v3548, %v3547
  %v3561 = vpack.c.b16 %v3550, %v3549
  %v3562 = vpack.c.b16 %v3552, %v3551
  %v3563 = vpack.c.b16 %v3554, %v3553
  %v3564 = vpack.c.b16 %v3556, %v3555
  %v3566 = vsel %vm644, %v3557, 0
  %v3569 = vsel %vm644, %v3558, 0
  %v3572 = vsel %vm644, %v3559, 0
  %v3575 = vsel %vm644, %v3560, 0
  %v3578 = vsel %vm644, %v3561, 0
  %v3581 = vsel %vm644, %v3562, 0
  %v3584 = vsel %vm644, %v3563, 0
  %v3587 = vsel %vm644, %v3564, 0
  %3589 = vmatprep.subr.bf16.mxu0 0
  %3590 = vmatpush1.bf16.xpose.msra.mxu0 %v3566
  %3591 = vmatprep.subr.bf16.mxu0 0
  %3592 = vmatpush1.bf16.xpose.msra.mxu0 %v3569
  %3593 = vmatprep.subr.bf16.mxu0 0
  %3594 = vmatpush1.bf16.xpose.msra.mxu0 %v3572
  %3595 = vmatprep.subr.bf16.mxu0 0
  %3596 = vmatpush1.bf16.xpose.msra.mxu0 %v3575
  %3597 = vmatprep.subr.bf16.mxu0 0
  %3598 = vmatpush1.bf16.xpose.msra.mxu0 %v3578
  %3599 = vmatprep.subr.bf16.mxu0 0
  %3600 = vmatpush1.bf16.xpose.msra.mxu0 %v3581
  %3601 = vmatprep.subr.bf16.mxu0 0
  %3602 = vmatpush1.bf16.xpose.msra.mxu0 %v3584
  %3603 = vmatprep.subr.bf16.mxu0 0
  %3604 = vmatpush1.bf16.xpose.msra.mxu0 %v3587
  %3605 = vmatprep.subr.bf16.mxu0 0
  %3606 = vmatpush1.bf16.xpose.msra.mxu0 0
  %3607 = vmatprep.subr.bf16.mxu0 0
  %3608 = vmatpush1.bf16.xpose.msra.mxu0 0
  %3609 = vmatprep.subr.bf16.mxu0 0
  %3610 = vmatpush1.bf16.xpose.msra.mxu0 0
  %3611 = vmatprep.subr.bf16.mxu0 0
  %3612 = vmatpush1.bf16.xpose.msra.mxu0 0
  %3613 = vmatprep.subr.bf16.mxu0 0
  %3614 = vmatpush1.bf16.xpose.msra.mxu0 0
  %3615 = vmatprep.subr.bf16.mxu0 0
  %3616 = vmatpush1.bf16.xpose.msra.mxu0 0
  %3617 = vmatprep.subr.bf16.mxu0 0
  %3618 = vmatpush1.bf16.xpose.msra.mxu0 0
  %3619 = vmatprep.subr.bf16.mxu0 0
  %3620 = vmatpush1.bf16.xpose.msra.mxu0 0
  %3621 = vmatprep.mubr.bf16.mxu0 0
  %3622 = vmatmul.mubr.bf16.gmra.mrb[0].mxu0 %v3338
  %v3623 = vpop.f32.mrb[0].mxu0
  %v3624 = vadd.f32 %v3520, %v3623
  %v3625 = vpop.f32.mrb[0].mxu0
  %v3626 = vpop.f32.mrb[0].mxu0
  %v3627 = vpop.f32.mrb[0].mxu0
  %3628 = vdwg.mxu0
  %v3629 = vld [vmem:[%s2 + $0x2b] sm:$0x1]
  %v3630 = vlaneseq
  %v3631 = vshrl.u32 %v3630, 7
  %v3632 = vsub.s32 0, %v3631
  %v3633 = vrot.slane %v3629, %v3632
  %v3634 = vadd.f32 %v3624, %v3633
  %v3635 = vmax.f32 %v3634, 0.0
  %v3636 = vld [vmem:[%s2 + $0x2c] sm:$0x7]
  %v3637 = vld [vmem:[%s2 + $0x2f] sm:$0x1]
  %v3638 = vlaneseq
  %v3639 = vshrl.u32 %v3638, 7
  %v3640 = vsub.s32 0, %v3639
  %v3641 = vrot.slane %v3637, %v3640
  %3642 = vmatprep.subr.mxu0 0.0
  %3643 = vmatpush1.xpose.msra.mxu0 %v3636
  %3644 = vmatprep.subr.mxu0 0.0
  %3645 = vmatpush1.xpose.msra.mxu0 0.0
  %3646 = vmatprep.subr.mxu0 0.0
  %3647 = vmatpush1.xpose.msra.mxu0 0.0
  %3648 = vmatprep.subr.mxu0 0.0
  %3649 = vmatpush1.xpose.msra.mxu0 0.0
  %3650 = vmatprep.subr.mxu0 0.0
  %3651 = vmatpush1.xpose.msra.mxu0 0.0
  %3652 = vmatprep.subr.mxu0 0.0
  %3653 = vmatpush1.xpose.msra.mxu0 0.0
  %3654 = vmatprep.subr.mxu0 0.0
  %3655 = vmatpush1.xpose.msra.mxu0 0.0
  %3656 = vmatprep.subr.mxu0 0.0
  %3657 = vmatpush1.xpose.msra.mxu0 0.0
  %3658 = vmatprep.subr.mxu0 0.0
  %3659 = vmatpush1.xpose.msra.mxu0 0.0
  %3660 = vmatprep.subr.mxu0 0.0
  %3661 = vmatpush1.xpose.msra.mxu0 0.0
  %3662 = vmatprep.subr.mxu0 0.0
  %3663 = vmatpush1.xpose.msra.mxu0 0.0
  %3664 = vmatprep.subr.mxu0 0.0
  %3665 = vmatpush1.xpose.msra.mxu0 0.0
  %3666 = vmatprep.subr.mxu0 0.0
  %3667 = vmatpush1.xpose.msra.mxu0 0.0
  %3668 = vmatprep.subr.mxu0 0.0
  %3669 = vmatpush1.xpose.msra.mxu0 0.0
  %3670 = vmatprep.subr.mxu0 0.0
  %3671 = vmatpush1.xpose.msra.mxu0 0.0
  %3672 = vmatprep.subr.mxu0 0.0
  %3673 = vmatpush1.xpose.msra.mxu0 0.0
  %3674 = vmatprep.subr.mxu0 0.0
  %3675 = vmatpush1.xpose.msra.mxu0 0.0
  %3676 = vmatprep.subr.mxu0 0.0
  %3677 = vmatpush1.xpose.msra.mxu0 0.0
  %3678 = vmatprep.subr.mxu0 0.0
  %3679 = vmatpush1.xpose.msra.mxu0 0.0
  %3680 = vmatprep.subr.mxu0 0.0
  %3681 = vmatpush1.xpose.msra.mxu0 0.0
  %3682 = vmatprep.subr.mxu0 0.0
  %3683 = vmatpush1.xpose.msra.mxu0 0.0
  %3684 = vmatprep.subr.mxu0 0.0
  %3685 = vmatpush1.xpose.msra.mxu0 0.0
  %3686 = vmatprep.subr.mxu0 0.0
  %3687 = vmatpush1.xpose.msra.mxu0 0.0
  %3688 = vmatprep.subr.mxu0 0.0
  %3689 = vmatpush1.xpose.msra.mxu0 0.0
  %3690 = vmatprep.subr.mxu0 0.0
  %3691 = vmatpush1.xpose.msra.mxu0 0.0
  %3692 = vmatprep.subr.mxu0 0.0
  %3693 = vmatpush1.xpose.msra.mxu0 0.0
  %3694 = vmatprep.subr.mxu0 0.0
  %3695 = vmatpush1.xpose.msra.mxu0 0.0
  %3696 = vmatprep.subr.mxu0 0.0
  %3697 = vmatpush1.xpose.msra.mxu0 0.0
  %3698 = vmatprep.subr.mxu0 0.0
  %3699 = vmatpush1.xpose.msra.mxu0 0.0
  %3700 = vmatprep.subr.mxu0 0.0
  %3701 = vmatpush1.xpose.msra.mxu0 0.0
  %3702 = vmatprep.subr.mxu0 0.0
  %3703 = vmatpush1.xpose.msra.mxu0 0.0
  %3704 = vmatprep.subr.mxu0 0.0
  %3705 = vmatpush1.xpose.msra.mxu0 0.0
  %3706 = vmatprep.mubr.f32.mxu0 0.0
  %3707 = vmatmul.mubr.f32.gmra.mrb[0].mxu0 %v3635
  %v3708 = vpop.f32.mrb[0].mxu0
  %v3709 = vadd.f32 %v3641, %v3708
  %v3710 = vpop.f32.mrb[0].mxu0
  %3711 = vdwg.mxu0
  %3713 = vrot.lane.b32.xlu0 %v3709, 4
  %v3714 = vpop.permute.xlu0 %3713
  %vm3716 = vcmask 31744
  %v3717 = vsel %vm3716, %v3388, %v3714
  %vm3718 = vcmask 56320
  %v3719 = vsel %vm3718, %v3717, 0.0
  %3720 = vst [vmem:[%s3] sm:$0x3] %v3719
  // Predicated region
  $region14: #{fwd.1} parent=0 // pred_check
    _
  $region15: #{fwd.1} parent=0 // pred_check_branch
    %3722 = sbr.rel (0) target = $region17
  $region16: #{fwd.1} parent=0 // pred_region
    _
  $region17: #{fwd.1} parent=0 // pred_fallthru
    _
  // Predicated region
  $region18: #{fwd.1} parent=0 // pred_check
    _
  $region19: #{fwd.1} parent=0 // pred_check_branch
    %3724 = sbr.rel (0) target = $region21
  $region20: #{fwd.1} parent=0 // pred_region
    _
  $region21: #{fwd.1} parent=0 // pred_fallthru
    _

</llo_original>
